<compile_context>
chip_gen: v5e
topology: v5e:2x2
jax: 0.10.0
libtpu: 0.0.40
codegen_flags: <defaults>
</compile_context>

<pallas_src>
import functools

import jax
import jax.numpy as jnp
from jax.experimental import pallas as pl
from jax.experimental.pallas import tpu as pltpu


NUM_CLASSES = 53
STEM_K = 3 * 3 * 3    # 27
STEM_K_PAD = 32       # pad patch depth 27 -> 32 for aligned vector loads
STEM_C = 32
HEAD_C = 1280


# ----------------------------- Pallas kernel --------------------------------

def _silu_tanh(x):
    """SiLU via tanh-form sigmoid: x * sigmoid(x) == 0.5*x*(1 + tanh(0.5*x)).

    One EUP transcendental per element (tanh) instead of exp + reciprocal.
    """
    return (0.5 * x) * (1.0 + jnp.tanh(0.5 * x))


def _fused_forward_kernel(p_ref, sw_ref, sb_ref, hw_ref, hb_ref,
                          o_ref, acc_ref, *, inv_hw, bf16_silu):
    """Fused stem -> head -> global-average-pool.  Classifier runs in XLA afterwards.

    p_ref : (TILE_HW, STEM_K_PAD) bf16   im2col patch tile (one image)
    sw_ref: (STEM_K_PAD, 32)      bf16   BN-folded stem weights
    sb_ref: (1, 32)               f32    BN-folded stem bias
    hw_ref: (32, 1280)            bf16   BN-folded head weights
    hb_ref: (1, 1280)             f32    BN-folded head bias
    o_ref : (1, 1280)             f32    pooled feature for this image (lane-dense)
    acc_ref: (1, 1280)            f32    running pooled sum (VMEM scratch)
    """
    t = pl.program_id(1)

    @pl.when(t == 0)
    def _():
        acc_ref[...] = jnp.zeros_like(acc_ref)

    # conv_stem (3x3 s2) as matmul on im2col patches + folded BN + SiLU (f32, small)
    y = jnp.dot(p_ref[...], sw_ref[...], preferred_element_type=jnp.float32)
    y = _silu_tanh(y + sb_ref[...])

    # conv_head (1x1) + folded BN + SiLU — intermediate never leaves VMEM/vregs
    yh = jnp.dot(y.astype(hw_ref.dtype), hw_ref[...],
                 preferred_element_type=jnp.float32)
    yh = yh + hb_ref[...]
    if bf16_silu:
        # v6e/v7x: bf16 EUP/VPU path (~2x throughput); pool accumulation stays f32.
        act = _silu_tanh(yh.astype(jnp.bfloat16)).astype(jnp.float32)
    else:
        # v5e: no bf16 VPU/EUP — keep activation math in f32.
        act = _silu_tanh(yh)

    # global-average-pool partial sum (pooling commutes with row tiling)
    acc_ref[...] += jnp.sum(act, axis=0, keepdims=True)

    # finalize on the last spatial tile: mean -> pooled feature
    @pl.when(t == pl.num_programs(1) - 1)
    def _():
        o_ref[...] = (acc_ref[...] * inv_hw).astype(o_ref.dtype)


def fused_forward(patches, sw, sb, hw_mat, hb, *, tile_hw, bf16_silu):
    """patches:(B, HW, STEM_K_PAD) bf16 -> pooled features (B, HEAD_C) f32."""
    B, HW, Kp = patches.shape
    assert HW % tile_hw == 0 and Kp == STEM_K_PAD
    n_t = HW // tile_hw

    flops = int(2 * B * HW * (Kp * STEM_C + STEM_C * HEAD_C))
    # one tanh per activation element (stem + head)
    transc = int(B * HW * (STEM_C + HEAD_C))
    bytes_acc = int(patches.size * 2
                    + (sw.size + hw_mat.size) * 2
                    + (sb.size + hb.size) * 4
                    + B * HEAD_C * 4)

    kernel = functools.partial(_fused_forward_kernel,
                               inv_hw=1.0 / HW, bf16_silu=bf16_silu)
    out = pl.pallas_call(
        kernel,
        out_shape=jax.ShapeDtypeStruct((B, 1, HEAD_C), jnp.float32),
        grid_spec=pltpu.PrefetchScalarGridSpec(
            num_scalar_prefetch=0,
            grid=(B, n_t),
            in_specs=[
                pl.BlockSpec((None, tile_hw, Kp), lambda b, t: (b, t, 0)),
                pl.BlockSpec((Kp, STEM_C), lambda b, t: (0, 0)),
                pl.BlockSpec((1, STEM_C), lambda b, t: (0, 0)),
                pl.BlockSpec((STEM_C, HEAD_C), lambda b, t: (0, 0)),
                pl.BlockSpec((1, HEAD_C), lambda b, t: (0, 0)),
            ],
            out_specs=pl.BlockSpec((None, 1, HEAD_C), lambda b, t: (b, 0, 0)),
            scratch_shapes=[pltpu.VMEM((1, HEAD_C), jnp.float32)],
        ),
        compiler_params=pltpu.CompilerParams(
            dimension_semantics=("parallel", "arbitrary"),
            vmem_limit_bytes=32 * 1024 * 1024),
        cost_estimate=pl.CostEstimate(
            flops=flops, transcendentals=transc, bytes_accessed=bytes_acc),
    )(patches, sw, sb, hw_mat, hb)
    return out.reshape(B, HEAD_C)


# ------------------------------ JAX glue -------------------------------------

def im2col(x_nhwc, kh, kw, stride, pad):
    """Extract conv patches -> (B, OH*OW, kh*kw*C); pure layout glue (fused under jit)."""
    x = jnp.pad(x_nhwc, ((0, 0), (pad, pad), (pad, pad), (0, 0)))
    B, H, W, C = x.shape
    oh = (H - kh) // stride + 1
    ow = (W - kw) // stride + 1
    cols = []
    for i in range(kh):
        for j in range(kw):
            cols.append(x[:, i:i + stride * oh:stride, j:j + stride * ow:stride, :])
    patches = jnp.concatenate(cols, axis=-1)            # (B, oh, ow, kh*kw*C)
    return patches.reshape(B, oh * ow, kh * kw * C), oh, ow


def fold_bn(w, gamma, beta, mean, var, eps=1e-5):
    """Fold inference-mode BatchNorm into a bias-less conv's matmul weights."""
    scale = gamma / jnp.sqrt(var + eps)                 # (Cout,)
    return w * scale[None, :], (beta - mean * scale).reshape(1, -1)


def bn_params(key, c):
    k1, k2, k3 = jax.random.split(key, 3)
    return {
        "gamma": 1.0 + 0.1 * jax.random.normal(k1, (c,), jnp.float32),
        "beta": 0.1 * jax.random.normal(k2, (c,), jnp.float32),
        "mean": 0.1 * jax.random.normal(k3, (c,), jnp.float32),
        "var": jnp.ones((c,), jnp.float32),
    }


def init_params(key, num_classes=NUM_CLASSES):
    ks = jax.random.split(key, 6)
    return {
        # conv_stem: 3x3, 3 -> 32 (bias=False in efficientnet; BN supplies bias)
        "stem_w": 0.10 * jax.random.normal(ks[0], (STEM_K, STEM_C), jnp.float32),
        "stem_bn": bn_params(ks[1], STEM_C),
        # conv_head: 1x1, 32 -> 1280
        "head_w": 0.05 * jax.random.normal(ks[2], (STEM_C, HEAD_C), jnp.float32),
        "head_bn": bn_params(ks[3], HEAD_C),
        # classifier: Linear(1280, num_classes)
        "cls_w": 0.02 * jax.random.normal(ks[4], (HEAD_C, num_classes), jnp.float32),
        "cls_b": 0.01 * jax.random.normal(ks[5], (1, num_classes), jnp.float32),
    }


def _pick_tile(hw):
    """Biggest spatial row tile that divides HW.

    Includes divisors of real-resolution HW (224x224 stem output -> 12544): 1568, 784.
    Even at 1568 the f32 head intermediate is ~8 MB, well inside 32 MiB scoped VMEM
    on every generation including v7x.
    """
    for t in (1568, 1024, 896, 784, 512, 256, 128):
        if hw % t == 0:
            return t
    return hw  # small inputs: single full-extent block (HW is a multiple of 8 here)


def _bf16_silu_ok():
    """bf16 EUP/VPU fast path exists on v6e/v7x but not v5e."""
    kind = jax.devices()[0].device_kind.lower()
    return "v5" not in kind


@functools.partial(jax.jit, static_argnames=("bf16_silu",))
def _forward_impl(params, x_nchw, bf16_silu):
    x = jnp.transpose(x_nchw, (0, 2, 3, 1))             # NCHW -> NHWC (lane-dense C)

    # im2col for the 3x3 s2 p1 stem; pad patch depth 27 -> 32, cast to bf16
    patches, oh, ow = im2col(x, 3, 3, stride=2, pad=1)   # (B, HW, 27)
    hw_spatial = oh * ow
    patches = jnp.pad(patches, ((0, 0), (0, 0), (0, STEM_K_PAD - STEM_K)))
    patches = patches.astype(jnp.bfloat16)

    # fold BN into the matmul weights; bf16 weights, f32 biases
    stem_w, stem_b = fold_bn(params["stem_w"], **params["stem_bn"])
    stem_w = jnp.pad(stem_w, ((0, STEM_K_PAD - STEM_K), (0, 0))).astype(jnp.bfloat16)
    head_w, head_b = fold_bn(params["head_w"], **params["head_bn"])
    head_w = head_w.astype(jnp.bfloat16)

    # TODO(synk): 16 MBConv blocks of efficientnet_b0 omitted (see header comment).

    feats = fused_forward(patches, stem_w, stem_b, head_w, head_b,
                          tile_hw=_pick_tile(hw_spatial),
                          bf16_silu=bf16_silu)           # (B, 1280) f32

    # classifier Linear(1280, 53) — tiny batched GEMM, cheaper in XLA than as an
    # M=1 MXU matmul on the kernel epilogue of every image.
    logits = feats @ params["cls_w"] + params["cls_b"]
    return logits                                        # (B, 53) float32


def simple_card_classifier_forward(params, x_nchw):
    """Forward pass. Input: NCHW float32 (PyTorch convention). Output: (B, num_classes)."""
    return _forward_impl(params, x_nchw, _bf16_silu_ok())


# ------------------------------- main ---------------------------------------

if __name__ == "__main__":
    key = jax.random.PRNGKey(0)
    k_x, k_p = jax.random.split(key)

    # Small NCHW input consistent with an image classifier: (batch=2, C=3, 32, 32)
    x = jax.random.normal(k_x, (2, 3, 32, 32), dtype=jnp.float32)
    params = init_params(k_p, num_classes=NUM_CLASSES)

    logits = simple_card_classifier_forward(params, x)
    jax.block_until_ready(logits)

    assert logits.shape == (2, NUM_CLASSES) and logits.dtype == jnp.float32
    assert bool(jnp.all(jnp.isfinite(logits)))
    print("KERNEL_OK")
</pallas_src>

<mosaic_0001>
module attributes {stable_mosaic.version = 11 : i64} {
  func.func @_fused_forward_kernel(%arg0: i32, %arg1: i32, %arg2: memref<1x256x32xbf16, #tpu.memory_space<vmem>>, %arg3: memref<32x32xbf16, #tpu.memory_space<vmem>>, %arg4: memref<1x32xf32, #tpu.memory_space<vmem>>, %arg5: memref<32x1280xbf16, #tpu.memory_space<vmem>>, %arg6: memref<1x1280xf32, #tpu.memory_space<vmem>>, %arg7: memref<1x1x1280xf32, #tpu.memory_space<vmem>>, %arg8: memref<1x1280xf32, #tpu.memory_space<vmem>>) attributes {dimension_semantics = [#tpu.dimension_semantics<parallel>, #tpu.dimension_semantics<arbitrary>], iteration_bounds = array<i64: 2, 1>, scalar_prefetch = 0 : i64, scratch_operands = 1 : i64, tpu.core_type = #tpu.core_type<tc>, window_params = [{transform_indices = @transform_0, window_bounds = array<i64: 1, 256, 32>}, {pipeline_mode = #tpu.pipeline_mode<synchronous>, transform_indices = @transform_1, window_bounds = array<i64: 32, 32>}, {pipeline_mode = #tpu.pipeline_mode<synchronous>, transform_indices = @transform_2, window_bounds = array<i64: 1, 32>}, {pipeline_mode = #tpu.pipeline_mode<synchronous>, transform_indices = @transform_3, window_bounds = array<i64: 32, 1280>}, {pipeline_mode = #tpu.pipeline_mode<synchronous>, transform_indices = @transform_4, window_bounds = array<i64: 1, 1280>}, {transform_indices = @transform_5, window_bounds = array<i64: 1, 1, 1280>}]} {
    %c0_i32 = arith.constant 0 : i32
    %0 = arith.cmpi eq, %arg1, %c0_i32 : i32
    %1 = arith.extui %0 : i1 to i32
    %c0_i32_0 = arith.constant 0 : i32
    %2 = arith.cmpi ne, %1, %c0_i32_0 : i32
    scf.if %2 {
      %cst_25 = arith.constant 0.000000e+00 : f32
      %42 = vector.broadcast %cst_25 : f32 to vector<1x1280xf32>
      %c0_26 = arith.constant 0 : index
      %c0_27 = arith.constant 0 : index
      %43 = vector.load %arg8[%c0_26, %c0_27] : memref<1x1280xf32, #tpu.memory_space<vmem>>, vector<1x1280xf32>
      tpu.vector_store %arg8[%c0_26, %c0_27], %42 {strides = array<i32>} : memref<1x1280xf32, #tpu.memory_space<vmem>>, vector<1x1280xf32>,
    } else {
    }
    %c0 = arith.constant 0 : index
    %c0_1 = arith.constant 0 : index
    %c0_2 = arith.constant 0 : index
    %3 = vector.load %arg2[%c0, %c0_1, %c0_2] : memref<1x256x32xbf16, #tpu.memory_space<vmem>>, vector<1x256x32xbf16>
    %4 = vector.shape_cast %3 : vector<1x256x32xbf16> to vector<256x32xbf16>
    %c0_3 = arith.constant 0 : index
    %c0_4 = arith.constant 0 : index
    %5 = vector.load %arg3[%c0_3, %c0_4] : memref<32x32xbf16, #tpu.memory_space<vmem>>, vector<32x32xbf16>
    %cst = arith.constant dense<0.000000e+00> : vector<256x32xf32>
    %6 = tpu.matmul %4, %5, %cst {dimension_numbers = #tpu.dot_dimension_numbers<[1], [0], [0], [1], [0, 0, 1, 1], [], []>} : vector<256x32xbf16>, vector<32x32xbf16>, vector<256x32xf32> -> vector<256x32xf32>
    %c0_5 = arith.constant 0 : index
    %c0_6 = arith.constant 0 : index
    %7 = vector.load %arg4[%c0_5, %c0_6] : memref<1x32xf32, #tpu.memory_space<vmem>>, vector<1x32xf32>
    %8 = vector.broadcast %7 : vector<1x32xf32> to vector<256x32xf32>
    %9 = arith.addf %6, %8 : vector<256x32xf32>
    %cst_7 = arith.constant 5.000000e-01 : f32
    %10 = vector.broadcast %cst_7 : f32 to vector<256x32xf32>
    %11 = arith.mulf %10, %9 : vector<256x32xf32>
    %cst_8 = arith.constant 5.000000e-01 : f32
    %12 = vector.broadcast %cst_8 : f32 to vector<256x32xf32>
    %13 = arith.mulf %12, %9 : vector<256x32xf32>
    %14 = math.tanh %13 : vector<256x32xf32>
    %cst_9 = arith.constant 1.000000e+00 : f32
    %15 = vector.broadcast %cst_9 : f32 to vector<256x32xf32>
    %16 = arith.addf %15, %14 : vector<256x32xf32>
    %17 = arith.mulf %11, %16 : vector<256x32xf32>
    %18 = arith.truncf %17 : vector<256x32xf32> to vector<256x32xbf16>
    %c0_10 = arith.constant 0 : index
    %c0_11 = arith.constant 0 : index
    %19 = vector.load %arg5[%c0_10, %c0_11] : memref<32x1280xbf16, #tpu.memory_space<vmem>>, vector<32x1280xbf16>
    %cst_12 = arith.constant dense<0.000000e+00> : vector<256x1280xf32>
    %20 = tpu.matmul %18, %19, %cst_12 {dimension_numbers = #tpu.dot_dimension_numbers<[1], [0], [0], [1], [0, 0, 1, 1], [], []>} : vector<256x32xbf16>, vector<32x1280xbf16>, vector<256x1280xf32> -> vector<256x1280xf32>
    %c0_13 = arith.constant 0 : index
    %c0_14 = arith.constant 0 : index
    %21 = vector.load %arg6[%c0_13, %c0_14] : memref<1x1280xf32, #tpu.memory_space<vmem>>, vector<1x1280xf32>
    %22 = vector.broadcast %21 : vector<1x1280xf32> to vector<256x1280xf32>
    %23 = arith.addf %20, %22 : vector<256x1280xf32>
    %24 = arith.truncf %23 : vector<256x1280xf32> to vector<256x1280xbf16>
    %cst_15 = arith.constant 5.000000e-01 : bf16
    %25 = vector.broadcast %cst_15 : bf16 to vector<256x1280xbf16>
    %26 = arith.mulf %25, %24 : vector<256x1280xbf16>
    %cst_16 = arith.constant 5.000000e-01 : bf16
    %27 = vector.broadcast %cst_16 : bf16 to vector<256x1280xbf16>
    %28 = arith.mulf %27, %24 : vector<256x1280xbf16>
    %29 = math.tanh %28 : vector<256x1280xbf16>
    %cst_17 = arith.constant 1.000000e+00 : bf16
    %30 = vector.broadcast %cst_17 : bf16 to vector<256x1280xbf16>
    %31 = arith.addf %30, %29 : vector<256x1280xbf16>
    %32 = arith.mulf %26, %31 : vector<256x1280xbf16>
    %33 = arith.extf %32 : vector<256x1280xbf16> to vector<256x1280xf32>
    %c0_18 = arith.constant 0 : index
    %c0_19 = arith.constant 0 : index
    %34 = vector.load %arg8[%c0_18, %c0_19] : memref<1x1280xf32, #tpu.memory_space<vmem>>, vector<1x1280xf32>
    %cst_20 = arith.constant dense<0.000000e+00> : vector<1280xf32>
    %35 = vector.multi_reduction <add>, %33, %cst_20 [0] : vector<256x1280xf32> to vector<1280xf32>
    %36 = vector.shape_cast %35 : vector<1280xf32> to vector<1x1280xf32>
    %37 = arith.addf %34, %36 : vector<1x1280xf32>
    %c0_21 = arith.constant 0 : index
    %c0_22 = arith.constant 0 : index
    %38 = vector.load %arg8[%c0_21, %c0_22] : memref<1x1280xf32, #tpu.memory_space<vmem>>, vector<1x1280xf32>
    tpu.vector_store %arg8[%c0_21, %c0_22], %37 {strides = array<i32>} : memref<1x1280xf32, #tpu.memory_space<vmem>>, vector<1x1280xf32>,
    %c0_i32_23 = arith.constant 0 : i32
    %39 = arith.cmpi eq, %arg1, %c0_i32_23 : i32
    %40 = arith.extui %39 : i1 to i32
    %c0_i32_24 = arith.constant 0 : i32
    %41 = arith.cmpi ne, %40, %c0_i32_24 : i32
    scf.if %41 {
      %c0_25 = arith.constant 0 : index
      %c0_26 = arith.constant 0 : index
      %42 = vector.load %arg8[%c0_25, %c0_26] : memref<1x1280xf32, #tpu.memory_space<vmem>>, vector<1x1280xf32>
      %cst_27 = arith.constant 3.906250e-03 : f32
      %43 = vector.broadcast %cst_27 : f32 to vector<1x1280xf32>
      %44 = arith.mulf %42, %43 : vector<1x1280xf32>
      %c0_28 = arith.constant 0 : index
      %c0_29 = arith.constant 0 : index
      %c0_30 = arith.constant 0 : index
      %45 = vector.load %arg7[%c0_28, %c0_29, %c0_30] : memref<1x1x1280xf32, #tpu.memory_space<vmem>>, vector<1x1x1280xf32>
      %46 = vector.shape_cast %45 : vector<1x1x1280xf32> to vector<1x1280xf32>
      %47 = vector.shape_cast %44 : vector<1x1280xf32> to vector<1x1x1280xf32>
      tpu.vector_store %arg7[%c0_28, %c0_29, %c0_30], %47 {strides = array<i32>} : memref<1x1x1280xf32, #tpu.memory_space<vmem>>, vector<1x1x1280xf32>,
    } else {
    }
    return
  }
  func.func @transform_0(%arg0: i32, %arg1: i32) -> (i32, i32, i32) {
    %c0_i32 = arith.constant 0 : i32
    %c0_i32_0 = arith.constant 0 : i32
    return %arg0, %arg1, %c0_i32 : i32, i32, i32
  }
  func.func @transform_1(%arg0: i32, %arg1: i32) -> (i32, i32) {
    %c0_i32 = arith.constant 0 : i32
    %c0_i32_0 = arith.constant 0 : i32
    %c0_i32_1 = arith.constant 0 : i32
    return %c0_i32, %c0_i32_0 : i32, i32
  }
  func.func @transform_2(%arg0: i32, %arg1: i32) -> (i32, i32) {
    %c0_i32 = arith.constant 0 : i32
    %c0_i32_0 = arith.constant 0 : i32
    %c0_i32_1 = arith.constant 0 : i32
    return %c0_i32, %c0_i32_0 : i32, i32
  }
  func.func @transform_3(%arg0: i32, %arg1: i32) -> (i32, i32) {
    %c0_i32 = arith.constant 0 : i32
    %c0_i32_0 = arith.constant 0 : i32
    %c0_i32_1 = arith.constant 0 : i32
    return %c0_i32, %c0_i32_0 : i32, i32
  }
  func.func @transform_4(%arg0: i32, %arg1: i32) -> (i32, i32) {
    %c0_i32 = arith.constant 0 : i32
    %c0_i32_0 = arith.constant 0 : i32
    %c0_i32_1 = arith.constant 0 : i32
    return %c0_i32, %c0_i32_0 : i32, i32
  }
  func.func @transform_5(%arg0: i32, %arg1: i32) -> (i32, i32, i32) {
    %c0_i32 = arith.constant 0 : i32
    %c0_i32_0 = arith.constant 0 : i32
    %c0_i32_1 = arith.constant 0 : i32
    return %arg0, %c0_i32, %c0_i32_0 : i32, i32, i32
  }
}

</mosaic_0001>

<llo_original>
// kernel: _forward_impl.1
$region0: #{_forward_impl.1}
  #allocation0 [shape = 'u32[]', space=smem, size = 0x4, offset = 0x4, fixed_abs, tag = 'smem constant byte address 0x4 - core index']
  #allocation1 [shape = 'u32[72,128]{1,0:T(1,128)}', space=vmem, size = 0x9000, scoped, tag = 'internal scratch']
  #allocation2 [shape = 'f32[1,1280]{1,0:T(1,128)}', space=vmem, size = 0x1400, scoped, tag = 'scratch operand']
  %s0 = inlined_call_operand.vmem [shape: bf16[2,256,32], index: 0, kind: input, shape index: {}]
  %s1 = inlined_call_operand.vmem [shape: bf16[32,32], index: 1, kind: input, shape index: {}]
  %s2 = inlined_call_operand.vmem [shape: f32[1,32], index: 2, kind: input, shape index: {}]
  %s3 = inlined_call_operand.vmem [shape: bf16[32,1280], index: 3, kind: input, shape index: {}]
  %s4 = inlined_call_operand.vmem [shape: f32[1,1280], index: 4, kind: input, shape index: {}]
  %s5 = inlined_call_operand.vmem [shape: f32[2,1,1280], index: 5, kind: output, shape index: {}]
  %s6 = sld [smem:[#allocation0]]
  $region61: #{_forward_impl.1} parent=0
    _
  %s8 = ssub.s32 1, %s6
  %s9 = scalar_select 0, %s8, %s6
  loop: start=0, step=1, limit=4
  $region2: #{_forward_impl.1} parent=0 // loop_pre_header
    _
  $region3: #{_forward_impl.1} parent=0 // loop_header
    %s11 = sphi 0, %s15
    %p12 = scmp.ge.s32.totalorder %s11, 4
    %s18 = sphi 0, %s30
    %s19 = sphi 0, %s26
    %s20 = sphi 0, %s18
    %s21 = sphi 0, %s19
    %s22 = sphi 0, %s20
    %s23 = sphi 0, %s21
    %s35 = sphi 0, %s37
    %s38 = sphi 0, %s35
    %s39 = sphi 0, %s38
    %s55 = sphi 0, %s39
    %s59 = sphi 0, %s59
    %s61 = sphi 0, %s59
    %s62 = sphi 0, %s61
    %s76 = sphi 0, %s62
    %s80 = sphi 0, %s80
    %s82 = sphi 0, %s80
    %s83 = sphi 0, %s82
    %s97 = sphi 0, %s83
    %s101 = sphi 0, %s101
    %s103 = sphi 0, %s101
    %s104 = sphi 0, %s103
    %s118 = sphi 0, %s104
    %s122 = sphi 0, %s122
    %s124 = sphi 0, %s122
    %s125 = sphi 0, %s124
    %s139 = sphi 0, %s125
    %s145 = sphi 0, %s147
    %s148 = sphi 0, %s145
    %s149 = sphi 0, %s148
    %s165 = sphi 0, %s149
  $region4: #{_forward_impl.1} parent=0 // loop_header_branch
    %14 = sbr.rel (%p12) target = $region8
  $region5: #{_forward_impl.1} parent=0 // loop_body
    %s16 = ssub.s32 %s11, 1
    %s17 = ssub.s32 %s11, 2
    %s24 = sadd.s32 1, %s19
    %p25 = scmp.ge.s32.totalorder %s24, 1
    %s26 = scalar_select %p25, 0, %s24
    %s27 = sadd.s32 1, %s18
    %s28 = scalar_select %p25, %s27, %s18
    %p29 = scmp.ge.s32.totalorder %s28, 2
    %s30 = scalar_select %p29, 0, %s28
    %s31 = ssub.s32 %s18, %s30
    %s32 = ssub.s32 %s19, %s26
    %s33 = sor.u32 %s31, %s32
    %p34 = scmp.eq.s32.totalorder %s33, 0
    %s36 = sadd.s32 %s35, 1
    %s37 = scalar_select %p34, %s35, %s36
    %p40 = pneg %p34
    %p41 = scmp.eq.s32.totalorder %s11, 1
    %p42 = por %p40, %p41
    %p43 = scmp.ne.s32.totalorder %s35, %s38
    %p44 = scmp.eq.s32.totalorder %s11, 0
    %p45 = por %p43, %p44
    %p46 = scmp.ne.s32.totalorder %s35, %s38
    %p47 = scmp.eq.s32.totalorder %s16, 1
    %p48 = por %p46, %p47
    %p49 = scmp.ne.s32.totalorder %s38, %s39
    %p50 = scmp.eq.s32.totalorder %s16, 0
    %p51 = por %p49, %p50
    %p52 = scmp.ne.s32.totalorder %s38, %s39
    %p53 = scmp.eq.s32.totalorder %s17, 1
    %p54 = por %p52, %p53
    %p56 = scmp.ne.s32.totalorder %s39, %s55
    %p57 = scmp.eq.s32.totalorder %s17, 0
    %p58 = por %p56, %p57
    %s60 = sadd.s32 %s59, 1
    %p63 = scmp.eq.s32.totalorder %s11, 1
    %p64 = scmp.ne.s32.totalorder %s59, %s61
    %p65 = scmp.eq.s32.totalorder %s11, 0
    %p66 = por %p64, %p65
    %p67 = scmp.ne.s32.totalorder %s59, %s61
    %p68 = scmp.eq.s32.totalorder %s16, 1
    %p69 = por %p67, %p68
    %p70 = scmp.ne.s32.totalorder %s61, %s62
    %p71 = scmp.eq.s32.totalorder %s16, 0
    %p72 = por %p70, %p71
    %p73 = scmp.ne.s32.totalorder %s61, %s62
    %p74 = scmp.eq.s32.totalorder %s17, 1
    %p75 = por %p73, %p74
    %p77 = scmp.ne.s32.totalorder %s62, %s76
    %p78 = scmp.eq.s32.totalorder %s17, 0
    %p79 = por %p77, %p78
    %s81 = sadd.s32 %s80, 1
    %p84 = scmp.eq.s32.totalorder %s11, 1
    %p85 = scmp.ne.s32.totalorder %s80, %s82
    %p86 = scmp.eq.s32.totalorder %s11, 0
    %p87 = por %p85, %p86
    %p88 = scmp.ne.s32.totalorder %s80, %s82
    %p89 = scmp.eq.s32.totalorder %s16, 1
    %p90 = por %p88, %p89
    %p91 = scmp.ne.s32.totalorder %s82, %s83
    %p92 = scmp.eq.s32.totalorder %s16, 0
    %p93 = por %p91, %p92
    %p94 = scmp.ne.s32.totalorder %s82, %s83
    %p95 = scmp.eq.s32.totalorder %s17, 1
    %p96 = por %p94, %p95
    %p98 = scmp.ne.s32.totalorder %s83, %s97
    %p99 = scmp.eq.s32.totalorder %s17, 0
    %p100 = por %p98, %p99
    %s102 = sadd.s32 %s101, 1
    %p105 = scmp.eq.s32.totalorder %s11, 1
    %p106 = scmp.ne.s32.totalorder %s101, %s103
    %p107 = scmp.eq.s32.totalorder %s11, 0
    %p108 = por %p106, %p107
    %p109 = scmp.ne.s32.totalorder %s101, %s103
    %p110 = scmp.eq.s32.totalorder %s16, 1
    %p111 = por %p109, %p110
    %p112 = scmp.ne.s32.totalorder %s103, %s104
    %p113 = scmp.eq.s32.totalorder %s16, 0
    %p114 = por %p112, %p113
    %p115 = scmp.ne.s32.totalorder %s103, %s104
    %p116 = scmp.eq.s32.totalorder %s17, 1
    %p117 = por %p115, %p116
    %p119 = scmp.ne.s32.totalorder %s104, %s118
    %p120 = scmp.eq.s32.totalorder %s17, 0
    %p121 = por %p119, %p120
    %s123 = sadd.s32 %s122, 1
    %p126 = scmp.eq.s32.totalorder %s11, 1
    %p127 = scmp.ne.s32.totalorder %s122, %s124
    %p128 = scmp.eq.s32.totalorder %s11, 0
    %p129 = por %p127, %p128
    %p130 = scmp.ne.s32.totalorder %s122, %s124
    %p131 = scmp.eq.s32.totalorder %s16, 1
    %p132 = por %p130, %p131
    %p133 = scmp.ne.s32.totalorder %s124, %s125
    %p134 = scmp.eq.s32.totalorder %s16, 0
    %p135 = por %p133, %p134
    %p136 = scmp.ne.s32.totalorder %s124, %s125
    %p137 = scmp.eq.s32.totalorder %s17, 1
    %p138 = por %p136, %p137
    %p140 = scmp.ne.s32.totalorder %s125, %s139
    %p141 = scmp.eq.s32.totalorder %s17, 0
    %p142 = por %p140, %p141
    %s143 = ssub.s32 %s18, %s30
    %p144 = scmp.eq.s32.totalorder %s143, 0
    %s146 = sadd.s32 %s145, 1
    %s147 = scalar_select %p144, %s145, %s146
    %p150 = pneg %p144
    %p151 = scmp.eq.s32.totalorder %s11, 1
    %p152 = por %p150, %p151
    %p153 = scmp.ne.s32.totalorder %s145, %s148
    %p154 = scmp.eq.s32.totalorder %s11, 0
    %p155 = por %p153, %p154
    %p156 = scmp.ne.s32.totalorder %s145, %s148
    %p157 = scmp.eq.s32.totalorder %s16, 1
    %p158 = por %p156, %p157
    %p159 = scmp.ne.s32.totalorder %s148, %s149
    %p160 = scmp.eq.s32.totalorder %s16, 0
    %p161 = por %p159, %p160
    %p162 = scmp.ne.s32.totalorder %s148, %s149
    %p163 = scmp.eq.s32.totalorder %s17, 1
    %p164 = por %p162, %p163
    %p166 = scmp.ne.s32.totalorder %s149, %s165
    %p167 = scmp.eq.s32.totalorder %s17, 0
    %p168 = por %p166, %p167
    %p169 = scmp.le.s32.totalorder 1, %s11
    %p170 = scmp.lt.s32.totalorder %s11, 3
    %p171 = pnand %p169, %p170
    %p172 = pneg %p171
    // Predicated region
    $region9: #{_forward_impl.1} parent=5 // pred_check
      _
    $region10: #{_forward_impl.1} parent=5 // pred_check_branch
      %174 = sbr.rel (%p171) target = $region12
    $region11: #{_forward_impl.1} parent=5 // pred_region
      %s175 = ssub.s32 %s11, 1
      // Predicated region
      $region13: #{_forward_impl.1} parent=11 // pred_check
        %p176 = pneg %p72
      $region14: #{_forward_impl.1} parent=11 // pred_check_branch
        %178 = sbr.rel (%p176) target = $region16
      $region15: #{_forward_impl.1} parent=11 // pred_region
        _
      $region16: #{_forward_impl.1} parent=11 // pred_fallthru
        _
      // Predicated region
      $region17: #{_forward_impl.1} parent=11 // pred_check
        %p179 = pneg %p93
      $region18: #{_forward_impl.1} parent=11 // pred_check_branch
        %181 = sbr.rel (%p179) target = $region20
      $region19: #{_forward_impl.1} parent=11 // pred_region
        _
      $region20: #{_forward_impl.1} parent=11 // pred_fallthru
        _
      // Predicated region
      $region21: #{_forward_impl.1} parent=11 // pred_check
        %p182 = pneg %p114
      $region22: #{_forward_impl.1} parent=11 // pred_check_branch
        %184 = sbr.rel (%p182) target = $region24
      $region23: #{_forward_impl.1} parent=11 // pred_region
        _
      $region24: #{_forward_impl.1} parent=11 // pred_fallthru
        _
      // Predicated region
      $region25: #{_forward_impl.1} parent=11 // pred_check
        %p185 = pneg %p135
      $region26: #{_forward_impl.1} parent=11 // pred_check_branch
        %187 = sbr.rel (%p185) target = $region28
      $region27: #{_forward_impl.1} parent=11 // pred_region
        _
      $region28: #{_forward_impl.1} parent=11 // pred_fallthru
        _
    $region12: #{_forward_impl.1} parent=5 // pred_fallthru
      _
    %p188 = scmp.lt.s32.totalorder %s11, 2
    // Predicated region
    $region29: #{_forward_impl.1} parent=5 // pred_check
      %p189 = pneg %p188
    $region30: #{_forward_impl.1} parent=5 // pred_check_branch
      %191 = sbr.rel (%p189) target = $region32
    $region31: #{_forward_impl.1} parent=5 // pred_region
      // Predicated region
      $region33: #{_forward_impl.1} parent=31 // pred_check
        %p192 = pneg %p45
      $region34: #{_forward_impl.1} parent=31 // pred_check_branch
        %194 = sbr.rel (%p192) target = $region36
      $region35: #{_forward_impl.1} parent=31 // pred_region
        %s195 = smul.u32 32, %s19
        %p196 = scmp.lt.s32.totalorder %s18, 1
        %s197 = scalar_select %p196, %s18, 1
        %p198 = scmp.lt.s32.totalorder %s195, 31
        %s199 = scalar_select %p198, %s195, 31
        %s200 = smul.addr %s197, 32
        %s201 = sadd.s32 %s199, %s200
        %s202 = smul.addr %s201, 4
        %s203 = scalar_lea.vmem %s0, %s202
        %s204 = smul.u32 32, %s19
      $region36: #{_forward_impl.1} parent=31 // pred_fallthru
        _
    $region32: #{_forward_impl.1} parent=5 // pred_fallthru
      _
    %p205 = scmp.le.s32.totalorder 1, %s11
    %p206 = scmp.lt.s32.totalorder %s11, 3
    %p207 = pnand %p205, %p206
    %p208 = pneg %p207
    // Predicated region
    $region37: #{_forward_impl.1} parent=5 // pred_check
      _
    $region38: #{_forward_impl.1} parent=5 // pred_check_branch
      %210 = sbr.rel (%p207) target = $region40
    $region39: #{_forward_impl.1} parent=5 // pred_region
      %s211 = ssub.s32 %s11, 1
      %s212 = smul.u32 32, %s21
      %p213 = scmp.lt.s32.totalorder %s20, 1
      %s214 = scalar_select %p213, %s20, 1
      %p215 = scmp.lt.s32.totalorder %s212, 31
      %s216 = scalar_select %p215, %s212, 31
      %s217 = smul.addr %s214, 32
      %s218 = sadd.s32 %s216, %s217
      %s219 = smul.addr %s218, 4
      %s220 = scalar_lea.vmem %s0, %s219
      %p221 = pneg %p51
      %p222 = pneg %p48
      %p223 = pneg %p72
      %p224 = pneg %p69
      %p225 = pneg %p93
      %p226 = pneg %p90
      %p227 = pneg %p114
      %p228 = pneg %p111
      %p229 = pneg %p135
      %p230 = pneg %p132
      %p231 = pneg %p161
      %p232 = pneg %p158
      %p233 = scmp.lt.s32.totalorder %s20, 1
      %s234 = scalar_select %p233, %s20, 1
      %s235 = smul.addr %s234, 10
      %s236 = scalar_lea.vmem %s5, %s235
      %s237 = smul.u32 32, %s21
      %p238 = scmp.lt.s32.totalorder %s20, 1
      %s239 = scalar_select %p238, %s20, 1
      %p240 = scmp.lt.s32.totalorder %s237, 31
      %s241 = scalar_select %p240, %s237, 31
      %s242 = smul.addr %s239, 32
      %s243 = sadd.s32 %s241, %s242
      %s244 = smul.addr %s243, 4
      %s245 = scalar_lea.vmem %s0, %s244
      %s246 = smul.u32 32, %s21
      %p247 = scmp.lt.s32.totalorder %s20, 1
      %s248 = scalar_select %p247, %s20, 1
      %s249 = smul.addr %s248, 10
      %s250 = scalar_lea.vmem %s5, %s249
      %p252 = scmp.eq.s32.totalorder %s21, 0
      // Predicated region
      $region41: #{_forward_impl.1} parent=39 // pred_check
        %p253 = pneg %p252
      $region42: #{_forward_impl.1} parent=39 // pred_check_branch
        %255 = sbr.rel (%p253) target = $region44
      $region43: #{_forward_impl.1} parent=39 // pred_region
        %256 = vst [vmem:[#allocation2] sm:$0xff] 0.0
        %v257 = vlaneseq
        %vm258 = vcmp.ge.s32.totalorder %v257, 0
        %vm259 = vcmp.lt.s32.totalorder %v257, 256
        %vm260 = vmand %vm258, %vm259
        %261 = vst.msk [vmem:[#allocation2 + $0x8] sm:$0x3] %vm260, 0.0
      $region44: #{_forward_impl.1} parent=39 // pred_fallthru
        _
      %v262 = vld [vmem:[%s245] sm:$0xf]
      %v263 = vld [vmem:[%s245 + $0x4] sm:$0xf]
      %v264 = vld [vmem:[%s245 + $0x8] sm:$0xf]
      %v265 = vld [vmem:[%s245 + $0xc] sm:$0xf]
      %v266 = vld [vmem:[%s245 + $0x10] sm:$0xf]
      %v267 = vld [vmem:[%s245 + $0x14] sm:$0xf]
      %v268 = vld [vmem:[%s245 + $0x18] sm:$0xf]
      %v269 = vld [vmem:[%s245 + $0x1c] sm:$0xf]
      %v270 = vld [vmem:[%s245 + $0x20] sm:$0xf]
      %v271 = vld [vmem:[%s245 + $0x24] sm:$0xf]
      %v272 = vld [vmem:[%s245 + $0x28] sm:$0xf]
      %v273 = vld [vmem:[%s245 + $0x2c] sm:$0xf]
      %v274 = vld [vmem:[%s245 + $0x30] sm:$0xf]
      %v275 = vld [vmem:[%s245 + $0x34] sm:$0xf]
      %v276 = vld [vmem:[%s245 + $0x38] sm:$0xf]
      %v277 = vld [vmem:[%s245 + $0x3c] sm:$0xf]
      %v278 = vld [vmem:[%s245 + $0x40] sm:$0xf]
      %v279 = vld [vmem:[%s245 + $0x44] sm:$0xf]
      %v280 = vld [vmem:[%s245 + $0x48] sm:$0xf]
      %v281 = vld [vmem:[%s245 + $0x4c] sm:$0xf]
      %v282 = vld [vmem:[%s245 + $0x50] sm:$0xf]
      %v283 = vld [vmem:[%s245 + $0x54] sm:$0xf]
      %v284 = vld [vmem:[%s245 + $0x58] sm:$0xf]
      %v285 = vld [vmem:[%s245 + $0x5c] sm:$0xf]
      %v286 = vld [vmem:[%s245 + $0x60] sm:$0xf]
      %v287 = vld [vmem:[%s245 + $0x64] sm:$0xf]
      %v288 = vld [vmem:[%s245 + $0x68] sm:$0xf]
      %v289 = vld [vmem:[%s245 + $0x6c] sm:$0xf]
      %v290 = vld [vmem:[%s245 + $0x70] sm:$0xf]
      %v291 = vld [vmem:[%s245 + $0x74] sm:$0xf]
      %v292 = vld [vmem:[%s245 + $0x78] sm:$0xf]
      %v293 = vld [vmem:[%s245 + $0x7c] sm:$0xf]
      %v294 = vld [vmem:[%s1] sm:$0xf]
      %v295 = vld [vmem:[%s1 + $0x4] sm:$0xf]
      %v296 = vld [vmem:[%s1 + $0x8] sm:$0xf]
      %v297 = vld [vmem:[%s1 + $0xc] sm:$0xf]
      %v298 = vld [vmem:[%s2] sm:$0x1]
      %v300 = vperm.slane %v298, 0
      %v334 = vunpack.c.l.b16 %v262
      %v335 = vunpack.c.l.b16 %v263
      %v336 = vunpack.c.l.b16 %v264
      %v337 = vunpack.c.l.b16 %v265
      %v338 = vunpack.c.l.b16 %v266
      %v339 = vunpack.c.l.b16 %v267
      %v340 = vunpack.c.l.b16 %v268
      %v341 = vunpack.c.l.b16 %v269
      %v342 = vunpack.c.l.b16 %v270
      %v343 = vunpack.c.l.b16 %v271
      %v344 = vunpack.c.l.b16 %v272
      %v345 = vunpack.c.l.b16 %v273
      %v346 = vunpack.c.l.b16 %v274
      %v347 = vunpack.c.l.b16 %v275
      %v348 = vunpack.c.l.b16 %v276
      %v349 = vunpack.c.l.b16 %v277
      %v350 = vunpack.c.l.b16 %v278
      %v351 = vunpack.c.l.b16 %v279
      %v352 = vunpack.c.l.b16 %v280
      %v353 = vunpack.c.l.b16 %v281
      %v354 = vunpack.c.l.b16 %v282
      %v355 = vunpack.c.l.b16 %v283
      %v356 = vunpack.c.l.b16 %v284
      %v357 = vunpack.c.l.b16 %v285
      %v358 = vunpack.c.l.b16 %v286
      %v359 = vunpack.c.l.b16 %v287
      %v360 = vunpack.c.l.b16 %v288
      %v361 = vunpack.c.l.b16 %v289
      %v362 = vunpack.c.l.b16 %v290
      %v363 = vunpack.c.l.b16 %v291
      %v364 = vunpack.c.l.b16 %v292
      %v365 = vunpack.c.l.b16 %v293
      %v366 = vpack.c.b16 %v335, %v334
      %v367 = vpack.c.b16 %v337, %v336
      %v368 = vpack.c.b16 %v339, %v338
      %v369 = vpack.c.b16 %v341, %v340
      %v370 = vpack.c.b16 %v343, %v342
      %v371 = vpack.c.b16 %v345, %v344
      %v372 = vpack.c.b16 %v347, %v346
      %v373 = vpack.c.b16 %v349, %v348
      %v374 = vpack.c.b16 %v351, %v350
      %v375 = vpack.c.b16 %v353, %v352
      %v376 = vpack.c.b16 %v355, %v354
      %v377 = vpack.c.b16 %v357, %v356
      %v378 = vpack.c.b16 %v359, %v358
      %v379 = vpack.c.b16 %v361, %v360
      %v380 = vpack.c.b16 %v363, %v362
      %v381 = vpack.c.b16 %v365, %v364
      %v386 = vunpack.c.l.b16 %v294
      %v387 = vunpack.c.l.b16 %v295
      %v388 = vunpack.c.l.b16 %v296
      %v389 = vunpack.c.l.b16 %v297
      %v390 = vpack.c.b16 %v387, %v386
      %v391 = vpack.c.b16 %v389, %v388
      %vm394 = vcmask 261120
      %v396 = vsel %vm394, %v366, 0
      %v399 = vsel %vm394, %v367, 0
      %v402 = vsel %vm394, %v368, 0
      %v405 = vsel %vm394, %v369, 0
      %v408 = vsel %vm394, %v370, 0
      %v411 = vsel %vm394, %v371, 0
      %v414 = vsel %vm394, %v372, 0
      %v417 = vsel %vm394, %v373, 0
      %v420 = vsel %vm394, %v374, 0
      %v423 = vsel %vm394, %v375, 0
      %v426 = vsel %vm394, %v376, 0
      %v429 = vsel %vm394, %v377, 0
      %v432 = vsel %vm394, %v378, 0
      %v435 = vsel %vm394, %v379, 0
      %v438 = vsel %vm394, %v380, 0
      %v441 = vsel %vm394, %v381, 0
      %443 = vmatpush.bf16.msra.mxu0 0
      %444 = vmatpush.bf16.msra.mxu0 0
      %445 = vmatpush.bf16.msra.mxu0 0
      %446 = vmatpush.bf16.msra.mxu0 0
      %447 = vmatpush.bf16.msra.mxu0 0
      %448 = vmatpush.bf16.msra.mxu0 0
      %449 = vmatpush.bf16.msra.mxu0 %v391
      %450 = vmatpush.bf16.msra.mxu0 %v390
      %451 = vmatmul.bf16.gmra.mxu0 %v396
      %v452 = vpop.f32.mrf.mxu0
      %v453 = vadd.f32 %v300, %v452
      %v454 = vpop.f32.mrf.mxu0
      %v455 = vadd.f32 %v300, %v454
      %456 = vmatmul.bf16.gmra.mxu0 %v399
      %v457 = vpop.f32.mrf.mxu0
      %v458 = vadd.f32 %v300, %v457
      %v459 = vpop.f32.mrf.mxu0
      %v460 = vadd.f32 %v300, %v459
      %461 = vmatmul.bf16.gmra.mxu0 %v402
      %v462 = vpop.f32.mrf.mxu0
      %v463 = vadd.f32 %v300, %v462
      %v464 = vpop.f32.mrf.mxu0
      %v465 = vadd.f32 %v300, %v464
      %466 = vmatmul.bf16.gmra.mxu0 %v405
      %v467 = vpop.f32.mrf.mxu0
      %v468 = vadd.f32 %v300, %v467
      %v469 = vpop.f32.mrf.mxu0
      %v470 = vadd.f32 %v300, %v469
      %471 = vmatmul.bf16.gmra.mxu0 %v408
      %v472 = vpop.f32.mrf.mxu0
      %v473 = vadd.f32 %v300, %v472
      %v474 = vpop.f32.mrf.mxu0
      %v475 = vadd.f32 %v300, %v474
      %476 = vmatmul.bf16.gmra.mxu0 %v411
      %v477 = vpop.f32.mrf.mxu0
      %v478 = vadd.f32 %v300, %v477
      %v479 = vpop.f32.mrf.mxu0
      %v480 = vadd.f32 %v300, %v479
      %481 = vmatmul.bf16.gmra.mxu0 %v414
      %v482 = vpop.f32.mrf.mxu0
      %v483 = vadd.f32 %v300, %v482
      %v484 = vpop.f32.mrf.mxu0
      %v485 = vadd.f32 %v300, %v484
      %486 = vmatmul.bf16.gmra.mxu0 %v417
      %v487 = vpop.f32.mrf.mxu0
      %v488 = vadd.f32 %v300, %v487
      %v489 = vpop.f32.mrf.mxu0
      %v490 = vadd.f32 %v300, %v489
      %491 = vmatmul.bf16.gmra.mxu0 %v420
      %v492 = vpop.f32.mrf.mxu0
      %v493 = vadd.f32 %v300, %v492
      %v494 = vpop.f32.mrf.mxu0
      %v495 = vadd.f32 %v300, %v494
      %496 = vmatmul.bf16.gmra.mxu0 %v423
      %v497 = vpop.f32.mrf.mxu0
      %v498 = vadd.f32 %v300, %v497
      %v499 = vpop.f32.mrf.mxu0
      %v500 = vadd.f32 %v300, %v499
      %501 = vmatmul.bf16.gmra.mxu0 %v426
      %v502 = vpop.f32.mrf.mxu0
      %v503 = vadd.f32 %v300, %v502
      %v504 = vpop.f32.mrf.mxu0
      %v505 = vadd.f32 %v300, %v504
      %506 = vmatmul.bf16.gmra.mxu0 %v429
      %v507 = vpop.f32.mrf.mxu0
      %v508 = vadd.f32 %v300, %v507
      %v509 = vpop.f32.mrf.mxu0
      %v510 = vadd.f32 %v300, %v509
      %511 = vmatmul.bf16.gmra.mxu0 %v432
      %v512 = vpop.f32.mrf.mxu0
      %v513 = vadd.f32 %v300, %v512
      %v514 = vpop.f32.mrf.mxu0
      %v515 = vadd.f32 %v300, %v514
      %516 = vmatmul.bf16.gmra.mxu0 %v435
      %v517 = vpop.f32.mrf.mxu0
      %v518 = vadd.f32 %v300, %v517
      %v519 = vpop.f32.mrf.mxu0
      %v520 = vadd.f32 %v300, %v519
      %521 = vmatmul.bf16.gmra.mxu0 %v438
      %v522 = vpop.f32.mrf.mxu0
      %v523 = vadd.f32 %v300, %v522
      %v524 = vpop.f32.mrf.mxu0
      %v525 = vadd.f32 %v300, %v524
      %526 = vmatmul.bf16.gmra.mxu0 %v441
      %v527 = vpop.f32.mrf.mxu0
      %v528 = vadd.f32 %v300, %v527
      %v529 = vpop.f32.mrf.mxu0
      %v530 = vadd.f32 %v300, %v529
      %531 = vdwg.mxu0
      %v532 = vmul.f32 %v453, 0.5
      %v533 = vmul.f32 %v455, 0.5
      %v534 = vmul.f32 %v458, 0.5
      %v535 = vmul.f32 %v460, 0.5
      %v536 = vmul.f32 %v463, 0.5
      %v537 = vmul.f32 %v465, 0.5
      %v538 = vmul.f32 %v468, 0.5
      %v539 = vmul.f32 %v470, 0.5
      %v540 = vmul.f32 %v473, 0.5
      %v541 = vmul.f32 %v475, 0.5
      %v542 = vmul.f32 %v478, 0.5
      %v543 = vmul.f32 %v480, 0.5
      %v544 = vmul.f32 %v483, 0.5
      %v545 = vmul.f32 %v485, 0.5
      %v546 = vmul.f32 %v488, 0.5
      %v547 = vmul.f32 %v490, 0.5
      %v548 = vmul.f32 %v493, 0.5
      %v549 = vmul.f32 %v495, 0.5
      %v550 = vmul.f32 %v498, 0.5
      %v551 = vmul.f32 %v500, 0.5
      %v552 = vmul.f32 %v503, 0.5
      %v553 = vmul.f32 %v505, 0.5
      %v554 = vmul.f32 %v508, 0.5
      %v555 = vmul.f32 %v510, 0.5
      %v556 = vmul.f32 %v513, 0.5
      %v557 = vmul.f32 %v515, 0.5
      %v558 = vmul.f32 %v518, 0.5
      %v559 = vmul.f32 %v520, 0.5
      %v560 = vmul.f32 %v523, 0.5
      %v561 = vmul.f32 %v525, 0.5
      %v562 = vmul.f32 %v528, 0.5
      %v563 = vmul.f32 %v530, 0.5
      %v564 = vtanh.pop %v532
      %v565 = vtanh.pop %v533
      %v566 = vtanh.pop %v534
      %v567 = vtanh.pop %v535
      %v568 = vtanh.pop %v536
      %v569 = vtanh.pop %v537
      %v570 = vtanh.pop %v538
      %v571 = vtanh.pop %v539
      %v572 = vtanh.pop %v540
      %v573 = vtanh.pop %v541
      %v574 = vtanh.pop %v542
      %v575 = vtanh.pop %v543
      %v576 = vtanh.pop %v544
      %v577 = vtanh.pop %v545
      %v578 = vtanh.pop %v546
      %v579 = vtanh.pop %v547
      %v580 = vtanh.pop %v548
      %v581 = vtanh.pop %v549
      %v582 = vtanh.pop %v550
      %v583 = vtanh.pop %v551
      %v584 = vtanh.pop %v552
      %v585 = vtanh.pop %v553
      %v586 = vtanh.pop %v554
      %v587 = vtanh.pop %v555
      %v588 = vtanh.pop %v556
      %v589 = vtanh.pop %v557
      %v590 = vtanh.pop %v558
      %v591 = vtanh.pop %v559
      %v592 = vtanh.pop %v560
      %v593 = vtanh.pop %v561
      %v594 = vtanh.pop %v562
      %v595 = vtanh.pop %v563
      %v596 = vadd.f32 %v564, 1.0
      %v597 = vadd.f32 %v565, 1.0
      %v598 = vadd.f32 %v566, 1.0
      %v599 = vadd.f32 %v567, 1.0
      %v600 = vadd.f32 %v568, 1.0
      %v601 = vadd.f32 %v569, 1.0
      %v602 = vadd.f32 %v570, 1.0
      %v603 = vadd.f32 %v571, 1.0
      %v604 = vadd.f32 %v572, 1.0
      %v605 = vadd.f32 %v573, 1.0
      %v606 = vadd.f32 %v574, 1.0
      %v607 = vadd.f32 %v575, 1.0
      %v608 = vadd.f32 %v576, 1.0
      %v609 = vadd.f32 %v577, 1.0
      %v610 = vadd.f32 %v578, 1.0
      %v611 = vadd.f32 %v579, 1.0
      %v612 = vadd.f32 %v580, 1.0
      %v613 = vadd.f32 %v581, 1.0
      %v614 = vadd.f32 %v582, 1.0
      %v615 = vadd.f32 %v583, 1.0
      %v616 = vadd.f32 %v584, 1.0
      %v617 = vadd.f32 %v585, 1.0
      %v618 = vadd.f32 %v586, 1.0
      %v619 = vadd.f32 %v587, 1.0
      %v620 = vadd.f32 %v588, 1.0
      %v621 = vadd.f32 %v589, 1.0
      %v622 = vadd.f32 %v590, 1.0
      %v623 = vadd.f32 %v591, 1.0
      %v624 = vadd.f32 %v592, 1.0
      %v625 = vadd.f32 %v593, 1.0
      %v626 = vadd.f32 %v594, 1.0
      %v627 = vadd.f32 %v595, 1.0
      %v628 = vmul.f32 %v532, %v596
      %v629 = vmul.f32 %v533, %v597
      %v630 = vmul.f32 %v534, %v598
      %v631 = vmul.f32 %v535, %v599
      %v632 = vmul.f32 %v536, %v600
      %v633 = vmul.f32 %v537, %v601
      %v634 = vmul.f32 %v538, %v602
      %v635 = vmul.f32 %v539, %v603
      %v636 = vmul.f32 %v540, %v604
      %v637 = vmul.f32 %v541, %v605
      %v638 = vmul.f32 %v542, %v606
      %v639 = vmul.f32 %v543, %v607
      %v640 = vmul.f32 %v544, %v608
      %v641 = vmul.f32 %v545, %v609
      %v642 = vmul.f32 %v546, %v610
      %v643 = vmul.f32 %v547, %v611
      %v644 = vmul.f32 %v548, %v612
      %v645 = vmul.f32 %v549, %v613
      %v646 = vmul.f32 %v550, %v614
      %v647 = vmul.f32 %v551, %v615
      %v648 = vmul.f32 %v552, %v616
      %v649 = vmul.f32 %v553, %v617
      %v650 = vmul.f32 %v554, %v618
      %v651 = vmul.f32 %v555, %v619
      %v652 = vmul.f32 %v556, %v620
      %v653 = vmul.f32 %v557, %v621
      %v654 = vmul.f32 %v558, %v622
      %v655 = vmul.f32 %v559, %v623
      %v656 = vmul.f32 %v560, %v624
      %v657 = vmul.f32 %v561, %v625
      %v658 = vmul.f32 %v562, %v626
      %v659 = vmul.f32 %v563, %v627
      %v660 = vpack.c.bf16 %v629, %v628
      %v661 = vpack.c.bf16 %v631, %v630
      %v662 = vpack.c.bf16 %v633, %v632
      %v663 = vpack.c.bf16 %v635, %v634
      %v664 = vpack.c.bf16 %v637, %v636
      %v665 = vpack.c.bf16 %v639, %v638
      %v666 = vpack.c.bf16 %v641, %v640
      %v667 = vpack.c.bf16 %v643, %v642
      %v668 = vpack.c.bf16 %v645, %v644
      %v669 = vpack.c.bf16 %v647, %v646
      %v670 = vpack.c.bf16 %v649, %v648
      %v671 = vpack.c.bf16 %v651, %v650
      %v672 = vpack.c.bf16 %v653, %v652
      %v673 = vpack.c.bf16 %v655, %v654
      %v674 = vpack.c.bf16 %v657, %v656
      %v675 = vpack.c.bf16 %v659, %v658
      %v676 = vld [vmem:[%s3] sm:$0xff]
      %v677 = vld [vmem:[%s3 + $0x8] sm:$0xff]
      %v678 = vld [vmem:[%s3 + $0x10] sm:$0xff]
      %v679 = vld [vmem:[%s3 + $0x18] sm:$0xff]
      %v680 = vld [vmem:[%s3 + $0x20] sm:$0xff]
      %v681 = vld [vmem:[%s3 + $0x28] sm:$0xff]
      %v682 = vld [vmem:[%s3 + $0x30] sm:$0xff]
      %v683 = vld [vmem:[%s3 + $0x38] sm:$0xff]
      %v684 = vld [vmem:[%s3 + $0x40] sm:$0xff]
      %v685 = vld [vmem:[%s3 + $0x48] sm:$0xff]
      %v686 = vld [vmem:[%s3 + $0x50] sm:$0xff]
      %v687 = vld [vmem:[%s3 + $0x58] sm:$0xff]
      %v688 = vld [vmem:[%s3 + $0x60] sm:$0xff]
      %v689 = vld [vmem:[%s3 + $0x68] sm:$0xff]
      %v690 = vld [vmem:[%s3 + $0x70] sm:$0xff]
      %v691 = vld [vmem:[%s3 + $0x78] sm:$0xff]
      %v692 = vld [vmem:[%s3 + $0x80] sm:$0xff]
      %v693 = vld [vmem:[%s3 + $0x88] sm:$0xff]
      %v694 = vld [vmem:[%s3 + $0x90] sm:$0xff]
      %v695 = vld [vmem:[%s3 + $0x98] sm:$0xff]
      %v696 = vld [vmem:[%s4] sm:$0xff]
      %v697 = vld [vmem:[%s4 + $0x8] sm:$0x3]
      %v700 = vperm.slane %v696, 0
      %v701 = vperm.slane %v696, 1
      %v702 = vperm.slane %v696, 2
      %v703 = vperm.slane %v696, 3
      %v704 = vperm.slane %v696, 4
      %v705 = vperm.slane %v696, 5
      %v706 = vperm.slane %v696, 6
      %v707 = vperm.slane %v696, 7
      %v708 = vperm.slane %v697, 0
      %v709 = vperm.slane %v697, 1
      %v740 = vunpack.c.l.b16 %v676
      %v741 = vunpack.c.h.b16 %v676
      %v742 = vunpack.c.l.b16 %v677
      %v743 = vunpack.c.h.b16 %v677
      %v744 = vunpack.c.l.b16 %v678
      %v745 = vunpack.c.h.b16 %v678
      %v746 = vunpack.c.l.b16 %v679
      %v747 = vunpack.c.h.b16 %v679
      %v748 = vunpack.c.l.b16 %v680
      %v749 = vunpack.c.h.b16 %v680
      %v750 = vunpack.c.l.b16 %v681
      %v751 = vunpack.c.h.b16 %v681
      %v752 = vunpack.c.l.b16 %v682
      %v753 = vunpack.c.h.b16 %v682
      %v754 = vunpack.c.l.b16 %v683
      %v755 = vunpack.c.h.b16 %v683
      %v756 = vunpack.c.l.b16 %v684
      %v757 = vunpack.c.h.b16 %v684
      %v758 = vunpack.c.l.b16 %v685
      %v759 = vunpack.c.h.b16 %v685
      %v760 = vunpack.c.l.b16 %v686
      %v761 = vunpack.c.h.b16 %v686
      %v762 = vunpack.c.l.b16 %v687
      %v763 = vunpack.c.h.b16 %v687
      %v764 = vunpack.c.l.b16 %v688
      %v765 = vunpack.c.h.b16 %v688
      %v766 = vunpack.c.l.b16 %v689
      %v767 = vunpack.c.h.b16 %v689
      %v768 = vunpack.c.l.b16 %v690
      %v769 = vunpack.c.h.b16 %v690
      %v770 = vunpack.c.l.b16 %v691
      %v771 = vunpack.c.h.b16 %v691
      %v772 = vunpack.c.l.b16 %v692
      %v773 = vunpack.c.h.b16 %v692
      %v774 = vunpack.c.l.b16 %v693
      %v775 = vunpack.c.h.b16 %v693
      %v776 = vunpack.c.l.b16 %v694
      %v777 = vunpack.c.h.b16 %v694
      %v778 = vunpack.c.l.b16 %v695
      %v779 = vunpack.c.h.b16 %v695
      %v780 = vpack.c.b16 %v750, %v740
      %v781 = vpack.c.b16 %v751, %v741
      %v782 = vpack.c.b16 %v752, %v742
      %v783 = vpack.c.b16 %v753, %v743
      %v784 = vpack.c.b16 %v754, %v744
      %v785 = vpack.c.b16 %v755, %v745
      %v786 = vpack.c.b16 %v756, %v746
      %v787 = vpack.c.b16 %v757, %v747
      %v788 = vpack.c.b16 %v758, %v748
      %v789 = vpack.c.b16 %v759, %v749
      %v790 = vpack.c.b16 %v770, %v760
      %v791 = vpack.c.b16 %v771, %v761
      %v792 = vpack.c.b16 %v772, %v762
      %v793 = vpack.c.b16 %v773, %v763
      %v794 = vpack.c.b16 %v774, %v764
      %v795 = vpack.c.b16 %v775, %v765
      %v796 = vpack.c.b16 %v776, %v766
      %v797 = vpack.c.b16 %v777, %v767
      %v798 = vpack.c.b16 %v778, %v768
      %v799 = vpack.c.b16 %v779, %v769
      %v821 = vsel %vm394, %v660, 0
      %v824 = vsel %vm394, %v661, 0
      %v827 = vsel %vm394, %v662, 0
      %v830 = vsel %vm394, %v663, 0
      %v833 = vsel %vm394, %v664, 0
      %v836 = vsel %vm394, %v665, 0
      %v839 = vsel %vm394, %v666, 0
      %v842 = vsel %vm394, %v667, 0
      %v845 = vsel %vm394, %v668, 0
      %v848 = vsel %vm394, %v669, 0
      %v851 = vsel %vm394, %v670, 0
      %v854 = vsel %vm394, %v671, 0
      %v857 = vsel %vm394, %v672, 0
      %v860 = vsel %vm394, %v673, 0
      %v863 = vsel %vm394, %v674, 0
      %v866 = vsel %vm394, %v675, 0
      %868 = vmatpush.bf16.msra.mxu0 0
      %869 = vmatpush.bf16.msra.mxu0 0
      %870 = vmatpush.bf16.msra.mxu0 0
      %871 = vmatpush.bf16.msra.mxu0 0
      %872 = vmatpush.bf16.msra.mxu0 0
      %873 = vmatpush.bf16.msra.mxu0 0
      %874 = vmatpush.bf16.msra.mxu0 %v790
      %875 = vmatpush.bf16.msra.mxu0 %v780
      %876 = vmatmul.bf16.gmra.mxu0 %v821
      %v877 = vpop.f32.mrf.mxu0
      %v878 = vadd.f32 %v700, %v877
      %v879 = vpop.f32.mrf.mxu0
      %v880 = vadd.f32 %v700, %v879
      %881 = vmatmul.bf16.gmra.mxu0 %v824
      %v882 = vpop.f32.mrf.mxu0
      %v883 = vadd.f32 %v700, %v882
      %v884 = vpop.f32.mrf.mxu0
      %v885 = vadd.f32 %v700, %v884
      %886 = vmatmul.bf16.gmra.mxu0 %v827
      %v887 = vpop.f32.mrf.mxu0
      %v888 = vadd.f32 %v700, %v887
      %v889 = vpop.f32.mrf.mxu0
      %v890 = vadd.f32 %v700, %v889
      %891 = vmatmul.bf16.gmra.mxu0 %v830
      %v892 = vpop.f32.mrf.mxu0
      %v893 = vadd.f32 %v700, %v892
      %v894 = vpop.f32.mrf.mxu0
      %v895 = vadd.f32 %v700, %v894
      %896 = vmatmul.bf16.gmra.mxu0 %v833
      %v897 = vpop.f32.mrf.mxu0
      %v898 = vadd.f32 %v700, %v897
      %v899 = vpop.f32.mrf.mxu0
      %v900 = vadd.f32 %v700, %v899
      %901 = vmatmul.bf16.gmra.mxu0 %v836
      %v902 = vpop.f32.mrf.mxu0
      %v903 = vadd.f32 %v700, %v902
      %v904 = vpop.f32.mrf.mxu0
      %v905 = vadd.f32 %v700, %v904
      %906 = vmatmul.bf16.gmra.mxu0 %v839
      %v907 = vpop.f32.mrf.mxu0
      %v908 = vadd.f32 %v700, %v907
      %v909 = vpop.f32.mrf.mxu0
      %v910 = vadd.f32 %v700, %v909
      %911 = vmatmul.bf16.gmra.mxu0 %v842
      %v912 = vpop.f32.mrf.mxu0
      %v913 = vadd.f32 %v700, %v912
      %v914 = vpop.f32.mrf.mxu0
      %v915 = vadd.f32 %v700, %v914
      %916 = vmatmul.bf16.gmra.mxu0 %v845
      %v917 = vpop.f32.mrf.mxu0
      %v918 = vadd.f32 %v700, %v917
      %v919 = vpop.f32.mrf.mxu0
      %v920 = vadd.f32 %v700, %v919
      %921 = vmatmul.bf16.gmra.mxu0 %v848
      %v922 = vpop.f32.mrf.mxu0
      %v923 = vadd.f32 %v700, %v922
      %v924 = vpop.f32.mrf.mxu0
      %v925 = vadd.f32 %v700, %v924
      %926 = vmatmul.bf16.gmra.mxu0 %v851
      %v927 = vpop.f32.mrf.mxu0
      %v928 = vadd.f32 %v700, %v927
      %v929 = vpop.f32.mrf.mxu0
      %v930 = vadd.f32 %v700, %v929
      %931 = vmatmul.bf16.gmra.mxu0 %v854
      %v932 = vpop.f32.mrf.mxu0
      %v933 = vadd.f32 %v700, %v932
      %v934 = vpop.f32.mrf.mxu0
      %v935 = vadd.f32 %v700, %v934
      %936 = vmatmul.bf16.gmra.mxu0 %v857
      %v937 = vpop.f32.mrf.mxu0
      %v938 = vadd.f32 %v700, %v937
      %v939 = vpop.f32.mrf.mxu0
      %v940 = vadd.f32 %v700, %v939
      %941 = vmatmul.bf16.gmra.mxu0 %v860
      %v942 = vpop.f32.mrf.mxu0
      %v943 = vadd.f32 %v700, %v942
      %v944 = vpop.f32.mrf.mxu0
      %v945 = vadd.f32 %v700, %v944
      %946 = vmatmul.bf16.gmra.mxu0 %v863
      %v947 = vpop.f32.mrf.mxu0
      %v948 = vadd.f32 %v700, %v947
      %v949 = vpop.f32.mrf.mxu0
      %v950 = vadd.f32 %v700, %v949
      %951 = vmatmul.bf16.gmra.mxu0 %v866
      %v952 = vpop.f32.mrf.mxu0
      %v953 = vadd.f32 %v700, %v952
      %v954 = vpop.f32.mrf.mxu0
      %v955 = vadd.f32 %v700, %v954
      %956 = vdwg.mxu0
      %957 = vmatpush.bf16.msra.mxu0 0
      %958 = vmatpush.bf16.msra.mxu0 0
      %959 = vmatpush.bf16.msra.mxu0 0
      %960 = vmatpush.bf16.msra.mxu0 0
      %961 = vmatpush.bf16.msra.mxu0 0
      %962 = vmatpush.bf16.msra.mxu0 0
      %963 = vmatpush.bf16.msra.mxu0 %v791
      %964 = vmatpush.bf16.msra.mxu0 %v781
      %965 = vmatmul.bf16.gmra.mxu0 %v821
      %v966 = vpop.f32.mrf.mxu0
      %v967 = vadd.f32 %v701, %v966
      %v968 = vpop.f32.mrf.mxu0
      %v969 = vadd.f32 %v701, %v968
      %970 = vmatmul.bf16.gmra.mxu0 %v824
      %v971 = vpop.f32.mrf.mxu0
      %v972 = vadd.f32 %v701, %v971
      %v973 = vpop.f32.mrf.mxu0
      %v974 = vadd.f32 %v701, %v973
      %975 = vmatmul.bf16.gmra.mxu0 %v827
      %v976 = vpop.f32.mrf.mxu0
      %v977 = vadd.f32 %v701, %v976
      %v978 = vpop.f32.mrf.mxu0
      %v979 = vadd.f32 %v701, %v978
      %980 = vmatmul.bf16.gmra.mxu0 %v830
      %v981 = vpop.f32.mrf.mxu0
      %v982 = vadd.f32 %v701, %v981
      %v983 = vpop.f32.mrf.mxu0
      %v984 = vadd.f32 %v701, %v983
      %985 = vmatmul.bf16.gmra.mxu0 %v833
      %v986 = vpop.f32.mrf.mxu0
      %v987 = vadd.f32 %v701, %v986
      %v988 = vpop.f32.mrf.mxu0
      %v989 = vadd.f32 %v701, %v988
      %990 = vmatmul.bf16.gmra.mxu0 %v836
      %v991 = vpop.f32.mrf.mxu0
      %v992 = vadd.f32 %v701, %v991
      %v993 = vpop.f32.mrf.mxu0
      %v994 = vadd.f32 %v701, %v993
      %995 = vmatmul.bf16.gmra.mxu0 %v839
      %v996 = vpop.f32.mrf.mxu0
      %v997 = vadd.f32 %v701, %v996
      %v998 = vpop.f32.mrf.mxu0
      %v999 = vadd.f32 %v701, %v998
      %1000 = vmatmul.bf16.gmra.mxu0 %v842
      %v1001 = vpop.f32.mrf.mxu0
      %v1002 = vadd.f32 %v701, %v1001
      %v1003 = vpop.f32.mrf.mxu0
      %v1004 = vadd.f32 %v701, %v1003
      %1005 = vmatmul.bf16.gmra.mxu0 %v845
      %v1006 = vpop.f32.mrf.mxu0
      %v1007 = vadd.f32 %v701, %v1006
      %v1008 = vpop.f32.mrf.mxu0
      %v1009 = vadd.f32 %v701, %v1008
      %1010 = vmatmul.bf16.gmra.mxu0 %v848
      %v1011 = vpop.f32.mrf.mxu0
      %v1012 = vadd.f32 %v701, %v1011
      %v1013 = vpop.f32.mrf.mxu0
      %v1014 = vadd.f32 %v701, %v1013
      %1015 = vmatmul.bf16.gmra.mxu0 %v851
      %v1016 = vpop.f32.mrf.mxu0
      %v1017 = vadd.f32 %v701, %v1016
      %v1018 = vpop.f32.mrf.mxu0
      %v1019 = vadd.f32 %v701, %v1018
      %1020 = vmatmul.bf16.gmra.mxu0 %v854
      %v1021 = vpop.f32.mrf.mxu0
      %v1022 = vadd.f32 %v701, %v1021
      %v1023 = vpop.f32.mrf.mxu0
      %v1024 = vadd.f32 %v701, %v1023
      %1025 = vmatmul.bf16.gmra.mxu0 %v857
      %v1026 = vpop.f32.mrf.mxu0
      %v1027 = vadd.f32 %v701, %v1026
      %v1028 = vpop.f32.mrf.mxu0
      %v1029 = vadd.f32 %v701, %v1028
      %1030 = vmatmul.bf16.gmra.mxu0 %v860
      %v1031 = vpop.f32.mrf.mxu0
      %v1032 = vadd.f32 %v701, %v1031
      %v1033 = vpop.f32.mrf.mxu0
      %v1034 = vadd.f32 %v701, %v1033
      %1035 = vmatmul.bf16.gmra.mxu0 %v863
      %v1036 = vpop.f32.mrf.mxu0
      %v1037 = vadd.f32 %v701, %v1036
      %v1038 = vpop.f32.mrf.mxu0
      %v1039 = vadd.f32 %v701, %v1038
      %1040 = vmatmul.bf16.gmra.mxu0 %v866
      %v1041 = vpop.f32.mrf.mxu0
      %v1042 = vadd.f32 %v701, %v1041
      %v1043 = vpop.f32.mrf.mxu0
      %v1044 = vadd.f32 %v701, %v1043
      %1045 = vdwg.mxu0
      %1046 = vmatpush.bf16.msra.mxu0 0
      %1047 = vmatpush.bf16.msra.mxu0 0
      %1048 = vmatpush.bf16.msra.mxu0 0
      %1049 = vmatpush.bf16.msra.mxu0 0
      %1050 = vmatpush.bf16.msra.mxu0 0
      %1051 = vmatpush.bf16.msra.mxu0 0
      %1052 = vmatpush.bf16.msra.mxu0 %v792
      %1053 = vmatpush.bf16.msra.mxu0 %v782
      %1054 = vmatmul.bf16.gmra.mxu0 %v821
      %v1055 = vpop.f32.mrf.mxu0
      %v1056 = vadd.f32 %v702, %v1055
      %v1057 = vpop.f32.mrf.mxu0
      %v1058 = vadd.f32 %v702, %v1057
      %1059 = vmatmul.bf16.gmra.mxu0 %v824
      %v1060 = vpop.f32.mrf.mxu0
      %v1061 = vadd.f32 %v702, %v1060
      %v1062 = vpop.f32.mrf.mxu0
      %v1063 = vadd.f32 %v702, %v1062
      %1064 = vmatmul.bf16.gmra.mxu0 %v827
      %v1065 = vpop.f32.mrf.mxu0
      %v1066 = vadd.f32 %v702, %v1065
      %v1067 = vpop.f32.mrf.mxu0
      %v1068 = vadd.f32 %v702, %v1067
      %1069 = vmatmul.bf16.gmra.mxu0 %v830
      %v1070 = vpop.f32.mrf.mxu0
      %v1071 = vadd.f32 %v702, %v1070
      %v1072 = vpop.f32.mrf.mxu0
      %v1073 = vadd.f32 %v702, %v1072
      %1074 = vmatmul.bf16.gmra.mxu0 %v833
      %v1075 = vpop.f32.mrf.mxu0
      %v1076 = vadd.f32 %v702, %v1075
      %v1077 = vpop.f32.mrf.mxu0
      %v1078 = vadd.f32 %v702, %v1077
      %1079 = vmatmul.bf16.gmra.mxu0 %v836
      %v1080 = vpop.f32.mrf.mxu0
      %v1081 = vadd.f32 %v702, %v1080
      %v1082 = vpop.f32.mrf.mxu0
      %v1083 = vadd.f32 %v702, %v1082
      %1084 = vmatmul.bf16.gmra.mxu0 %v839
      %v1085 = vpop.f32.mrf.mxu0
      %v1086 = vadd.f32 %v702, %v1085
      %v1087 = vpop.f32.mrf.mxu0
      %v1088 = vadd.f32 %v702, %v1087
      %1089 = vmatmul.bf16.gmra.mxu0 %v842
      %v1090 = vpop.f32.mrf.mxu0
      %v1091 = vadd.f32 %v702, %v1090
      %v1092 = vpop.f32.mrf.mxu0
      %v1093 = vadd.f32 %v702, %v1092
      %1094 = vmatmul.bf16.gmra.mxu0 %v845
      %v1095 = vpop.f32.mrf.mxu0
      %v1096 = vadd.f32 %v702, %v1095
      %v1097 = vpop.f32.mrf.mxu0
      %v1098 = vadd.f32 %v702, %v1097
      %1099 = vmatmul.bf16.gmra.mxu0 %v848
      %v1100 = vpop.f32.mrf.mxu0
      %v1101 = vadd.f32 %v702, %v1100
      %v1102 = vpop.f32.mrf.mxu0
      %v1103 = vadd.f32 %v702, %v1102
      %1104 = vmatmul.bf16.gmra.mxu0 %v851
      %v1105 = vpop.f32.mrf.mxu0
      %v1106 = vadd.f32 %v702, %v1105
      %v1107 = vpop.f32.mrf.mxu0
      %v1108 = vadd.f32 %v702, %v1107
      %1109 = vmatmul.bf16.gmra.mxu0 %v854
      %v1110 = vpop.f32.mrf.mxu0
      %v1111 = vadd.f32 %v702, %v1110
      %v1112 = vpop.f32.mrf.mxu0
      %v1113 = vadd.f32 %v702, %v1112
      %1114 = vmatmul.bf16.gmra.mxu0 %v857
      %v1115 = vpop.f32.mrf.mxu0
      %v1116 = vadd.f32 %v702, %v1115
      %v1117 = vpop.f32.mrf.mxu0
      %v1118 = vadd.f32 %v702, %v1117
      %1119 = vmatmul.bf16.gmra.mxu0 %v860
      %v1120 = vpop.f32.mrf.mxu0
      %v1121 = vadd.f32 %v702, %v1120
      %v1122 = vpop.f32.mrf.mxu0
      %v1123 = vadd.f32 %v702, %v1122
      %1124 = vmatmul.bf16.gmra.mxu0 %v863
      %v1125 = vpop.f32.mrf.mxu0
      %v1126 = vadd.f32 %v702, %v1125
      %v1127 = vpop.f32.mrf.mxu0
      %v1128 = vadd.f32 %v702, %v1127
      %1129 = vmatmul.bf16.gmra.mxu0 %v866
      %v1130 = vpop.f32.mrf.mxu0
      %v1131 = vadd.f32 %v702, %v1130
      %v1132 = vpop.f32.mrf.mxu0
      %v1133 = vadd.f32 %v702, %v1132
      %1134 = vdwg.mxu0
      %1135 = vmatpush.bf16.msra.mxu0 0
      %1136 = vmatpush.bf16.msra.mxu0 0
      %1137 = vmatpush.bf16.msra.mxu0 0
      %1138 = vmatpush.bf16.msra.mxu0 0
      %1139 = vmatpush.bf16.msra.mxu0 0
      %1140 = vmatpush.bf16.msra.mxu0 0
      %1141 = vmatpush.bf16.msra.mxu0 %v793
      %1142 = vmatpush.bf16.msra.mxu0 %v783
      %1143 = vmatmul.bf16.gmra.mxu0 %v821
      %v1144 = vpop.f32.mrf.mxu0
      %v1145 = vadd.f32 %v703, %v1144
      %v1146 = vpop.f32.mrf.mxu0
      %v1147 = vadd.f32 %v703, %v1146
      %1148 = vmatmul.bf16.gmra.mxu0 %v824
      %v1149 = vpop.f32.mrf.mxu0
      %v1150 = vadd.f32 %v703, %v1149
      %v1151 = vpop.f32.mrf.mxu0
      %v1152 = vadd.f32 %v703, %v1151
      %1153 = vmatmul.bf16.gmra.mxu0 %v827
      %v1154 = vpop.f32.mrf.mxu0
      %v1155 = vadd.f32 %v703, %v1154
      %v1156 = vpop.f32.mrf.mxu0
      %v1157 = vadd.f32 %v703, %v1156
      %1158 = vmatmul.bf16.gmra.mxu0 %v830
      %v1159 = vpop.f32.mrf.mxu0
      %v1160 = vadd.f32 %v703, %v1159
      %v1161 = vpop.f32.mrf.mxu0
      %v1162 = vadd.f32 %v703, %v1161
      %1163 = vmatmul.bf16.gmra.mxu0 %v833
      %v1164 = vpop.f32.mrf.mxu0
      %v1165 = vadd.f32 %v703, %v1164
      %v1166 = vpop.f32.mrf.mxu0
      %v1167 = vadd.f32 %v703, %v1166
      %1168 = vmatmul.bf16.gmra.mxu0 %v836
      %v1169 = vpop.f32.mrf.mxu0
      %v1170 = vadd.f32 %v703, %v1169
      %v1171 = vpop.f32.mrf.mxu0
      %v1172 = vadd.f32 %v703, %v1171
      %1173 = vmatmul.bf16.gmra.mxu0 %v839
      %v1174 = vpop.f32.mrf.mxu0
      %v1175 = vadd.f32 %v703, %v1174
      %v1176 = vpop.f32.mrf.mxu0
      %v1177 = vadd.f32 %v703, %v1176
      %1178 = vmatmul.bf16.gmra.mxu0 %v842
      %v1179 = vpop.f32.mrf.mxu0
      %v1180 = vadd.f32 %v703, %v1179
      %v1181 = vpop.f32.mrf.mxu0
      %v1182 = vadd.f32 %v703, %v1181
      %1183 = vmatmul.bf16.gmra.mxu0 %v845
      %v1184 = vpop.f32.mrf.mxu0
      %v1185 = vadd.f32 %v703, %v1184
      %v1186 = vpop.f32.mrf.mxu0
      %v1187 = vadd.f32 %v703, %v1186
      %1188 = vmatmul.bf16.gmra.mxu0 %v848
      %v1189 = vpop.f32.mrf.mxu0
      %v1190 = vadd.f32 %v703, %v1189
      %v1191 = vpop.f32.mrf.mxu0
      %v1192 = vadd.f32 %v703, %v1191
      %1193 = vmatmul.bf16.gmra.mxu0 %v851
      %v1194 = vpop.f32.mrf.mxu0
      %v1195 = vadd.f32 %v703, %v1194
      %v1196 = vpop.f32.mrf.mxu0
      %v1197 = vadd.f32 %v703, %v1196
      %1198 = vmatmul.bf16.gmra.mxu0 %v854
      %v1199 = vpop.f32.mrf.mxu0
      %v1200 = vadd.f32 %v703, %v1199
      %v1201 = vpop.f32.mrf.mxu0
      %v1202 = vadd.f32 %v703, %v1201
      %1203 = vmatmul.bf16.gmra.mxu0 %v857
      %v1204 = vpop.f32.mrf.mxu0
      %v1205 = vadd.f32 %v703, %v1204
      %v1206 = vpop.f32.mrf.mxu0
      %v1207 = vadd.f32 %v703, %v1206
      %1208 = vmatmul.bf16.gmra.mxu0 %v860
      %v1209 = vpop.f32.mrf.mxu0
      %v1210 = vadd.f32 %v703, %v1209
      %v1211 = vpop.f32.mrf.mxu0
      %v1212 = vadd.f32 %v703, %v1211
      %1213 = vmatmul.bf16.gmra.mxu0 %v863
      %v1214 = vpop.f32.mrf.mxu0
      %v1215 = vadd.f32 %v703, %v1214
      %v1216 = vpop.f32.mrf.mxu0
      %v1217 = vadd.f32 %v703, %v1216
      %1218 = vmatmul.bf16.gmra.mxu0 %v866
      %v1219 = vpop.f32.mrf.mxu0
      %v1220 = vadd.f32 %v703, %v1219
      %v1221 = vpop.f32.mrf.mxu0
      %v1222 = vadd.f32 %v703, %v1221
      %1223 = vdwg.mxu0
      %1224 = vmatpush.bf16.msra.mxu0 0
      %1225 = vmatpush.bf16.msra.mxu0 0
      %1226 = vmatpush.bf16.msra.mxu0 0
      %1227 = vmatpush.bf16.msra.mxu0 0
      %1228 = vmatpush.bf16.msra.mxu0 0
      %1229 = vmatpush.bf16.msra.mxu0 0
      %1230 = vmatpush.bf16.msra.mxu0 %v794
      %1231 = vmatpush.bf16.msra.mxu0 %v784
      %1232 = vmatmul.bf16.gmra.mxu0 %v821
      %v1233 = vpop.f32.mrf.mxu0
      %v1234 = vadd.f32 %v704, %v1233
      %v1235 = vpop.f32.mrf.mxu0
      %v1236 = vadd.f32 %v704, %v1235
      %1237 = vmatmul.bf16.gmra.mxu0 %v824
      %v1238 = vpop.f32.mrf.mxu0
      %v1239 = vadd.f32 %v704, %v1238
      %v1240 = vpop.f32.mrf.mxu0
      %v1241 = vadd.f32 %v704, %v1240
      %1242 = vmatmul.bf16.gmra.mxu0 %v827
      %v1243 = vpop.f32.mrf.mxu0
      %v1244 = vadd.f32 %v704, %v1243
      %v1245 = vpop.f32.mrf.mxu0
      %v1246 = vadd.f32 %v704, %v1245
      %1247 = vmatmul.bf16.gmra.mxu0 %v830
      %v1248 = vpop.f32.mrf.mxu0
      %v1249 = vadd.f32 %v704, %v1248
      %v1250 = vpop.f32.mrf.mxu0
      %v1251 = vadd.f32 %v704, %v1250
      %1252 = vmatmul.bf16.gmra.mxu0 %v833
      %v1253 = vpop.f32.mrf.mxu0
      %v1254 = vadd.f32 %v704, %v1253
      %v1255 = vpop.f32.mrf.mxu0
      %v1256 = vadd.f32 %v704, %v1255
      %1257 = vmatmul.bf16.gmra.mxu0 %v836
      %v1258 = vpop.f32.mrf.mxu0
      %v1259 = vadd.f32 %v704, %v1258
      %v1260 = vpop.f32.mrf.mxu0
      %v1261 = vadd.f32 %v704, %v1260
      %1262 = vmatmul.bf16.gmra.mxu0 %v839
      %v1263 = vpop.f32.mrf.mxu0
      %v1264 = vadd.f32 %v704, %v1263
      %v1265 = vpop.f32.mrf.mxu0
      %v1266 = vadd.f32 %v704, %v1265
      %1267 = vmatmul.bf16.gmra.mxu0 %v842
      %v1268 = vpop.f32.mrf.mxu0
      %v1269 = vadd.f32 %v704, %v1268
      %v1270 = vpop.f32.mrf.mxu0
      %v1271 = vadd.f32 %v704, %v1270
      %1272 = vmatmul.bf16.gmra.mxu0 %v845
      %v1273 = vpop.f32.mrf.mxu0
      %v1274 = vadd.f32 %v704, %v1273
      %v1275 = vpop.f32.mrf.mxu0
      %v1276 = vadd.f32 %v704, %v1275
      %1277 = vmatmul.bf16.gmra.mxu0 %v848
      %v1278 = vpop.f32.mrf.mxu0
      %v1279 = vadd.f32 %v704, %v1278
      %v1280 = vpop.f32.mrf.mxu0
      %v1281 = vadd.f32 %v704, %v1280
      %1282 = vmatmul.bf16.gmra.mxu0 %v851
      %v1283 = vpop.f32.mrf.mxu0
      %v1284 = vadd.f32 %v704, %v1283
      %v1285 = vpop.f32.mrf.mxu0
      %v1286 = vadd.f32 %v704, %v1285
      %1287 = vmatmul.bf16.gmra.mxu0 %v854
      %v1288 = vpop.f32.mrf.mxu0
      %v1289 = vadd.f32 %v704, %v1288
      %v1290 = vpop.f32.mrf.mxu0
      %v1291 = vadd.f32 %v704, %v1290
      %1292 = vmatmul.bf16.gmra.mxu0 %v857
      %v1293 = vpop.f32.mrf.mxu0
      %v1294 = vadd.f32 %v704, %v1293
      %v1295 = vpop.f32.mrf.mxu0
      %v1296 = vadd.f32 %v704, %v1295
      %1297 = vmatmul.bf16.gmra.mxu0 %v860
      %v1298 = vpop.f32.mrf.mxu0
      %v1299 = vadd.f32 %v704, %v1298
      %v1300 = vpop.f32.mrf.mxu0
      %v1301 = vadd.f32 %v704, %v1300
      %1302 = vmatmul.bf16.gmra.mxu0 %v863
      %v1303 = vpop.f32.mrf.mxu0
      %v1304 = vadd.f32 %v704, %v1303
      %v1305 = vpop.f32.mrf.mxu0
      %v1306 = vadd.f32 %v704, %v1305
      %1307 = vmatmul.bf16.gmra.mxu0 %v866
      %v1308 = vpop.f32.mrf.mxu0
      %v1309 = vadd.f32 %v704, %v1308
      %v1310 = vpop.f32.mrf.mxu0
      %v1311 = vadd.f32 %v704, %v1310
      %1312 = vdwg.mxu0
      %1313 = vmatpush.bf16.msra.mxu0 0
      %1314 = vmatpush.bf16.msra.mxu0 0
      %1315 = vmatpush.bf16.msra.mxu0 0
      %1316 = vmatpush.bf16.msra.mxu0 0
      %1317 = vmatpush.bf16.msra.mxu0 0
      %1318 = vmatpush.bf16.msra.mxu0 0
      %1319 = vmatpush.bf16.msra.mxu0 %v795
      %1320 = vmatpush.bf16.msra.mxu0 %v785
      %1321 = vmatmul.bf16.gmra.mxu0 %v821
      %v1322 = vpop.f32.mrf.mxu0
      %v1323 = vadd.f32 %v705, %v1322
      %v1324 = vpop.f32.mrf.mxu0
      %v1325 = vadd.f32 %v705, %v1324
      %1326 = vmatmul.bf16.gmra.mxu0 %v824
      %v1327 = vpop.f32.mrf.mxu0
      %v1328 = vadd.f32 %v705, %v1327
      %v1329 = vpop.f32.mrf.mxu0
      %v1330 = vadd.f32 %v705, %v1329
      %1331 = vmatmul.bf16.gmra.mxu0 %v827
      %v1332 = vpop.f32.mrf.mxu0
      %v1333 = vadd.f32 %v705, %v1332
      %v1334 = vpop.f32.mrf.mxu0
      %v1335 = vadd.f32 %v705, %v1334
      %1336 = vmatmul.bf16.gmra.mxu0 %v830
      %v1337 = vpop.f32.mrf.mxu0
      %v1338 = vadd.f32 %v705, %v1337
      %v1339 = vpop.f32.mrf.mxu0
      %v1340 = vadd.f32 %v705, %v1339
      %1341 = vmatmul.bf16.gmra.mxu0 %v833
      %v1342 = vpop.f32.mrf.mxu0
      %v1343 = vadd.f32 %v705, %v1342
      %v1344 = vpop.f32.mrf.mxu0
      %v1345 = vadd.f32 %v705, %v1344
      %1346 = vmatmul.bf16.gmra.mxu0 %v836
      %v1347 = vpop.f32.mrf.mxu0
      %v1348 = vadd.f32 %v705, %v1347
      %v1349 = vpop.f32.mrf.mxu0
      %v1350 = vadd.f32 %v705, %v1349
      %1351 = vmatmul.bf16.gmra.mxu0 %v839
      %v1352 = vpop.f32.mrf.mxu0
      %v1353 = vadd.f32 %v705, %v1352
      %v1354 = vpop.f32.mrf.mxu0
      %v1355 = vadd.f32 %v705, %v1354
      %1356 = vmatmul.bf16.gmra.mxu0 %v842
      %v1357 = vpop.f32.mrf.mxu0
      %v1358 = vadd.f32 %v705, %v1357
      %v1359 = vpop.f32.mrf.mxu0
      %v1360 = vadd.f32 %v705, %v1359
      %1361 = vmatmul.bf16.gmra.mxu0 %v845
      %v1362 = vpop.f32.mrf.mxu0
      %v1363 = vadd.f32 %v705, %v1362
      %v1364 = vpop.f32.mrf.mxu0
      %v1365 = vadd.f32 %v705, %v1364
      %1366 = vmatmul.bf16.gmra.mxu0 %v848
      %v1367 = vpop.f32.mrf.mxu0
      %v1368 = vadd.f32 %v705, %v1367
      %v1369 = vpop.f32.mrf.mxu0
      %v1370 = vadd.f32 %v705, %v1369
      %1371 = vmatmul.bf16.gmra.mxu0 %v851
      %v1372 = vpop.f32.mrf.mxu0
      %v1373 = vadd.f32 %v705, %v1372
      %v1374 = vpop.f32.mrf.mxu0
      %v1375 = vadd.f32 %v705, %v1374
      %1376 = vmatmul.bf16.gmra.mxu0 %v854
      %v1377 = vpop.f32.mrf.mxu0
      %v1378 = vadd.f32 %v705, %v1377
      %v1379 = vpop.f32.mrf.mxu0
      %v1380 = vadd.f32 %v705, %v1379
      %1381 = vmatmul.bf16.gmra.mxu0 %v857
      %v1382 = vpop.f32.mrf.mxu0
      %v1383 = vadd.f32 %v705, %v1382
      %v1384 = vpop.f32.mrf.mxu0
      %v1385 = vadd.f32 %v705, %v1384
      %1386 = vmatmul.bf16.gmra.mxu0 %v860
      %v1387 = vpop.f32.mrf.mxu0
      %v1388 = vadd.f32 %v705, %v1387
      %v1389 = vpop.f32.mrf.mxu0
      %v1390 = vadd.f32 %v705, %v1389
      %1391 = vmatmul.bf16.gmra.mxu0 %v863
      %v1392 = vpop.f32.mrf.mxu0
      %v1393 = vadd.f32 %v705, %v1392
      %v1394 = vpop.f32.mrf.mxu0
      %v1395 = vadd.f32 %v705, %v1394
      %1396 = vmatmul.bf16.gmra.mxu0 %v866
      %v1397 = vpop.f32.mrf.mxu0
      %v1398 = vadd.f32 %v705, %v1397
      %v1399 = vpop.f32.mrf.mxu0
      %v1400 = vadd.f32 %v705, %v1399
      %1401 = vdwg.mxu0
      %1402 = vmatpush.bf16.msra.mxu0 0
      %1403 = vmatpush.bf16.msra.mxu0 0
      %1404 = vmatpush.bf16.msra.mxu0 0
      %1405 = vmatpush.bf16.msra.mxu0 0
      %1406 = vmatpush.bf16.msra.mxu0 0
      %1407 = vmatpush.bf16.msra.mxu0 0
      %1408 = vmatpush.bf16.msra.mxu0 %v796
      %1409 = vmatpush.bf16.msra.mxu0 %v786
      %1410 = vmatmul.bf16.gmra.mxu0 %v821
      %v1411 = vpop.f32.mrf.mxu0
      %v1412 = vadd.f32 %v706, %v1411
      %v1413 = vpop.f32.mrf.mxu0
      %v1414 = vadd.f32 %v706, %v1413
      %1415 = vmatmul.bf16.gmra.mxu0 %v824
      %v1416 = vpop.f32.mrf.mxu0
      %v1417 = vadd.f32 %v706, %v1416
      %v1418 = vpop.f32.mrf.mxu0
      %v1419 = vadd.f32 %v706, %v1418
      %1420 = vmatmul.bf16.gmra.mxu0 %v827
      %v1421 = vpop.f32.mrf.mxu0
      %v1422 = vadd.f32 %v706, %v1421
      %v1423 = vpop.f32.mrf.mxu0
      %v1424 = vadd.f32 %v706, %v1423
      %1425 = vmatmul.bf16.gmra.mxu0 %v830
      %v1426 = vpop.f32.mrf.mxu0
      %v1427 = vadd.f32 %v706, %v1426
      %v1428 = vpop.f32.mrf.mxu0
      %v1429 = vadd.f32 %v706, %v1428
      %1430 = vmatmul.bf16.gmra.mxu0 %v833
      %v1431 = vpop.f32.mrf.mxu0
      %v1432 = vadd.f32 %v706, %v1431
      %v1433 = vpop.f32.mrf.mxu0
      %v1434 = vadd.f32 %v706, %v1433
      %1435 = vmatmul.bf16.gmra.mxu0 %v836
      %v1436 = vpop.f32.mrf.mxu0
      %v1437 = vadd.f32 %v706, %v1436
      %v1438 = vpop.f32.mrf.mxu0
      %v1439 = vadd.f32 %v706, %v1438
      %1440 = vmatmul.bf16.gmra.mxu0 %v839
      %v1441 = vpop.f32.mrf.mxu0
      %v1442 = vadd.f32 %v706, %v1441
      %v1443 = vpop.f32.mrf.mxu0
      %v1444 = vadd.f32 %v706, %v1443
      %1445 = vmatmul.bf16.gmra.mxu0 %v842
      %v1446 = vpop.f32.mrf.mxu0
      %v1447 = vadd.f32 %v706, %v1446
      %v1448 = vpop.f32.mrf.mxu0
      %v1449 = vadd.f32 %v706, %v1448
      %1450 = vmatmul.bf16.gmra.mxu0 %v845
      %v1451 = vpop.f32.mrf.mxu0
      %v1452 = vadd.f32 %v706, %v1451
      %v1453 = vpop.f32.mrf.mxu0
      %v1454 = vadd.f32 %v706, %v1453
      %1455 = vmatmul.bf16.gmra.mxu0 %v848
      %v1456 = vpop.f32.mrf.mxu0
      %v1457 = vadd.f32 %v706, %v1456
      %v1458 = vpop.f32.mrf.mxu0
      %v1459 = vadd.f32 %v706, %v1458
      %1460 = vmatmul.bf16.gmra.mxu0 %v851
      %v1461 = vpop.f32.mrf.mxu0
      %v1462 = vadd.f32 %v706, %v1461
      %v1463 = vpop.f32.mrf.mxu0
      %v1464 = vadd.f32 %v706, %v1463
      %1465 = vmatmul.bf16.gmra.mxu0 %v854
      %v1466 = vpop.f32.mrf.mxu0
      %v1467 = vadd.f32 %v706, %v1466
      %v1468 = vpop.f32.mrf.mxu0
      %v1469 = vadd.f32 %v706, %v1468
      %1470 = vmatmul.bf16.gmra.mxu0 %v857
      %v1471 = vpop.f32.mrf.mxu0
      %v1472 = vadd.f32 %v706, %v1471
      %v1473 = vpop.f32.mrf.mxu0
      %v1474 = vadd.f32 %v706, %v1473
      %1475 = vmatmul.bf16.gmra.mxu0 %v860
      %v1476 = vpop.f32.mrf.mxu0
      %v1477 = vadd.f32 %v706, %v1476
      %v1478 = vpop.f32.mrf.mxu0
      %v1479 = vadd.f32 %v706, %v1478
      %1480 = vmatmul.bf16.gmra.mxu0 %v863
      %v1481 = vpop.f32.mrf.mxu0
      %v1482 = vadd.f32 %v706, %v1481
      %v1483 = vpop.f32.mrf.mxu0
      %v1484 = vadd.f32 %v706, %v1483
      %1485 = vmatmul.bf16.gmra.mxu0 %v866
      %v1486 = vpop.f32.mrf.mxu0
      %v1487 = vadd.f32 %v706, %v1486
      %v1488 = vpop.f32.mrf.mxu0
      %v1489 = vadd.f32 %v706, %v1488
      %1490 = vdwg.mxu0
      %1491 = vmatpush.bf16.msra.mxu0 0
      %1492 = vmatpush.bf16.msra.mxu0 0
      %1493 = vmatpush.bf16.msra.mxu0 0
      %1494 = vmatpush.bf16.msra.mxu0 0
      %1495 = vmatpush.bf16.msra.mxu0 0
      %1496 = vmatpush.bf16.msra.mxu0 0
      %1497 = vmatpush.bf16.msra.mxu0 %v797
      %1498 = vmatpush.bf16.msra.mxu0 %v787
      %1499 = vmatmul.bf16.gmra.mxu0 %v821
      %v1500 = vpop.f32.mrf.mxu0
      %v1501 = vadd.f32 %v707, %v1500
      %v1502 = vpop.f32.mrf.mxu0
      %v1503 = vadd.f32 %v707, %v1502
      %1504 = vmatmul.bf16.gmra.mxu0 %v824
      %v1505 = vpop.f32.mrf.mxu0
      %v1506 = vadd.f32 %v707, %v1505
      %v1507 = vpop.f32.mrf.mxu0
      %v1508 = vadd.f32 %v707, %v1507
      %1509 = vmatmul.bf16.gmra.mxu0 %v827
      %v1510 = vpop.f32.mrf.mxu0
      %v1511 = vadd.f32 %v707, %v1510
      %v1512 = vpop.f32.mrf.mxu0
      %v1513 = vadd.f32 %v707, %v1512
      %1514 = vmatmul.bf16.gmra.mxu0 %v830
      %v1515 = vpop.f32.mrf.mxu0
      %v1516 = vadd.f32 %v707, %v1515
      %v1517 = vpop.f32.mrf.mxu0
      %v1518 = vadd.f32 %v707, %v1517
      %1519 = vmatmul.bf16.gmra.mxu0 %v833
      %v1520 = vpop.f32.mrf.mxu0
      %v1521 = vadd.f32 %v707, %v1520
      %v1522 = vpop.f32.mrf.mxu0
      %v1523 = vadd.f32 %v707, %v1522
      %1524 = vmatmul.bf16.gmra.mxu0 %v836
      %v1525 = vpop.f32.mrf.mxu0
      %v1526 = vadd.f32 %v707, %v1525
      %v1527 = vpop.f32.mrf.mxu0
      %v1528 = vadd.f32 %v707, %v1527
      %1529 = vmatmul.bf16.gmra.mxu0 %v839
      %v1530 = vpop.f32.mrf.mxu0
      %v1531 = vadd.f32 %v707, %v1530
      %v1532 = vpop.f32.mrf.mxu0
      %v1533 = vadd.f32 %v707, %v1532
      %1534 = vmatmul.bf16.gmra.mxu0 %v842
      %v1535 = vpop.f32.mrf.mxu0
      %v1536 = vadd.f32 %v707, %v1535
      %v1537 = vpop.f32.mrf.mxu0
      %v1538 = vadd.f32 %v707, %v1537
      %1539 = vmatmul.bf16.gmra.mxu0 %v845
      %v1540 = vpop.f32.mrf.mxu0
      %v1541 = vadd.f32 %v707, %v1540
      %v1542 = vpop.f32.mrf.mxu0
      %v1543 = vadd.f32 %v707, %v1542
      %1544 = vmatmul.bf16.gmra.mxu0 %v848
      %v1545 = vpop.f32.mrf.mxu0
      %v1546 = vadd.f32 %v707, %v1545
      %v1547 = vpop.f32.mrf.mxu0
      %v1548 = vadd.f32 %v707, %v1547
      %1549 = vmatmul.bf16.gmra.mxu0 %v851
      %v1550 = vpop.f32.mrf.mxu0
      %v1551 = vadd.f32 %v707, %v1550
      %v1552 = vpop.f32.mrf.mxu0
      %v1553 = vadd.f32 %v707, %v1552
      %1554 = vmatmul.bf16.gmra.mxu0 %v854
      %v1555 = vpop.f32.mrf.mxu0
      %v1556 = vadd.f32 %v707, %v1555
      %v1557 = vpop.f32.mrf.mxu0
      %v1558 = vadd.f32 %v707, %v1557
      %1559 = vmatmul.bf16.gmra.mxu0 %v857
      %v1560 = vpop.f32.mrf.mxu0
      %v1561 = vadd.f32 %v707, %v1560
      %v1562 = vpop.f32.mrf.mxu0
      %v1563 = vadd.f32 %v707, %v1562
      %1564 = vmatmul.bf16.gmra.mxu0 %v860
      %v1565 = vpop.f32.mrf.mxu0
      %v1566 = vadd.f32 %v707, %v1565
      %v1567 = vpop.f32.mrf.mxu0
      %v1568 = vadd.f32 %v707, %v1567
      %1569 = vmatmul.bf16.gmra.mxu0 %v863
      %v1570 = vpop.f32.mrf.mxu0
      %v1571 = vadd.f32 %v707, %v1570
      %v1572 = vpop.f32.mrf.mxu0
      %v1573 = vadd.f32 %v707, %v1572
      %1574 = vmatmul.bf16.gmra.mxu0 %v866
      %v1575 = vpop.f32.mrf.mxu0
      %v1576 = vadd.f32 %v707, %v1575
      %v1577 = vpop.f32.mrf.mxu0
      %v1578 = vadd.f32 %v707, %v1577
      %1579 = vdwg.mxu0
      %1580 = vmatpush.bf16.msra.mxu0 0
      %1581 = vmatpush.bf16.msra.mxu0 0
      %1582 = vmatpush.bf16.msra.mxu0 0
      %1583 = vmatpush.bf16.msra.mxu0 0
      %1584 = vmatpush.bf16.msra.mxu0 0
      %1585 = vmatpush.bf16.msra.mxu0 0
      %1586 = vmatpush.bf16.msra.mxu0 %v798
      %1587 = vmatpush.bf16.msra.mxu0 %v788
      %1588 = vmatmul.bf16.gmra.mxu0 %v821
      %v1589 = vpop.f32.mrf.mxu0
      %v1590 = vadd.f32 %v708, %v1589
      %v1591 = vpop.f32.mrf.mxu0
      %v1592 = vadd.f32 %v708, %v1591
      %1593 = vmatmul.bf16.gmra.mxu0 %v824
      %v1594 = vpop.f32.mrf.mxu0
      %v1595 = vadd.f32 %v708, %v1594
      %v1596 = vpop.f32.mrf.mxu0
      %v1597 = vadd.f32 %v708, %v1596
      %1598 = vmatmul.bf16.gmra.mxu0 %v827
      %v1599 = vpop.f32.mrf.mxu0
      %v1600 = vadd.f32 %v708, %v1599
      %v1601 = vpop.f32.mrf.mxu0
      %v1602 = vadd.f32 %v708, %v1601
      %1603 = vmatmul.bf16.gmra.mxu0 %v830
      %v1604 = vpop.f32.mrf.mxu0
      %v1605 = vadd.f32 %v708, %v1604
      %v1606 = vpop.f32.mrf.mxu0
      %v1607 = vadd.f32 %v708, %v1606
      %1608 = vmatmul.bf16.gmra.mxu0 %v833
      %v1609 = vpop.f32.mrf.mxu0
      %v1610 = vadd.f32 %v708, %v1609
      %v1611 = vpop.f32.mrf.mxu0
      %v1612 = vadd.f32 %v708, %v1611
      %1613 = vmatmul.bf16.gmra.mxu0 %v836
      %v1614 = vpop.f32.mrf.mxu0
      %v1615 = vadd.f32 %v708, %v1614
      %v1616 = vpop.f32.mrf.mxu0
      %v1617 = vadd.f32 %v708, %v1616
      %1618 = vmatmul.bf16.gmra.mxu0 %v839
      %v1619 = vpop.f32.mrf.mxu0
      %v1620 = vadd.f32 %v708, %v1619
      %v1621 = vpop.f32.mrf.mxu0
      %v1622 = vadd.f32 %v708, %v1621
      %1623 = vmatmul.bf16.gmra.mxu0 %v842
      %v1624 = vpop.f32.mrf.mxu0
      %v1625 = vadd.f32 %v708, %v1624
      %v1626 = vpop.f32.mrf.mxu0
      %v1627 = vadd.f32 %v708, %v1626
      %1628 = vmatmul.bf16.gmra.mxu0 %v845
      %v1629 = vpop.f32.mrf.mxu0
      %v1630 = vadd.f32 %v708, %v1629
      %v1631 = vpop.f32.mrf.mxu0
      %v1632 = vadd.f32 %v708, %v1631
      %1633 = vmatmul.bf16.gmra.mxu0 %v848
      %v1634 = vpop.f32.mrf.mxu0
      %v1635 = vadd.f32 %v708, %v1634
      %v1636 = vpop.f32.mrf.mxu0
      %v1637 = vadd.f32 %v708, %v1636
      %1638 = vmatmul.bf16.gmra.mxu0 %v851
      %v1639 = vpop.f32.mrf.mxu0
      %v1640 = vadd.f32 %v708, %v1639
      %v1641 = vpop.f32.mrf.mxu0
      %v1642 = vadd.f32 %v708, %v1641
      %1643 = vmatmul.bf16.gmra.mxu0 %v854
      %v1644 = vpop.f32.mrf.mxu0
      %v1645 = vadd.f32 %v708, %v1644
      %v1646 = vpop.f32.mrf.mxu0
      %v1647 = vadd.f32 %v708, %v1646
      %1648 = vmatmul.bf16.gmra.mxu0 %v857
      %v1649 = vpop.f32.mrf.mxu0
      %v1650 = vadd.f32 %v708, %v1649
      %v1651 = vpop.f32.mrf.mxu0
      %v1652 = vadd.f32 %v708, %v1651
      %1653 = vmatmul.bf16.gmra.mxu0 %v860
      %v1654 = vpop.f32.mrf.mxu0
      %v1655 = vadd.f32 %v708, %v1654
      %v1656 = vpop.f32.mrf.mxu0
      %v1657 = vadd.f32 %v708, %v1656
      %1658 = vmatmul.bf16.gmra.mxu0 %v863
      %v1659 = vpop.f32.mrf.mxu0
      %v1660 = vadd.f32 %v708, %v1659
      %v1661 = vpop.f32.mrf.mxu0
      %v1662 = vadd.f32 %v708, %v1661
      %1663 = vmatmul.bf16.gmra.mxu0 %v866
      %v1664 = vpop.f32.mrf.mxu0
      %v1665 = vadd.f32 %v708, %v1664
      %v1666 = vpop.f32.mrf.mxu0
      %v1667 = vadd.f32 %v708, %v1666
      %1668 = vdwg.mxu0
      %1669 = vmatpush.bf16.msra.mxu0 0
      %1670 = vmatpush.bf16.msra.mxu0 0
      %1671 = vmatpush.bf16.msra.mxu0 0
      %1672 = vmatpush.bf16.msra.mxu0 0
      %1673 = vmatpush.bf16.msra.mxu0 0
      %1674 = vmatpush.bf16.msra.mxu0 0
      %1675 = vmatpush.bf16.msra.mxu0 %v799
      %1676 = vmatpush.bf16.msra.mxu0 %v789
      %1677 = vmatmul.bf16.gmra.mxu0 %v821
      %v1678 = vpop.f32.mrf.mxu0
      %v1679 = vadd.f32 %v709, %v1678
      %v1680 = vpop.f32.mrf.mxu0
      %v1681 = vadd.f32 %v709, %v1680
      %1682 = vmatmul.bf16.gmra.mxu0 %v824
      %v1683 = vpop.f32.mrf.mxu0
      %v1684 = vadd.f32 %v709, %v1683
      %v1685 = vpop.f32.mrf.mxu0
      %v1686 = vadd.f32 %v709, %v1685
      %1687 = vmatmul.bf16.gmra.mxu0 %v827
      %v1688 = vpop.f32.mrf.mxu0
      %v1689 = vadd.f32 %v709, %v1688
      %v1690 = vpop.f32.mrf.mxu0
      %v1691 = vadd.f32 %v709, %v1690
      %1692 = vmatmul.bf16.gmra.mxu0 %v830
      %v1693 = vpop.f32.mrf.mxu0
      %v1694 = vadd.f32 %v709, %v1693
      %v1695 = vpop.f32.mrf.mxu0
      %v1696 = vadd.f32 %v709, %v1695
      %1697 = vmatmul.bf16.gmra.mxu0 %v833
      %v1698 = vpop.f32.mrf.mxu0
      %v1699 = vadd.f32 %v709, %v1698
      %v1700 = vpop.f32.mrf.mxu0
      %v1701 = vadd.f32 %v709, %v1700
      %1702 = vmatmul.bf16.gmra.mxu0 %v836
      %v1703 = vpop.f32.mrf.mxu0
      %v1704 = vadd.f32 %v709, %v1703
      %v1705 = vpop.f32.mrf.mxu0
      %v1706 = vadd.f32 %v709, %v1705
      %1707 = vmatmul.bf16.gmra.mxu0 %v839
      %v1708 = vpop.f32.mrf.mxu0
      %v1709 = vadd.f32 %v709, %v1708
      %v1710 = vpop.f32.mrf.mxu0
      %v1711 = vadd.f32 %v709, %v1710
      %1712 = vmatmul.bf16.gmra.mxu0 %v842
      %v1713 = vpop.f32.mrf.mxu0
      %v1714 = vadd.f32 %v709, %v1713
      %v1715 = vpop.f32.mrf.mxu0
      %v1716 = vadd.f32 %v709, %v1715
      %1717 = vmatmul.bf16.gmra.mxu0 %v845
      %v1718 = vpop.f32.mrf.mxu0
      %v1719 = vadd.f32 %v709, %v1718
      %v1720 = vpop.f32.mrf.mxu0
      %v1721 = vadd.f32 %v709, %v1720
      %1722 = vmatmul.bf16.gmra.mxu0 %v848
      %v1723 = vpop.f32.mrf.mxu0
      %v1724 = vadd.f32 %v709, %v1723
      %v1725 = vpop.f32.mrf.mxu0
      %v1726 = vadd.f32 %v709, %v1725
      %1727 = vmatmul.bf16.gmra.mxu0 %v851
      %v1728 = vpop.f32.mrf.mxu0
      %v1729 = vadd.f32 %v709, %v1728
      %v1730 = vpop.f32.mrf.mxu0
      %v1731 = vadd.f32 %v709, %v1730
      %1732 = vmatmul.bf16.gmra.mxu0 %v854
      %v1733 = vpop.f32.mrf.mxu0
      %v1734 = vadd.f32 %v709, %v1733
      %v1735 = vpop.f32.mrf.mxu0
      %v1736 = vadd.f32 %v709, %v1735
      %1737 = vmatmul.bf16.gmra.mxu0 %v857
      %v1738 = vpop.f32.mrf.mxu0
      %v1739 = vadd.f32 %v709, %v1738
      %v1740 = vpop.f32.mrf.mxu0
      %v1741 = vadd.f32 %v709, %v1740
      %1742 = vmatmul.bf16.gmra.mxu0 %v860
      %v1743 = vpop.f32.mrf.mxu0
      %v1744 = vadd.f32 %v709, %v1743
      %v1745 = vpop.f32.mrf.mxu0
      %v1746 = vadd.f32 %v709, %v1745
      %1747 = vmatmul.bf16.gmra.mxu0 %v863
      %v1748 = vpop.f32.mrf.mxu0
      %v1749 = vadd.f32 %v709, %v1748
      %v1750 = vpop.f32.mrf.mxu0
      %v1751 = vadd.f32 %v709, %v1750
      %1752 = vmatmul.bf16.gmra.mxu0 %v866
      %v1753 = vpop.f32.mrf.mxu0
      %v1754 = vadd.f32 %v709, %v1753
      %v1755 = vpop.f32.mrf.mxu0
      %v1756 = vadd.f32 %v709, %v1755
      %1757 = vdwg.mxu0
      %v1758 = vpack.c.bf16 %v967, %v878
      %v1759 = vpack.c.bf16 %v1145, %v1056
      %v1760 = vpack.c.bf16 %v1323, %v1234
      %v1761 = vpack.c.bf16 %v1501, %v1412
      %v1762 = vpack.c.bf16 %v1679, %v1590
      %v1763 = vpack.c.bf16 %v969, %v880
      %v1764 = vpack.c.bf16 %v1147, %v1058
      %v1765 = vpack.c.bf16 %v1325, %v1236
      %v1766 = vpack.c.bf16 %v1503, %v1414
      %v1767 = vpack.c.bf16 %v1681, %v1592
      %v1768 = vpack.c.bf16 %v972, %v883
      %v1769 = vpack.c.bf16 %v1150, %v1061
      %v1770 = vpack.c.bf16 %v1328, %v1239
      %v1771 = vpack.c.bf16 %v1506, %v1417
      %v1772 = vpack.c.bf16 %v1684, %v1595
      %v1773 = vpack.c.bf16 %v974, %v885
      %v1774 = vpack.c.bf16 %v1152, %v1063
      %v1775 = vpack.c.bf16 %v1330, %v1241
      %v1776 = vpack.c.bf16 %v1508, %v1419
      %v1777 = vpack.c.bf16 %v1686, %v1597
      %v1778 = vpack.c.bf16 %v977, %v888
      %v1779 = vpack.c.bf16 %v1155, %v1066
      %v1780 = vpack.c.bf16 %v1333, %v1244
      %v1781 = vpack.c.bf16 %v1511, %v1422
      %v1782 = vpack.c.bf16 %v1689, %v1600
      %v1783 = vpack.c.bf16 %v979, %v890
      %v1784 = vpack.c.bf16 %v1157, %v1068
      %v1785 = vpack.c.bf16 %v1335, %v1246
      %v1786 = vpack.c.bf16 %v1513, %v1424
      %v1787 = vpack.c.bf16 %v1691, %v1602
      %v1788 = vpack.c.bf16 %v982, %v893
      %v1789 = vpack.c.bf16 %v1160, %v1071
      %v1790 = vpack.c.bf16 %v1338, %v1249
      %v1791 = vpack.c.bf16 %v1516, %v1427
      %v1792 = vpack.c.bf16 %v1694, %v1605
      %v1793 = vpack.c.bf16 %v984, %v895
      %v1794 = vpack.c.bf16 %v1162, %v1073
      %v1795 = vpack.c.bf16 %v1340, %v1251
      %v1796 = vpack.c.bf16 %v1518, %v1429
      %v1797 = vpack.c.bf16 %v1696, %v1607
      %v1798 = vpack.c.bf16 %v987, %v898
      %v1799 = vpack.c.bf16 %v1165, %v1076
      %v1800 = vpack.c.bf16 %v1343, %v1254
      %v1801 = vpack.c.bf16 %v1521, %v1432
      %v1802 = vpack.c.bf16 %v1699, %v1610
      %v1803 = vpack.c.bf16 %v989, %v900
      %v1804 = vpack.c.bf16 %v1167, %v1078
      %v1805 = vpack.c.bf16 %v1345, %v1256
      %v1806 = vpack.c.bf16 %v1523, %v1434
      %v1807 = vpack.c.bf16 %v1701, %v1612
      %v1808 = vpack.c.bf16 %v992, %v903
      %v1809 = vpack.c.bf16 %v1170, %v1081
      %v1810 = vpack.c.bf16 %v1348, %v1259
      %v1811 = vpack.c.bf16 %v1526, %v1437
      %v1812 = vpack.c.bf16 %v1704, %v1615
      %v1813 = vpack.c.bf16 %v994, %v905
      %v1814 = vpack.c.bf16 %v1172, %v1083
      %v1815 = vpack.c.bf16 %v1350, %v1261
      %v1816 = vpack.c.bf16 %v1528, %v1439
      %v1817 = vpack.c.bf16 %v1706, %v1617
      %v1818 = vpack.c.bf16 %v997, %v908
      %v1819 = vpack.c.bf16 %v1175, %v1086
      %v1820 = vpack.c.bf16 %v1353, %v1264
      %v1821 = vpack.c.bf16 %v1531, %v1442
      %v1822 = vpack.c.bf16 %v1709, %v1620
      %v1823 = vpack.c.bf16 %v999, %v910
      %v1824 = vpack.c.bf16 %v1177, %v1088
      %v1825 = vpack.c.bf16 %v1355, %v1266
      %v1826 = vpack.c.bf16 %v1533, %v1444
      %v1827 = vpack.c.bf16 %v1711, %v1622
      %v1828 = vpack.c.bf16 %v1002, %v913
      %v1829 = vpack.c.bf16 %v1180, %v1091
      %v1830 = vpack.c.bf16 %v1358, %v1269
      %v1831 = vpack.c.bf16 %v1536, %v1447
      %v1832 = vpack.c.bf16 %v1714, %v1625
      %v1833 = vpack.c.bf16 %v1004, %v915
      %v1834 = vpack.c.bf16 %v1182, %v1093
      %v1835 = vpack.c.bf16 %v1360, %v1271
      %v1836 = vpack.c.bf16 %v1538, %v1449
      %v1837 = vpack.c.bf16 %v1716, %v1627
      %v1838 = vpack.c.bf16 %v1007, %v918
      %v1839 = vpack.c.bf16 %v1185, %v1096
      %v1840 = vpack.c.bf16 %v1363, %v1274
      %v1841 = vpack.c.bf16 %v1541, %v1452
      %v1842 = vpack.c.bf16 %v1719, %v1630
      %v1843 = vpack.c.bf16 %v1009, %v920
      %v1844 = vpack.c.bf16 %v1187, %v1098
      %v1845 = vpack.c.bf16 %v1365, %v1276
      %v1846 = vpack.c.bf16 %v1543, %v1454
      %v1847 = vpack.c.bf16 %v1721, %v1632
      %v1848 = vpack.c.bf16 %v1012, %v923
      %v1849 = vpack.c.bf16 %v1190, %v1101
      %v1850 = vpack.c.bf16 %v1368, %v1279
      %v1851 = vpack.c.bf16 %v1546, %v1457
      %v1852 = vpack.c.bf16 %v1724, %v1635
      %v1853 = vpack.c.bf16 %v1014, %v925
      %v1854 = vpack.c.bf16 %v1192, %v1103
      %v1855 = vpack.c.bf16 %v1370, %v1281
      %v1856 = vpack.c.bf16 %v1548, %v1459
      %v1857 = vpack.c.bf16 %v1726, %v1637
      %v1858 = vpack.c.bf16 %v1017, %v928
      %v1859 = vpack.c.bf16 %v1195, %v1106
      %v1860 = vpack.c.bf16 %v1373, %v1284
      %v1861 = vpack.c.bf16 %v1551, %v1462
      %v1862 = vpack.c.bf16 %v1729, %v1640
      %v1863 = vpack.c.bf16 %v1019, %v930
      %v1864 = vpack.c.bf16 %v1197, %v1108
      %v1865 = vpack.c.bf16 %v1375, %v1286
      %v1866 = vpack.c.bf16 %v1553, %v1464
      %v1867 = vpack.c.bf16 %v1731, %v1642
      %v1868 = vpack.c.bf16 %v1022, %v933
      %v1869 = vpack.c.bf16 %v1200, %v1111
      %v1870 = vpack.c.bf16 %v1378, %v1289
      %v1871 = vpack.c.bf16 %v1556, %v1467
      %v1872 = vpack.c.bf16 %v1734, %v1645
      %v1873 = vpack.c.bf16 %v1024, %v935
      %v1874 = vpack.c.bf16 %v1202, %v1113
      %v1875 = vpack.c.bf16 %v1380, %v1291
      %v1876 = vpack.c.bf16 %v1558, %v1469
      %v1877 = vpack.c.bf16 %v1736, %v1647
      %v1878 = vpack.c.bf16 %v1027, %v938
      %v1879 = vpack.c.bf16 %v1205, %v1116
      %v1880 = vpack.c.bf16 %v1383, %v1294
      %v1881 = vpack.c.bf16 %v1561, %v1472
      %v1882 = vpack.c.bf16 %v1739, %v1650
      %v1883 = vpack.c.bf16 %v1029, %v940
      %v1884 = vpack.c.bf16 %v1207, %v1118
      %v1885 = vpack.c.bf16 %v1385, %v1296
      %v1886 = vpack.c.bf16 %v1563, %v1474
      %v1887 = vpack.c.bf16 %v1741, %v1652
      %v1888 = vpack.c.bf16 %v1032, %v943
      %v1889 = vpack.c.bf16 %v1210, %v1121
      %v1890 = vpack.c.bf16 %v1388, %v1299
      %v1891 = vpack.c.bf16 %v1566, %v1477
      %v1892 = vpack.c.bf16 %v1744, %v1655
      %v1893 = vpack.c.bf16 %v1034, %v945
      %v1894 = vpack.c.bf16 %v1212, %v1123
      %v1895 = vpack.c.bf16 %v1390, %v1301
      %v1896 = vpack.c.bf16 %v1568, %v1479
      %v1897 = vpack.c.bf16 %v1746, %v1657
      %v1898 = vpack.c.bf16 %v1037, %v948
      %v1899 = vpack.c.bf16 %v1215, %v1126
      %v1900 = vpack.c.bf16 %v1393, %v1304
      %v1901 = vpack.c.bf16 %v1571, %v1482
      %v1902 = vpack.c.bf16 %v1749, %v1660
      %v1903 = vpack.c.bf16 %v1039, %v950
      %v1904 = vpack.c.bf16 %v1217, %v1128
      %v1905 = vpack.c.bf16 %v1395, %v1306
      %v1906 = vpack.c.bf16 %v1573, %v1484
      %v1907 = vpack.c.bf16 %v1751, %v1662
      %v1908 = vpack.c.bf16 %v1042, %v953
      %v1909 = vpack.c.bf16 %v1220, %v1131
      %v1910 = vpack.c.bf16 %v1398, %v1309
      %v1911 = vpack.c.bf16 %v1576, %v1487
      %v1912 = vpack.c.bf16 %v1754, %v1665
      %v1913 = vpack.c.bf16 %v1044, %v955
      %v1914 = vpack.c.bf16 %v1222, %v1133
      %v1915 = vpack.c.bf16 %v1400, %v1311
      %v1916 = vpack.c.bf16 %v1578, %v1489
      %v1917 = vpack.c.bf16 %v1756, %v1667
      %v1918 = vunpack.c.l.bf16 %v1758
      %v1919 = vunpack.c.h.bf16 %v1758
      %v1920 = vunpack.c.l.bf16 %v1759
      %v1921 = vunpack.c.h.bf16 %v1759
      %v1922 = vunpack.c.l.bf16 %v1760
      %v1923 = vunpack.c.h.bf16 %v1760
      %v1924 = vunpack.c.l.bf16 %v1761
      %v1925 = vunpack.c.h.bf16 %v1761
      %v1926 = vunpack.c.l.bf16 %v1762
      %v1927 = vunpack.c.h.bf16 %v1762
      %v1928 = vunpack.c.l.bf16 %v1763
      %v1929 = vunpack.c.h.bf16 %v1763
      %v1930 = vunpack.c.l.bf16 %v1764
      %v1931 = vunpack.c.h.bf16 %v1764
      %v1932 = vunpack.c.l.bf16 %v1765
      %v1933 = vunpack.c.h.bf16 %v1765
      %v1934 = vunpack.c.l.bf16 %v1766
      %v1935 = vunpack.c.h.bf16 %v1766
      %v1936 = vunpack.c.l.bf16 %v1767
      %v1937 = vunpack.c.h.bf16 %v1767
      %v1938 = vunpack.c.l.bf16 %v1768
      %v1939 = vunpack.c.h.bf16 %v1768
      %v1940 = vunpack.c.l.bf16 %v1769
      %v1941 = vunpack.c.h.bf16 %v1769
      %v1942 = vunpack.c.l.bf16 %v1770
      %v1943 = vunpack.c.h.bf16 %v1770
      %v1944 = vunpack.c.l.bf16 %v1771
      %v1945 = vunpack.c.h.bf16 %v1771
      %v1946 = vunpack.c.l.bf16 %v1772
      %v1947 = vunpack.c.h.bf16 %v1772
      %v1948 = vunpack.c.l.bf16 %v1773
      %v1949 = vunpack.c.h.bf16 %v1773
      %v1950 = vunpack.c.l.bf16 %v1774
      %v1951 = vunpack.c.h.bf16 %v1774
      %v1952 = vunpack.c.l.bf16 %v1775
      %v1953 = vunpack.c.h.bf16 %v1775
      %v1954 = vunpack.c.l.bf16 %v1776
      %v1955 = vunpack.c.h.bf16 %v1776
      %v1956 = vunpack.c.l.bf16 %v1777
      %v1957 = vunpack.c.h.bf16 %v1777
      %v1958 = vunpack.c.l.bf16 %v1778
      %v1959 = vunpack.c.h.bf16 %v1778
      %v1960 = vunpack.c.l.bf16 %v1779
      %v1961 = vunpack.c.h.bf16 %v1779
      %v1962 = vunpack.c.l.bf16 %v1780
      %v1963 = vunpack.c.h.bf16 %v1780
      %v1964 = vunpack.c.l.bf16 %v1781
      %v1965 = vunpack.c.h.bf16 %v1781
      %v1966 = vunpack.c.l.bf16 %v1782
      %v1967 = vunpack.c.h.bf16 %v1782
      %v1968 = vunpack.c.l.bf16 %v1783
      %v1969 = vunpack.c.h.bf16 %v1783
      %v1970 = vunpack.c.l.bf16 %v1784
      %v1971 = vunpack.c.h.bf16 %v1784
      %v1972 = vunpack.c.l.bf16 %v1785
      %v1973 = vunpack.c.h.bf16 %v1785
      %v1974 = vunpack.c.l.bf16 %v1786
      %v1975 = vunpack.c.h.bf16 %v1786
      %v1976 = vunpack.c.l.bf16 %v1787
      %v1977 = vunpack.c.h.bf16 %v1787
      %v1978 = vunpack.c.l.bf16 %v1788
      %v1979 = vunpack.c.h.bf16 %v1788
      %v1980 = vunpack.c.l.bf16 %v1789
      %v1981 = vunpack.c.h.bf16 %v1789
      %v1982 = vunpack.c.l.bf16 %v1790
      %v1983 = vunpack.c.h.bf16 %v1790
      %v1984 = vunpack.c.l.bf16 %v1791
      %v1985 = vunpack.c.h.bf16 %v1791
      %v1986 = vunpack.c.l.bf16 %v1792
      %v1987 = vunpack.c.h.bf16 %v1792
      %v1988 = vunpack.c.l.bf16 %v1793
      %v1989 = vunpack.c.h.bf16 %v1793
      %v1990 = vunpack.c.l.bf16 %v1794
      %v1991 = vunpack.c.h.bf16 %v1794
      %v1992 = vunpack.c.l.bf16 %v1795
      %v1993 = vunpack.c.h.bf16 %v1795
      %v1994 = vunpack.c.l.bf16 %v1796
      %v1995 = vunpack.c.h.bf16 %v1796
      %v1996 = vunpack.c.l.bf16 %v1797
      %v1997 = vunpack.c.h.bf16 %v1797
      %v1998 = vunpack.c.l.bf16 %v1798
      %v1999 = vunpack.c.h.bf16 %v1798
      %v2000 = vunpack.c.l.bf16 %v1799
      %v2001 = vunpack.c.h.bf16 %v1799
      %v2002 = vunpack.c.l.bf16 %v1800
      %v2003 = vunpack.c.h.bf16 %v1800
      %v2004 = vunpack.c.l.bf16 %v1801
      %v2005 = vunpack.c.h.bf16 %v1801
      %v2006 = vunpack.c.l.bf16 %v1802
      %v2007 = vunpack.c.h.bf16 %v1802
      %v2008 = vunpack.c.l.bf16 %v1803
      %v2009 = vunpack.c.h.bf16 %v1803
      %v2010 = vunpack.c.l.bf16 %v1804
      %v2011 = vunpack.c.h.bf16 %v1804
      %v2012 = vunpack.c.l.bf16 %v1805
      %v2013 = vunpack.c.h.bf16 %v1805
      %v2014 = vunpack.c.l.bf16 %v1806
      %v2015 = vunpack.c.h.bf16 %v1806
      %v2016 = vunpack.c.l.bf16 %v1807
      %v2017 = vunpack.c.h.bf16 %v1807
      %v2018 = vunpack.c.l.bf16 %v1808
      %v2019 = vunpack.c.h.bf16 %v1808
      %v2020 = vunpack.c.l.bf16 %v1809
      %v2021 = vunpack.c.h.bf16 %v1809
      %v2022 = vunpack.c.l.bf16 %v1810
      %v2023 = vunpack.c.h.bf16 %v1810
      %v2024 = vunpack.c.l.bf16 %v1811
      %v2025 = vunpack.c.h.bf16 %v1811
      %v2026 = vunpack.c.l.bf16 %v1812
      %v2027 = vunpack.c.h.bf16 %v1812
      %v2028 = vunpack.c.l.bf16 %v1813
      %v2029 = vunpack.c.h.bf16 %v1813
      %v2030 = vunpack.c.l.bf16 %v1814
      %v2031 = vunpack.c.h.bf16 %v1814
      %v2032 = vunpack.c.l.bf16 %v1815
      %v2033 = vunpack.c.h.bf16 %v1815
      %v2034 = vunpack.c.l.bf16 %v1816
      %v2035 = vunpack.c.h.bf16 %v1816
      %v2036 = vunpack.c.l.bf16 %v1817
      %v2037 = vunpack.c.h.bf16 %v1817
      %v2038 = vunpack.c.l.bf16 %v1818
      %v2039 = vunpack.c.h.bf16 %v1818
      %v2040 = vunpack.c.l.bf16 %v1819
      %v2041 = vunpack.c.h.bf16 %v1819
      %v2042 = vunpack.c.l.bf16 %v1820
      %v2043 = vunpack.c.h.bf16 %v1820
      %v2044 = vunpack.c.l.bf16 %v1821
      %v2045 = vunpack.c.h.bf16 %v1821
      %v2046 = vunpack.c.l.bf16 %v1822
      %v2047 = vunpack.c.h.bf16 %v1822
      %v2048 = vunpack.c.l.bf16 %v1823
      %v2049 = vunpack.c.h.bf16 %v1823
      %v2050 = vunpack.c.l.bf16 %v1824
      %v2051 = vunpack.c.h.bf16 %v1824
      %v2052 = vunpack.c.l.bf16 %v1825
      %v2053 = vunpack.c.h.bf16 %v1825
      %v2054 = vunpack.c.l.bf16 %v1826
      %v2055 = vunpack.c.h.bf16 %v1826
      %v2056 = vunpack.c.l.bf16 %v1827
      %v2057 = vunpack.c.h.bf16 %v1827
      %v2058 = vunpack.c.l.bf16 %v1828
      %v2059 = vunpack.c.h.bf16 %v1828
      %v2060 = vunpack.c.l.bf16 %v1829
      %v2061 = vunpack.c.h.bf16 %v1829
      %v2062 = vunpack.c.l.bf16 %v1830
      %v2063 = vunpack.c.h.bf16 %v1830
      %v2064 = vunpack.c.l.bf16 %v1831
      %v2065 = vunpack.c.h.bf16 %v1831
      %v2066 = vunpack.c.l.bf16 %v1832
      %v2067 = vunpack.c.h.bf16 %v1832
      %v2068 = vunpack.c.l.bf16 %v1833
      %v2069 = vunpack.c.h.bf16 %v1833
      %v2070 = vunpack.c.l.bf16 %v1834
      %v2071 = vunpack.c.h.bf16 %v1834
      %v2072 = vunpack.c.l.bf16 %v1835
      %v2073 = vunpack.c.h.bf16 %v1835
      %v2074 = vunpack.c.l.bf16 %v1836
      %v2075 = vunpack.c.h.bf16 %v1836
      %v2076 = vunpack.c.l.bf16 %v1837
      %v2077 = vunpack.c.h.bf16 %v1837
      %v2078 = vunpack.c.l.bf16 %v1838
      %v2079 = vunpack.c.h.bf16 %v1838
      %v2080 = vunpack.c.l.bf16 %v1839
      %v2081 = vunpack.c.h.bf16 %v1839
      %v2082 = vunpack.c.l.bf16 %v1840
      %v2083 = vunpack.c.h.bf16 %v1840
      %v2084 = vunpack.c.l.bf16 %v1841
      %v2085 = vunpack.c.h.bf16 %v1841
      %v2086 = vunpack.c.l.bf16 %v1842
      %v2087 = vunpack.c.h.bf16 %v1842
      %v2088 = vunpack.c.l.bf16 %v1843
      %v2089 = vunpack.c.h.bf16 %v1843
      %v2090 = vunpack.c.l.bf16 %v1844
      %v2091 = vunpack.c.h.bf16 %v1844
      %v2092 = vunpack.c.l.bf16 %v1845
      %v2093 = vunpack.c.h.bf16 %v1845
      %v2094 = vunpack.c.l.bf16 %v1846
      %v2095 = vunpack.c.h.bf16 %v1846
      %v2096 = vunpack.c.l.bf16 %v1847
      %v2097 = vunpack.c.h.bf16 %v1847
      %v2098 = vunpack.c.l.bf16 %v1848
      %v2099 = vunpack.c.h.bf16 %v1848
      %v2100 = vunpack.c.l.bf16 %v1849
      %v2101 = vunpack.c.h.bf16 %v1849
      %v2102 = vunpack.c.l.bf16 %v1850
      %v2103 = vunpack.c.h.bf16 %v1850
      %v2104 = vunpack.c.l.bf16 %v1851
      %v2105 = vunpack.c.h.bf16 %v1851
      %v2106 = vunpack.c.l.bf16 %v1852
      %v2107 = vunpack.c.h.bf16 %v1852
      %v2108 = vunpack.c.l.bf16 %v1853
      %v2109 = vunpack.c.h.bf16 %v1853
      %v2110 = vunpack.c.l.bf16 %v1854
      %v2111 = vunpack.c.h.bf16 %v1854
      %v2112 = vunpack.c.l.bf16 %v1855
      %v2113 = vunpack.c.h.bf16 %v1855
      %v2114 = vunpack.c.l.bf16 %v1856
      %v2115 = vunpack.c.h.bf16 %v1856
      %v2116 = vunpack.c.l.bf16 %v1857
      %v2117 = vunpack.c.h.bf16 %v1857
      %v2118 = vunpack.c.l.bf16 %v1858
      %v2119 = vunpack.c.h.bf16 %v1858
      %v2120 = vunpack.c.l.bf16 %v1859
      %v2121 = vunpack.c.h.bf16 %v1859
      %v2122 = vunpack.c.l.bf16 %v1860
      %v2123 = vunpack.c.h.bf16 %v1860
      %v2124 = vunpack.c.l.bf16 %v1861
      %v2125 = vunpack.c.h.bf16 %v1861
      %v2126 = vunpack.c.l.bf16 %v1862
      %v2127 = vunpack.c.h.bf16 %v1862
      %v2128 = vunpack.c.l.bf16 %v1863
      %v2129 = vunpack.c.h.bf16 %v1863
      %v2130 = vunpack.c.l.bf16 %v1864
      %v2131 = vunpack.c.h.bf16 %v1864
      %v2132 = vunpack.c.l.bf16 %v1865
      %v2133 = vunpack.c.h.bf16 %v1865
      %v2134 = vunpack.c.l.bf16 %v1866
      %v2135 = vunpack.c.h.bf16 %v1866
      %v2136 = vunpack.c.l.bf16 %v1867
      %v2137 = vunpack.c.h.bf16 %v1867
      %v2138 = vunpack.c.l.bf16 %v1868
      %v2139 = vunpack.c.h.bf16 %v1868
      %v2140 = vunpack.c.l.bf16 %v1869
      %v2141 = vunpack.c.h.bf16 %v1869
      %v2142 = vunpack.c.l.bf16 %v1870
      %v2143 = vunpack.c.h.bf16 %v1870
      %v2144 = vunpack.c.l.bf16 %v1871
      %v2145 = vunpack.c.h.bf16 %v1871
      %v2146 = vunpack.c.l.bf16 %v1872
      %v2147 = vunpack.c.h.bf16 %v1872
      %v2148 = vunpack.c.l.bf16 %v1873
      %v2149 = vunpack.c.h.bf16 %v1873
      %v2150 = vunpack.c.l.bf16 %v1874
      %v2151 = vunpack.c.h.bf16 %v1874
      %v2152 = vunpack.c.l.bf16 %v1875
      %v2153 = vunpack.c.h.bf16 %v1875
      %v2154 = vunpack.c.l.bf16 %v1876
      %v2155 = vunpack.c.h.bf16 %v1876
      %v2156 = vunpack.c.l.bf16 %v1877
      %v2157 = vunpack.c.h.bf16 %v1877
      %v2158 = vunpack.c.l.bf16 %v1878
      %v2159 = vunpack.c.h.bf16 %v1878
      %v2160 = vunpack.c.l.bf16 %v1879
      %v2161 = vunpack.c.h.bf16 %v1879
      %v2162 = vunpack.c.l.bf16 %v1880
      %v2163 = vunpack.c.h.bf16 %v1880
      %v2164 = vunpack.c.l.bf16 %v1881
      %v2165 = vunpack.c.h.bf16 %v1881
      %v2166 = vunpack.c.l.bf16 %v1882
      %v2167 = vunpack.c.h.bf16 %v1882
      %v2168 = vunpack.c.l.bf16 %v1883
      %v2169 = vunpack.c.h.bf16 %v1883
      %v2170 = vunpack.c.l.bf16 %v1884
      %v2171 = vunpack.c.h.bf16 %v1884
      %v2172 = vunpack.c.l.bf16 %v1885
      %v2173 = vunpack.c.h.bf16 %v1885
      %v2174 = vunpack.c.l.bf16 %v1886
      %v2175 = vunpack.c.h.bf16 %v1886
      %v2176 = vunpack.c.l.bf16 %v1887
      %v2177 = vunpack.c.h.bf16 %v1887
      %v2178 = vunpack.c.l.bf16 %v1888
      %v2179 = vunpack.c.h.bf16 %v1888
      %v2180 = vunpack.c.l.bf16 %v1889
      %v2181 = vunpack.c.h.bf16 %v1889
      %v2182 = vunpack.c.l.bf16 %v1890
      %v2183 = vunpack.c.h.bf16 %v1890
      %v2184 = vunpack.c.l.bf16 %v1891
      %v2185 = vunpack.c.h.bf16 %v1891
      %v2186 = vunpack.c.l.bf16 %v1892
      %v2187 = vunpack.c.h.bf16 %v1892
      %v2188 = vunpack.c.l.bf16 %v1893
      %v2189 = vunpack.c.h.bf16 %v1893
      %v2190 = vunpack.c.l.bf16 %v1894
      %v2191 = vunpack.c.h.bf16 %v1894
      %v2192 = vunpack.c.l.bf16 %v1895
      %v2193 = vunpack.c.h.bf16 %v1895
      %v2194 = vunpack.c.l.bf16 %v1896
      %v2195 = vunpack.c.h.bf16 %v1896
      %v2196 = vunpack.c.l.bf16 %v1897
      %v2197 = vunpack.c.h.bf16 %v1897
      %v2198 = vunpack.c.l.bf16 %v1898
      %v2199 = vunpack.c.h.bf16 %v1898
      %v2200 = vunpack.c.l.bf16 %v1899
      %v2201 = vunpack.c.h.bf16 %v1899
      %v2202 = vunpack.c.l.bf16 %v1900
      %v2203 = vunpack.c.h.bf16 %v1900
      %v2204 = vunpack.c.l.bf16 %v1901
      %v2205 = vunpack.c.h.bf16 %v1901
      %v2206 = vunpack.c.l.bf16 %v1902
      %v2207 = vunpack.c.h.bf16 %v1902
      %v2208 = vunpack.c.l.bf16 %v1903
      %v2209 = vunpack.c.h.bf16 %v1903
      %v2210 = vunpack.c.l.bf16 %v1904
      %v2211 = vunpack.c.h.bf16 %v1904
      %v2212 = vunpack.c.l.bf16 %v1905
      %v2213 = vunpack.c.h.bf16 %v1905
      %v2214 = vunpack.c.l.bf16 %v1906
      %v2215 = vunpack.c.h.bf16 %v1906
      %v2216 = vunpack.c.l.bf16 %v1907
      %v2217 = vunpack.c.h.bf16 %v1907
      %v2218 = vunpack.c.l.bf16 %v1908
      %v2219 = vunpack.c.h.bf16 %v1908
      %v2220 = vunpack.c.l.bf16 %v1909
      %v2221 = vunpack.c.h.bf16 %v1909
      %v2222 = vunpack.c.l.bf16 %v1910
      %v2223 = vunpack.c.h.bf16 %v1910
      %v2224 = vunpack.c.l.bf16 %v1911
      %v2225 = vunpack.c.h.bf16 %v1911
      %v2226 = vunpack.c.l.bf16 %v1912
      %v2227 = vunpack.c.h.bf16 %v1912
      %v2228 = vunpack.c.l.bf16 %v1913
      %v2229 = vunpack.c.h.bf16 %v1913
      %v2230 = vunpack.c.l.bf16 %v1914
      %v2231 = vunpack.c.h.bf16 %v1914
      %v2232 = vunpack.c.l.bf16 %v1915
      %v2233 = vunpack.c.h.bf16 %v1915
      %v2234 = vunpack.c.l.bf16 %v1916
      %v2235 = vunpack.c.h.bf16 %v1916
      %v2236 = vunpack.c.l.bf16 %v1917
      %v2237 = vunpack.c.h.bf16 %v1917
      %v2238 = vmul.f32 %v1918, 0.5
      %v2239 = vmul.f32 %v1919, 0.5
      %v2240 = vmul.f32 %v1920, 0.5
      %v2241 = vmul.f32 %v1921, 0.5
      %v2242 = vmul.f32 %v1922, 0.5
      %v2243 = vmul.f32 %v1923, 0.5
      %v2244 = vmul.f32 %v1924, 0.5
      %v2245 = vmul.f32 %v1925, 0.5
      %v2246 = vmul.f32 %v1926, 0.5
      %v2247 = vmul.f32 %v1927, 0.5
      %v2248 = vmul.f32 %v1928, 0.5
      %v2249 = vmul.f32 %v1929, 0.5
      %v2250 = vmul.f32 %v1930, 0.5
      %v2251 = vmul.f32 %v1931, 0.5
      %v2252 = vmul.f32 %v1932, 0.5
      %v2253 = vmul.f32 %v1933, 0.5
      %v2254 = vmul.f32 %v1934, 0.5
      %v2255 = vmul.f32 %v1935, 0.5
      %v2256 = vmul.f32 %v1936, 0.5
      %v2257 = vmul.f32 %v1937, 0.5
      %v2258 = vmul.f32 %v1938, 0.5
      %v2259 = vmul.f32 %v1939, 0.5
      %v2260 = vmul.f32 %v1940, 0.5
      %v2261 = vmul.f32 %v1941, 0.5
      %v2262 = vmul.f32 %v1942, 0.5
      %v2263 = vmul.f32 %v1943, 0.5
      %v2264 = vmul.f32 %v1944, 0.5
      %v2265 = vmul.f32 %v1945, 0.5
      %v2266 = vmul.f32 %v1946, 0.5
      %v2267 = vmul.f32 %v1947, 0.5
      %v2268 = vmul.f32 %v1948, 0.5
      %v2269 = vmul.f32 %v1949, 0.5
      %v2270 = vmul.f32 %v1950, 0.5
      %v2271 = vmul.f32 %v1951, 0.5
      %v2272 = vmul.f32 %v1952, 0.5
      %v2273 = vmul.f32 %v1953, 0.5
      %v2274 = vmul.f32 %v1954, 0.5
      %v2275 = vmul.f32 %v1955, 0.5
      %v2276 = vmul.f32 %v1956, 0.5
      %v2277 = vmul.f32 %v1957, 0.5
      %v2278 = vmul.f32 %v1958, 0.5
      %v2279 = vmul.f32 %v1959, 0.5
      %v2280 = vmul.f32 %v1960, 0.5
      %v2281 = vmul.f32 %v1961, 0.5
      %v2282 = vmul.f32 %v1962, 0.5
      %v2283 = vmul.f32 %v1963, 0.5
      %v2284 = vmul.f32 %v1964, 0.5
      %v2285 = vmul.f32 %v1965, 0.5
      %v2286 = vmul.f32 %v1966, 0.5
      %v2287 = vmul.f32 %v1967, 0.5
      %v2288 = vmul.f32 %v1968, 0.5
      %v2289 = vmul.f32 %v1969, 0.5
      %v2290 = vmul.f32 %v1970, 0.5
      %v2291 = vmul.f32 %v1971, 0.5
      %v2292 = vmul.f32 %v1972, 0.5
      %v2293 = vmul.f32 %v1973, 0.5
      %v2294 = vmul.f32 %v1974, 0.5
      %v2295 = vmul.f32 %v1975, 0.5
      %v2296 = vmul.f32 %v1976, 0.5
      %v2297 = vmul.f32 %v1977, 0.5
      %v2298 = vmul.f32 %v1978, 0.5
      %v2299 = vmul.f32 %v1979, 0.5
      %v2300 = vmul.f32 %v1980, 0.5
      %v2301 = vmul.f32 %v1981, 0.5
      %v2302 = vmul.f32 %v1982, 0.5
      %v2303 = vmul.f32 %v1983, 0.5
      %v2304 = vmul.f32 %v1984, 0.5
      %v2305 = vmul.f32 %v1985, 0.5
      %v2306 = vmul.f32 %v1986, 0.5
      %v2307 = vmul.f32 %v1987, 0.5
      %v2308 = vmul.f32 %v1988, 0.5
      %v2309 = vmul.f32 %v1989, 0.5
      %v2310 = vmul.f32 %v1990, 0.5
      %v2311 = vmul.f32 %v1991, 0.5
      %v2312 = vmul.f32 %v1992, 0.5
      %v2313 = vmul.f32 %v1993, 0.5
      %v2314 = vmul.f32 %v1994, 0.5
      %v2315 = vmul.f32 %v1995, 0.5
      %v2316 = vmul.f32 %v1996, 0.5
      %v2317 = vmul.f32 %v1997, 0.5
      %v2318 = vmul.f32 %v1998, 0.5
      %v2319 = vmul.f32 %v1999, 0.5
      %v2320 = vmul.f32 %v2000, 0.5
      %v2321 = vmul.f32 %v2001, 0.5
      %v2322 = vmul.f32 %v2002, 0.5
      %v2323 = vmul.f32 %v2003, 0.5
      %v2324 = vmul.f32 %v2004, 0.5
      %v2325 = vmul.f32 %v2005, 0.5
      %v2326 = vmul.f32 %v2006, 0.5
      %v2327 = vmul.f32 %v2007, 0.5
      %v2328 = vmul.f32 %v2008, 0.5
      %v2329 = vmul.f32 %v2009, 0.5
      %v2330 = vmul.f32 %v2010, 0.5
      %v2331 = vmul.f32 %v2011, 0.5
      %v2332 = vmul.f32 %v2012, 0.5
      %v2333 = vmul.f32 %v2013, 0.5
      %v2334 = vmul.f32 %v2014, 0.5
      %v2335 = vmul.f32 %v2015, 0.5
      %v2336 = vmul.f32 %v2016, 0.5
      %v2337 = vmul.f32 %v2017, 0.5
      %v2338 = vmul.f32 %v2018, 0.5
      %v2339 = vmul.f32 %v2019, 0.5
      %v2340 = vmul.f32 %v2020, 0.5
      %v2341 = vmul.f32 %v2021, 0.5
      %v2342 = vmul.f32 %v2022, 0.5
      %v2343 = vmul.f32 %v2023, 0.5
      %v2344 = vmul.f32 %v2024, 0.5
      %v2345 = vmul.f32 %v2025, 0.5
      %v2346 = vmul.f32 %v2026, 0.5
      %v2347 = vmul.f32 %v2027, 0.5
      %v2348 = vmul.f32 %v2028, 0.5
      %v2349 = vmul.f32 %v2029, 0.5
      %v2350 = vmul.f32 %v2030, 0.5
      %v2351 = vmul.f32 %v2031, 0.5
      %v2352 = vmul.f32 %v2032, 0.5
      %v2353 = vmul.f32 %v2033, 0.5
      %v2354 = vmul.f32 %v2034, 0.5
      %v2355 = vmul.f32 %v2035, 0.5
      %v2356 = vmul.f32 %v2036, 0.5
      %v2357 = vmul.f32 %v2037, 0.5
      %v2358 = vmul.f32 %v2038, 0.5
      %v2359 = vmul.f32 %v2039, 0.5
      %v2360 = vmul.f32 %v2040, 0.5
      %v2361 = vmul.f32 %v2041, 0.5
      %v2362 = vmul.f32 %v2042, 0.5
      %v2363 = vmul.f32 %v2043, 0.5
      %v2364 = vmul.f32 %v2044, 0.5
      %v2365 = vmul.f32 %v2045, 0.5
      %v2366 = vmul.f32 %v2046, 0.5
      %v2367 = vmul.f32 %v2047, 0.5
      %v2368 = vmul.f32 %v2048, 0.5
      %v2369 = vmul.f32 %v2049, 0.5
      %v2370 = vmul.f32 %v2050, 0.5
      %v2371 = vmul.f32 %v2051, 0.5
      %v2372 = vmul.f32 %v2052, 0.5
      %v2373 = vmul.f32 %v2053, 0.5
      %v2374 = vmul.f32 %v2054, 0.5
      %v2375 = vmul.f32 %v2055, 0.5
      %v2376 = vmul.f32 %v2056, 0.5
      %v2377 = vmul.f32 %v2057, 0.5
      %v2378 = vmul.f32 %v2058, 0.5
      %v2379 = vmul.f32 %v2059, 0.5
      %v2380 = vmul.f32 %v2060, 0.5
      %v2381 = vmul.f32 %v2061, 0.5
      %v2382 = vmul.f32 %v2062, 0.5
      %v2383 = vmul.f32 %v2063, 0.5
      %v2384 = vmul.f32 %v2064, 0.5
      %v2385 = vmul.f32 %v2065, 0.5
      %v2386 = vmul.f32 %v2066, 0.5
      %v2387 = vmul.f32 %v2067, 0.5
      %v2388 = vmul.f32 %v2068, 0.5
      %v2389 = vmul.f32 %v2069, 0.5
      %v2390 = vmul.f32 %v2070, 0.5
      %v2391 = vmul.f32 %v2071, 0.5
      %v2392 = vmul.f32 %v2072, 0.5
      %v2393 = vmul.f32 %v2073, 0.5
      %v2394 = vmul.f32 %v2074, 0.5
      %v2395 = vmul.f32 %v2075, 0.5
      %v2396 = vmul.f32 %v2076, 0.5
      %v2397 = vmul.f32 %v2077, 0.5
      %v2398 = vmul.f32 %v2078, 0.5
      %v2399 = vmul.f32 %v2079, 0.5
      %v2400 = vmul.f32 %v2080, 0.5
      %v2401 = vmul.f32 %v2081, 0.5
      %v2402 = vmul.f32 %v2082, 0.5
      %v2403 = vmul.f32 %v2083, 0.5
      %v2404 = vmul.f32 %v2084, 0.5
      %v2405 = vmul.f32 %v2085, 0.5
      %v2406 = vmul.f32 %v2086, 0.5
      %v2407 = vmul.f32 %v2087, 0.5
      %v2408 = vmul.f32 %v2088, 0.5
      %v2409 = vmul.f32 %v2089, 0.5
      %v2410 = vmul.f32 %v2090, 0.5
      %v2411 = vmul.f32 %v2091, 0.5
      %v2412 = vmul.f32 %v2092, 0.5
      %v2413 = vmul.f32 %v2093, 0.5
      %v2414 = vmul.f32 %v2094, 0.5
      %v2415 = vmul.f32 %v2095, 0.5
      %v2416 = vmul.f32 %v2096, 0.5
      %v2417 = vmul.f32 %v2097, 0.5
      %v2418 = vmul.f32 %v2098, 0.5
      %v2419 = vmul.f32 %v2099, 0.5
      %v2420 = vmul.f32 %v2100, 0.5
      %v2421 = vmul.f32 %v2101, 0.5
      %v2422 = vmul.f32 %v2102, 0.5
      %v2423 = vmul.f32 %v2103, 0.5
      %v2424 = vmul.f32 %v2104, 0.5
      %v2425 = vmul.f32 %v2105, 0.5
      %v2426 = vmul.f32 %v2106, 0.5
      %v2427 = vmul.f32 %v2107, 0.5
      %v2428 = vmul.f32 %v2108, 0.5
      %v2429 = vmul.f32 %v2109, 0.5
      %v2430 = vmul.f32 %v2110, 0.5
      %v2431 = vmul.f32 %v2111, 0.5
      %v2432 = vmul.f32 %v2112, 0.5
      %v2433 = vmul.f32 %v2113, 0.5
      %v2434 = vmul.f32 %v2114, 0.5
      %v2435 = vmul.f32 %v2115, 0.5
      %v2436 = vmul.f32 %v2116, 0.5
      %v2437 = vmul.f32 %v2117, 0.5
      %v2438 = vmul.f32 %v2118, 0.5
      %v2439 = vmul.f32 %v2119, 0.5
      %v2440 = vmul.f32 %v2120, 0.5
      %v2441 = vmul.f32 %v2121, 0.5
      %v2442 = vmul.f32 %v2122, 0.5
      %v2443 = vmul.f32 %v2123, 0.5
      %v2444 = vmul.f32 %v2124, 0.5
      %v2445 = vmul.f32 %v2125, 0.5
      %v2446 = vmul.f32 %v2126, 0.5
      %v2447 = vmul.f32 %v2127, 0.5
      %v2448 = vmul.f32 %v2128, 0.5
      %v2449 = vmul.f32 %v2129, 0.5
      %v2450 = vmul.f32 %v2130, 0.5
      %v2451 = vmul.f32 %v2131, 0.5
      %v2452 = vmul.f32 %v2132, 0.5
      %v2453 = vmul.f32 %v2133, 0.5
      %v2454 = vmul.f32 %v2134, 0.5
      %v2455 = vmul.f32 %v2135, 0.5
      %v2456 = vmul.f32 %v2136, 0.5
      %v2457 = vmul.f32 %v2137, 0.5
      %v2458 = vmul.f32 %v2138, 0.5
      %v2459 = vmul.f32 %v2139, 0.5
      %v2460 = vmul.f32 %v2140, 0.5
      %v2461 = vmul.f32 %v2141, 0.5
      %v2462 = vmul.f32 %v2142, 0.5
      %v2463 = vmul.f32 %v2143, 0.5
      %v2464 = vmul.f32 %v2144, 0.5
      %v2465 = vmul.f32 %v2145, 0.5
      %v2466 = vmul.f32 %v2146, 0.5
      %v2467 = vmul.f32 %v2147, 0.5
      %v2468 = vmul.f32 %v2148, 0.5
      %v2469 = vmul.f32 %v2149, 0.5
      %v2470 = vmul.f32 %v2150, 0.5
      %v2471 = vmul.f32 %v2151, 0.5
      %v2472 = vmul.f32 %v2152, 0.5
      %v2473 = vmul.f32 %v2153, 0.5
      %v2474 = vmul.f32 %v2154, 0.5
      %v2475 = vmul.f32 %v2155, 0.5
      %v2476 = vmul.f32 %v2156, 0.5
      %v2477 = vmul.f32 %v2157, 0.5
      %v2478 = vmul.f32 %v2158, 0.5
      %v2479 = vmul.f32 %v2159, 0.5
      %v2480 = vmul.f32 %v2160, 0.5
      %v2481 = vmul.f32 %v2161, 0.5
      %v2482 = vmul.f32 %v2162, 0.5
      %v2483 = vmul.f32 %v2163, 0.5
      %v2484 = vmul.f32 %v2164, 0.5
      %v2485 = vmul.f32 %v2165, 0.5
      %v2486 = vmul.f32 %v2166, 0.5
      %v2487 = vmul.f32 %v2167, 0.5
      %v2488 = vmul.f32 %v2168, 0.5
      %v2489 = vmul.f32 %v2169, 0.5
      %v2490 = vmul.f32 %v2170, 0.5
      %v2491 = vmul.f32 %v2171, 0.5
      %v2492 = vmul.f32 %v2172, 0.5
      %v2493 = vmul.f32 %v2173, 0.5
      %v2494 = vmul.f32 %v2174, 0.5
      %v2495 = vmul.f32 %v2175, 0.5
      %v2496 = vmul.f32 %v2176, 0.5
      %v2497 = vmul.f32 %v2177, 0.5
      %v2498 = vmul.f32 %v2178, 0.5
      %v2499 = vmul.f32 %v2179, 0.5
      %v2500 = vmul.f32 %v2180, 0.5
      %v2501 = vmul.f32 %v2181, 0.5
      %v2502 = vmul.f32 %v2182, 0.5
      %v2503 = vmul.f32 %v2183, 0.5
      %v2504 = vmul.f32 %v2184, 0.5
      %v2505 = vmul.f32 %v2185, 0.5
      %v2506 = vmul.f32 %v2186, 0.5
      %v2507 = vmul.f32 %v2187, 0.5
      %v2508 = vmul.f32 %v2188, 0.5
      %v2509 = vmul.f32 %v2189, 0.5
      %v2510 = vmul.f32 %v2190, 0.5
      %v2511 = vmul.f32 %v2191, 0.5
      %v2512 = vmul.f32 %v2192, 0.5
      %v2513 = vmul.f32 %v2193, 0.5
      %v2514 = vmul.f32 %v2194, 0.5
      %v2515 = vmul.f32 %v2195, 0.5
      %v2516 = vmul.f32 %v2196, 0.5
      %v2517 = vmul.f32 %v2197, 0.5
      %v2518 = vmul.f32 %v2198, 0.5
      %v2519 = vmul.f32 %v2199, 0.5
      %v2520 = vmul.f32 %v2200, 0.5
      %v2521 = vmul.f32 %v2201, 0.5
      %v2522 = vmul.f32 %v2202, 0.5
      %v2523 = vmul.f32 %v2203, 0.5
      %v2524 = vmul.f32 %v2204, 0.5
      %v2525 = vmul.f32 %v2205, 0.5
      %v2526 = vmul.f32 %v2206, 0.5
      %v2527 = vmul.f32 %v2207, 0.5
      %v2528 = vmul.f32 %v2208, 0.5
      %v2529 = vmul.f32 %v2209, 0.5
      %v2530 = vmul.f32 %v2210, 0.5
      %v2531 = vmul.f32 %v2211, 0.5
      %v2532 = vmul.f32 %v2212, 0.5
      %v2533 = vmul.f32 %v2213, 0.5
      %v2534 = vmul.f32 %v2214, 0.5
      %v2535 = vmul.f32 %v2215, 0.5
      %v2536 = vmul.f32 %v2216, 0.5
      %v2537 = vmul.f32 %v2217, 0.5
      %v2538 = vmul.f32 %v2218, 0.5
      %v2539 = vmul.f32 %v2219, 0.5
      %v2540 = vmul.f32 %v2220, 0.5
      %v2541 = vmul.f32 %v2221, 0.5
      %v2542 = vmul.f32 %v2222, 0.5
      %v2543 = vmul.f32 %v2223, 0.5
      %v2544 = vmul.f32 %v2224, 0.5
      %v2545 = vmul.f32 %v2225, 0.5
      %v2546 = vmul.f32 %v2226, 0.5
      %v2547 = vmul.f32 %v2227, 0.5
      %v2548 = vmul.f32 %v2228, 0.5
      %v2549 = vmul.f32 %v2229, 0.5
      %v2550 = vmul.f32 %v2230, 0.5
      %v2551 = vmul.f32 %v2231, 0.5
      %v2552 = vmul.f32 %v2232, 0.5
      %v2553 = vmul.f32 %v2233, 0.5
      %v2554 = vmul.f32 %v2234, 0.5
      %v2555 = vmul.f32 %v2235, 0.5
      %v2556 = vmul.f32 %v2236, 0.5
      %v2557 = vmul.f32 %v2237, 0.5
      %v2558 = vpack.c.bf16 %v2239, %v2238
      %v2559 = vpack.c.bf16 %v2241, %v2240
      %v2560 = vpack.c.bf16 %v2243, %v2242
      %v2561 = vpack.c.bf16 %v2245, %v2244
      %v2562 = vpack.c.bf16 %v2247, %v2246
      %v2563 = vpack.c.bf16 %v2249, %v2248
      %v2564 = vpack.c.bf16 %v2251, %v2250
      %v2565 = vpack.c.bf16 %v2253, %v2252
      %v2566 = vpack.c.bf16 %v2255, %v2254
      %v2567 = vpack.c.bf16 %v2257, %v2256
      %v2568 = vpack.c.bf16 %v2259, %v2258
      %v2569 = vpack.c.bf16 %v2261, %v2260
      %v2570 = vpack.c.bf16 %v2263, %v2262
      %v2571 = vpack.c.bf16 %v2265, %v2264
      %v2572 = vpack.c.bf16 %v2267, %v2266
      %v2573 = vpack.c.bf16 %v2269, %v2268
      %v2574 = vpack.c.bf16 %v2271, %v2270
      %v2575 = vpack.c.bf16 %v2273, %v2272
      %v2576 = vpack.c.bf16 %v2275, %v2274
      %v2577 = vpack.c.bf16 %v2277, %v2276
      %v2578 = vpack.c.bf16 %v2279, %v2278
      %v2579 = vpack.c.bf16 %v2281, %v2280
      %v2580 = vpack.c.bf16 %v2283, %v2282
      %v2581 = vpack.c.bf16 %v2285, %v2284
      %v2582 = vpack.c.bf16 %v2287, %v2286
      %v2583 = vpack.c.bf16 %v2289, %v2288
      %v2584 = vpack.c.bf16 %v2291, %v2290
      %v2585 = vpack.c.bf16 %v2293, %v2292
      %v2586 = vpack.c.bf16 %v2295, %v2294
      %v2587 = vpack.c.bf16 %v2297, %v2296
      %v2588 = vpack.c.bf16 %v2299, %v2298
      %v2589 = vpack.c.bf16 %v2301, %v2300
      %v2590 = vpack.c.bf16 %v2303, %v2302
      %v2591 = vpack.c.bf16 %v2305, %v2304
      %v2592 = vpack.c.bf16 %v2307, %v2306
      %v2593 = vpack.c.bf16 %v2309, %v2308
      %v2594 = vpack.c.bf16 %v2311, %v2310
      %v2595 = vpack.c.bf16 %v2313, %v2312
      %v2596 = vpack.c.bf16 %v2315, %v2314
      %v2597 = vpack.c.bf16 %v2317, %v2316
      %v2598 = vpack.c.bf16 %v2319, %v2318
      %v2599 = vpack.c.bf16 %v2321, %v2320
      %v2600 = vpack.c.bf16 %v2323, %v2322
      %v2601 = vpack.c.bf16 %v2325, %v2324
      %v2602 = vpack.c.bf16 %v2327, %v2326
      %v2603 = vpack.c.bf16 %v2329, %v2328
      %v2604 = vpack.c.bf16 %v2331, %v2330
      %v2605 = vpack.c.bf16 %v2333, %v2332
      %v2606 = vpack.c.bf16 %v2335, %v2334
      %v2607 = vpack.c.bf16 %v2337, %v2336
      %v2608 = vpack.c.bf16 %v2339, %v2338
      %v2609 = vpack.c.bf16 %v2341, %v2340
      %v2610 = vpack.c.bf16 %v2343, %v2342
      %v2611 = vpack.c.bf16 %v2345, %v2344
      %v2612 = vpack.c.bf16 %v2347, %v2346
      %v2613 = vpack.c.bf16 %v2349, %v2348
      %v2614 = vpack.c.bf16 %v2351, %v2350
      %v2615 = vpack.c.bf16 %v2353, %v2352
      %v2616 = vpack.c.bf16 %v2355, %v2354
      %v2617 = vpack.c.bf16 %v2357, %v2356
      %v2618 = vpack.c.bf16 %v2359, %v2358
      %v2619 = vpack.c.bf16 %v2361, %v2360
      %v2620 = vpack.c.bf16 %v2363, %v2362
      %v2621 = vpack.c.bf16 %v2365, %v2364
      %v2622 = vpack.c.bf16 %v2367, %v2366
      %v2623 = vpack.c.bf16 %v2369, %v2368
      %v2624 = vpack.c.bf16 %v2371, %v2370
      %v2625 = vpack.c.bf16 %v2373, %v2372
      %v2626 = vpack.c.bf16 %v2375, %v2374
      %v2627 = vpack.c.bf16 %v2377, %v2376
      %v2628 = vpack.c.bf16 %v2379, %v2378
      %v2629 = vpack.c.bf16 %v2381, %v2380
      %v2630 = vpack.c.bf16 %v2383, %v2382
      %v2631 = vpack.c.bf16 %v2385, %v2384
      %v2632 = vpack.c.bf16 %v2387, %v2386
      %v2633 = vpack.c.bf16 %v2389, %v2388
      %v2634 = vpack.c.bf16 %v2391, %v2390
      %v2635 = vpack.c.bf16 %v2393, %v2392
      %v2636 = vpack.c.bf16 %v2395, %v2394
      %v2637 = vpack.c.bf16 %v2397, %v2396
      %v2638 = vpack.c.bf16 %v2399, %v2398
      %v2639 = vpack.c.bf16 %v2401, %v2400
      %v2640 = vpack.c.bf16 %v2403, %v2402
      %v2641 = vpack.c.bf16 %v2405, %v2404
      %v2642 = vpack.c.bf16 %v2407, %v2406
      %v2643 = vpack.c.bf16 %v2409, %v2408
      %v2644 = vpack.c.bf16 %v2411, %v2410
      %v2645 = vpack.c.bf16 %v2413, %v2412
      %v2646 = vpack.c.bf16 %v2415, %v2414
      %v2647 = vpack.c.bf16 %v2417, %v2416
      %v2648 = vpack.c.bf16 %v2419, %v2418
      %v2649 = vpack.c.bf16 %v2421, %v2420
      %v2650 = vpack.c.bf16 %v2423, %v2422
      %v2651 = vpack.c.bf16 %v2425, %v2424
      %v2652 = vpack.c.bf16 %v2427, %v2426
      %v2653 = vpack.c.bf16 %v2429, %v2428
      %v2654 = vpack.c.bf16 %v2431, %v2430
      %v2655 = vpack.c.bf16 %v2433, %v2432
      %v2656 = vpack.c.bf16 %v2435, %v2434
      %v2657 = vpack.c.bf16 %v2437, %v2436
      %v2658 = vpack.c.bf16 %v2439, %v2438
      %v2659 = vpack.c.bf16 %v2441, %v2440
      %v2660 = vpack.c.bf16 %v2443, %v2442
      %v2661 = vpack.c.bf16 %v2445, %v2444
      %v2662 = vpack.c.bf16 %v2447, %v2446
      %v2663 = vpack.c.bf16 %v2449, %v2448
      %v2664 = vpack.c.bf16 %v2451, %v2450
      %v2665 = vpack.c.bf16 %v2453, %v2452
      %v2666 = vpack.c.bf16 %v2455, %v2454
      %v2667 = vpack.c.bf16 %v2457, %v2456
      %v2668 = vpack.c.bf16 %v2459, %v2458
      %v2669 = vpack.c.bf16 %v2461, %v2460
      %v2670 = vpack.c.bf16 %v2463, %v2462
      %v2671 = vpack.c.bf16 %v2465, %v2464
      %v2672 = vpack.c.bf16 %v2467, %v2466
      %v2673 = vpack.c.bf16 %v2469, %v2468
      %v2674 = vpack.c.bf16 %v2471, %v2470
      %v2675 = vpack.c.bf16 %v2473, %v2472
      %v2676 = vpack.c.bf16 %v2475, %v2474
      %v2677 = vpack.c.bf16 %v2477, %v2476
      %v2678 = vpack.c.bf16 %v2479, %v2478
      %v2679 = vpack.c.bf16 %v2481, %v2480
      %v2680 = vpack.c.bf16 %v2483, %v2482
      %v2681 = vpack.c.bf16 %v2485, %v2484
      %v2682 = vpack.c.bf16 %v2487, %v2486
      %v2683 = vpack.c.bf16 %v2489, %v2488
      %v2684 = vpack.c.bf16 %v2491, %v2490
      %v2685 = vpack.c.bf16 %v2493, %v2492
      %v2686 = vpack.c.bf16 %v2495, %v2494
      %v2687 = vpack.c.bf16 %v2497, %v2496
      %v2688 = vpack.c.bf16 %v2499, %v2498
      %v2689 = vpack.c.bf16 %v2501, %v2500
      %v2690 = vpack.c.bf16 %v2503, %v2502
      %v2691 = vpack.c.bf16 %v2505, %v2504
      %v2692 = vpack.c.bf16 %v2507, %v2506
      %v2693 = vpack.c.bf16 %v2509, %v2508
      %v2694 = vpack.c.bf16 %v2511, %v2510
      %v2695 = vpack.c.bf16 %v2513, %v2512
      %v2696 = vpack.c.bf16 %v2515, %v2514
      %v2697 = vpack.c.bf16 %v2517, %v2516
      %v2698 = vpack.c.bf16 %v2519, %v2518
      %v2699 = vpack.c.bf16 %v2521, %v2520
      %v2700 = vpack.c.bf16 %v2523, %v2522
      %v2701 = vpack.c.bf16 %v2525, %v2524
      %v2702 = vpack.c.bf16 %v2527, %v2526
      %v2703 = vpack.c.bf16 %v2529, %v2528
      %v2704 = vpack.c.bf16 %v2531, %v2530
      %v2705 = vpack.c.bf16 %v2533, %v2532
      %v2706 = vpack.c.bf16 %v2535, %v2534
      %v2707 = vpack.c.bf16 %v2537, %v2536
      %v2708 = vpack.c.bf16 %v2539, %v2538
      %v2709 = vpack.c.bf16 %v2541, %v2540
      %v2710 = vpack.c.bf16 %v2543, %v2542
      %v2711 = vpack.c.bf16 %v2545, %v2544
      %v2712 = vpack.c.bf16 %v2547, %v2546
      %v2713 = vpack.c.bf16 %v2549, %v2548
      %v2714 = vpack.c.bf16 %v2551, %v2550
      %v2715 = vpack.c.bf16 %v2553, %v2552
      %v2716 = vpack.c.bf16 %v2555, %v2554
      %v2717 = vpack.c.bf16 %v2557, %v2556
      %v2718 = vunpack.c.l.bf16 %v2558
      %v2719 = vunpack.c.h.bf16 %v2558
      %v2720 = vunpack.c.l.bf16 %v2559
      %v2721 = vunpack.c.h.bf16 %v2559
      %v2722 = vunpack.c.l.bf16 %v2560
      %v2723 = vunpack.c.h.bf16 %v2560
      %v2724 = vunpack.c.l.bf16 %v2561
      %v2725 = vunpack.c.h.bf16 %v2561
      %v2726 = vunpack.c.l.bf16 %v2562
      %v2727 = vunpack.c.h.bf16 %v2562
      %v2728 = vunpack.c.l.bf16 %v2563
      %v2729 = vunpack.c.h.bf16 %v2563
      %v2730 = vunpack.c.l.bf16 %v2564
      %v2731 = vunpack.c.h.bf16 %v2564
      %v2732 = vunpack.c.l.bf16 %v2565
      %v2733 = vunpack.c.h.bf16 %v2565
      %v2734 = vunpack.c.l.bf16 %v2566
      %v2735 = vunpack.c.h.bf16 %v2566
      %v2736 = vunpack.c.l.bf16 %v2567
      %v2737 = vunpack.c.h.bf16 %v2567
      %v2738 = vunpack.c.l.bf16 %v2568
      %v2739 = vunpack.c.h.bf16 %v2568
      %v2740 = vunpack.c.l.bf16 %v2569
      %v2741 = vunpack.c.h.bf16 %v2569
      %v2742 = vunpack.c.l.bf16 %v2570
      %v2743 = vunpack.c.h.bf16 %v2570
      %v2744 = vunpack.c.l.bf16 %v2571
      %v2745 = vunpack.c.h.bf16 %v2571
      %v2746 = vunpack.c.l.bf16 %v2572
      %v2747 = vunpack.c.h.bf16 %v2572
      %v2748 = vunpack.c.l.bf16 %v2573
      %v2749 = vunpack.c.h.bf16 %v2573
      %v2750 = vunpack.c.l.bf16 %v2574
      %v2751 = vunpack.c.h.bf16 %v2574
      %v2752 = vunpack.c.l.bf16 %v2575
      %v2753 = vunpack.c.h.bf16 %v2575
      %v2754 = vunpack.c.l.bf16 %v2576
      %v2755 = vunpack.c.h.bf16 %v2576
      %v2756 = vunpack.c.l.bf16 %v2577
      %v2757 = vunpack.c.h.bf16 %v2577
      %v2758 = vunpack.c.l.bf16 %v2578
      %v2759 = vunpack.c.h.bf16 %v2578
      %v2760 = vunpack.c.l.bf16 %v2579
      %v2761 = vunpack.c.h.bf16 %v2579
      %v2762 = vunpack.c.l.bf16 %v2580
      %v2763 = vunpack.c.h.bf16 %v2580
      %v2764 = vunpack.c.l.bf16 %v2581
      %v2765 = vunpack.c.h.bf16 %v2581
      %v2766 = vunpack.c.l.bf16 %v2582
      %v2767 = vunpack.c.h.bf16 %v2582
      %v2768 = vunpack.c.l.bf16 %v2583
      %v2769 = vunpack.c.h.bf16 %v2583
      %v2770 = vunpack.c.l.bf16 %v2584
      %v2771 = vunpack.c.h.bf16 %v2584
      %v2772 = vunpack.c.l.bf16 %v2585
      %v2773 = vunpack.c.h.bf16 %v2585
      %v2774 = vunpack.c.l.bf16 %v2586
      %v2775 = vunpack.c.h.bf16 %v2586
      %v2776 = vunpack.c.l.bf16 %v2587
      %v2777 = vunpack.c.h.bf16 %v2587
      %v2778 = vunpack.c.l.bf16 %v2588
      %v2779 = vunpack.c.h.bf16 %v2588
      %v2780 = vunpack.c.l.bf16 %v2589
      %v2781 = vunpack.c.h.bf16 %v2589
      %v2782 = vunpack.c.l.bf16 %v2590
      %v2783 = vunpack.c.h.bf16 %v2590
      %v2784 = vunpack.c.l.bf16 %v2591
      %v2785 = vunpack.c.h.bf16 %v2591
      %v2786 = vunpack.c.l.bf16 %v2592
      %v2787 = vunpack.c.h.bf16 %v2592
      %v2788 = vunpack.c.l.bf16 %v2593
      %v2789 = vunpack.c.h.bf16 %v2593
      %v2790 = vunpack.c.l.bf16 %v2594
      %v2791 = vunpack.c.h.bf16 %v2594
      %v2792 = vunpack.c.l.bf16 %v2595
      %v2793 = vunpack.c.h.bf16 %v2595
      %v2794 = vunpack.c.l.bf16 %v2596
      %v2795 = vunpack.c.h.bf16 %v2596
      %v2796 = vunpack.c.l.bf16 %v2597
      %v2797 = vunpack.c.h.bf16 %v2597
      %v2798 = vunpack.c.l.bf16 %v2598
      %v2799 = vunpack.c.h.bf16 %v2598
      %v2800 = vunpack.c.l.bf16 %v2599
      %v2801 = vunpack.c.h.bf16 %v2599
      %v2802 = vunpack.c.l.bf16 %v2600
      %v2803 = vunpack.c.h.bf16 %v2600
      %v2804 = vunpack.c.l.bf16 %v2601
      %v2805 = vunpack.c.h.bf16 %v2601
      %v2806 = vunpack.c.l.bf16 %v2602
      %v2807 = vunpack.c.h.bf16 %v2602
      %v2808 = vunpack.c.l.bf16 %v2603
      %v2809 = vunpack.c.h.bf16 %v2603
      %v2810 = vunpack.c.l.bf16 %v2604
      %v2811 = vunpack.c.h.bf16 %v2604
      %v2812 = vunpack.c.l.bf16 %v2605
      %v2813 = vunpack.c.h.bf16 %v2605
      %v2814 = vunpack.c.l.bf16 %v2606
      %v2815 = vunpack.c.h.bf16 %v2606
      %v2816 = vunpack.c.l.bf16 %v2607
      %v2817 = vunpack.c.h.bf16 %v2607
      %v2818 = vunpack.c.l.bf16 %v2608
      %v2819 = vunpack.c.h.bf16 %v2608
      %v2820 = vunpack.c.l.bf16 %v2609
      %v2821 = vunpack.c.h.bf16 %v2609
      %v2822 = vunpack.c.l.bf16 %v2610
      %v2823 = vunpack.c.h.bf16 %v2610
      %v2824 = vunpack.c.l.bf16 %v2611
      %v2825 = vunpack.c.h.bf16 %v2611
      %v2826 = vunpack.c.l.bf16 %v2612
      %v2827 = vunpack.c.h.bf16 %v2612
      %v2828 = vunpack.c.l.bf16 %v2613
      %v2829 = vunpack.c.h.bf16 %v2613
      %v2830 = vunpack.c.l.bf16 %v2614
      %v2831 = vunpack.c.h.bf16 %v2614
      %v2832 = vunpack.c.l.bf16 %v2615
      %v2833 = vunpack.c.h.bf16 %v2615
      %v2834 = vunpack.c.l.bf16 %v2616
      %v2835 = vunpack.c.h.bf16 %v2616
      %v2836 = vunpack.c.l.bf16 %v2617
      %v2837 = vunpack.c.h.bf16 %v2617
      %v2838 = vunpack.c.l.bf16 %v2618
      %v2839 = vunpack.c.h.bf16 %v2618
      %v2840 = vunpack.c.l.bf16 %v2619
      %v2841 = vunpack.c.h.bf16 %v2619
      %v2842 = vunpack.c.l.bf16 %v2620
      %v2843 = vunpack.c.h.bf16 %v2620
      %v2844 = vunpack.c.l.bf16 %v2621
      %v2845 = vunpack.c.h.bf16 %v2621
      %v2846 = vunpack.c.l.bf16 %v2622
      %v2847 = vunpack.c.h.bf16 %v2622
      %v2848 = vunpack.c.l.bf16 %v2623
      %v2849 = vunpack.c.h.bf16 %v2623
      %v2850 = vunpack.c.l.bf16 %v2624
      %v2851 = vunpack.c.h.bf16 %v2624
      %v2852 = vunpack.c.l.bf16 %v2625
      %v2853 = vunpack.c.h.bf16 %v2625
      %v2854 = vunpack.c.l.bf16 %v2626
      %v2855 = vunpack.c.h.bf16 %v2626
      %v2856 = vunpack.c.l.bf16 %v2627
      %v2857 = vunpack.c.h.bf16 %v2627
      %v2858 = vunpack.c.l.bf16 %v2628
      %v2859 = vunpack.c.h.bf16 %v2628
      %v2860 = vunpack.c.l.bf16 %v2629
      %v2861 = vunpack.c.h.bf16 %v2629
      %v2862 = vunpack.c.l.bf16 %v2630
      %v2863 = vunpack.c.h.bf16 %v2630
      %v2864 = vunpack.c.l.bf16 %v2631
      %v2865 = vunpack.c.h.bf16 %v2631
      %v2866 = vunpack.c.l.bf16 %v2632
      %v2867 = vunpack.c.h.bf16 %v2632
      %v2868 = vunpack.c.l.bf16 %v2633
      %v2869 = vunpack.c.h.bf16 %v2633
      %v2870 = vunpack.c.l.bf16 %v2634
      %v2871 = vunpack.c.h.bf16 %v2634
      %v2872 = vunpack.c.l.bf16 %v2635
      %v2873 = vunpack.c.h.bf16 %v2635
      %v2874 = vunpack.c.l.bf16 %v2636
      %v2875 = vunpack.c.h.bf16 %v2636
      %v2876 = vunpack.c.l.bf16 %v2637
      %v2877 = vunpack.c.h.bf16 %v2637
      %v2878 = vunpack.c.l.bf16 %v2638
      %v2879 = vunpack.c.h.bf16 %v2638
      %v2880 = vunpack.c.l.bf16 %v2639
      %v2881 = vunpack.c.h.bf16 %v2639
      %v2882 = vunpack.c.l.bf16 %v2640
      %v2883 = vunpack.c.h.bf16 %v2640
      %v2884 = vunpack.c.l.bf16 %v2641
      %v2885 = vunpack.c.h.bf16 %v2641
      %v2886 = vunpack.c.l.bf16 %v2642
      %v2887 = vunpack.c.h.bf16 %v2642
      %v2888 = vunpack.c.l.bf16 %v2643
      %v2889 = vunpack.c.h.bf16 %v2643
      %v2890 = vunpack.c.l.bf16 %v2644
      %v2891 = vunpack.c.h.bf16 %v2644
      %v2892 = vunpack.c.l.bf16 %v2645
      %v2893 = vunpack.c.h.bf16 %v2645
      %v2894 = vunpack.c.l.bf16 %v2646
      %v2895 = vunpack.c.h.bf16 %v2646
      %v2896 = vunpack.c.l.bf16 %v2647
      %v2897 = vunpack.c.h.bf16 %v2647
      %v2898 = vunpack.c.l.bf16 %v2648
      %v2899 = vunpack.c.h.bf16 %v2648
      %v2900 = vunpack.c.l.bf16 %v2649
      %v2901 = vunpack.c.h.bf16 %v2649
      %v2902 = vunpack.c.l.bf16 %v2650
      %v2903 = vunpack.c.h.bf16 %v2650
      %v2904 = vunpack.c.l.bf16 %v2651
      %v2905 = vunpack.c.h.bf16 %v2651
      %v2906 = vunpack.c.l.bf16 %v2652
      %v2907 = vunpack.c.h.bf16 %v2652
      %v2908 = vunpack.c.l.bf16 %v2653
      %v2909 = vunpack.c.h.bf16 %v2653
      %v2910 = vunpack.c.l.bf16 %v2654
      %v2911 = vunpack.c.h.bf16 %v2654
      %v2912 = vunpack.c.l.bf16 %v2655
      %v2913 = vunpack.c.h.bf16 %v2655
      %v2914 = vunpack.c.l.bf16 %v2656
      %v2915 = vunpack.c.h.bf16 %v2656
      %v2916 = vunpack.c.l.bf16 %v2657
      %v2917 = vunpack.c.h.bf16 %v2657
      %v2918 = vunpack.c.l.bf16 %v2658
      %v2919 = vunpack.c.h.bf16 %v2658
      %v2920 = vunpack.c.l.bf16 %v2659
      %v2921 = vunpack.c.h.bf16 %v2659
      %v2922 = vunpack.c.l.bf16 %v2660
      %v2923 = vunpack.c.h.bf16 %v2660
      %v2924 = vunpack.c.l.bf16 %v2661
      %v2925 = vunpack.c.h.bf16 %v2661
      %v2926 = vunpack.c.l.bf16 %v2662
      %v2927 = vunpack.c.h.bf16 %v2662
      %v2928 = vunpack.c.l.bf16 %v2663
      %v2929 = vunpack.c.h.bf16 %v2663
      %v2930 = vunpack.c.l.bf16 %v2664
      %v2931 = vunpack.c.h.bf16 %v2664
      %v2932 = vunpack.c.l.bf16 %v2665
      %v2933 = vunpack.c.h.bf16 %v2665
      %v2934 = vunpack.c.l.bf16 %v2666
      %v2935 = vunpack.c.h.bf16 %v2666
      %v2936 = vunpack.c.l.bf16 %v2667
      %v2937 = vunpack.c.h.bf16 %v2667
      %v2938 = vunpack.c.l.bf16 %v2668
      %v2939 = vunpack.c.h.bf16 %v2668
      %v2940 = vunpack.c.l.bf16 %v2669
      %v2941 = vunpack.c.h.bf16 %v2669
      %v2942 = vunpack.c.l.bf16 %v2670
      %v2943 = vunpack.c.h.bf16 %v2670
      %v2944 = vunpack.c.l.bf16 %v2671
      %v2945 = vunpack.c.h.bf16 %v2671
      %v2946 = vunpack.c.l.bf16 %v2672
      %v2947 = vunpack.c.h.bf16 %v2672
      %v2948 = vunpack.c.l.bf16 %v2673
      %v2949 = vunpack.c.h.bf16 %v2673
      %v2950 = vunpack.c.l.bf16 %v2674
      %v2951 = vunpack.c.h.bf16 %v2674
      %v2952 = vunpack.c.l.bf16 %v2675
      %v2953 = vunpack.c.h.bf16 %v2675
      %v2954 = vunpack.c.l.bf16 %v2676
      %v2955 = vunpack.c.h.bf16 %v2676
      %v2956 = vunpack.c.l.bf16 %v2677
      %v2957 = vunpack.c.h.bf16 %v2677
      %v2958 = vunpack.c.l.bf16 %v2678
      %v2959 = vunpack.c.h.bf16 %v2678
      %v2960 = vunpack.c.l.bf16 %v2679
      %v2961 = vunpack.c.h.bf16 %v2679
      %v2962 = vunpack.c.l.bf16 %v2680
      %v2963 = vunpack.c.h.bf16 %v2680
      %v2964 = vunpack.c.l.bf16 %v2681
      %v2965 = vunpack.c.h.bf16 %v2681
      %v2966 = vunpack.c.l.bf16 %v2682
      %v2967 = vunpack.c.h.bf16 %v2682
      %v2968 = vunpack.c.l.bf16 %v2683
      %v2969 = vunpack.c.h.bf16 %v2683
      %v2970 = vunpack.c.l.bf16 %v2684
      %v2971 = vunpack.c.h.bf16 %v2684
      %v2972 = vunpack.c.l.bf16 %v2685
      %v2973 = vunpack.c.h.bf16 %v2685
      %v2974 = vunpack.c.l.bf16 %v2686
      %v2975 = vunpack.c.h.bf16 %v2686
      %v2976 = vunpack.c.l.bf16 %v2687
      %v2977 = vunpack.c.h.bf16 %v2687
      %v2978 = vunpack.c.l.bf16 %v2688
      %v2979 = vunpack.c.h.bf16 %v2688
      %v2980 = vunpack.c.l.bf16 %v2689
      %v2981 = vunpack.c.h.bf16 %v2689
      %v2982 = vunpack.c.l.bf16 %v2690
      %v2983 = vunpack.c.h.bf16 %v2690
      %v2984 = vunpack.c.l.bf16 %v2691
      %v2985 = vunpack.c.h.bf16 %v2691
      %v2986 = vunpack.c.l.bf16 %v2692
      %v2987 = vunpack.c.h.bf16 %v2692
      %v2988 = vunpack.c.l.bf16 %v2693
      %v2989 = vunpack.c.h.bf16 %v2693
      %v2990 = vunpack.c.l.bf16 %v2694
      %v2991 = vunpack.c.h.bf16 %v2694
      %v2992 = vunpack.c.l.bf16 %v2695
      %v2993 = vunpack.c.h.bf16 %v2695
      %v2994 = vunpack.c.l.bf16 %v2696
      %v2995 = vunpack.c.h.bf16 %v2696
      %v2996 = vunpack.c.l.bf16 %v2697
      %v2997 = vunpack.c.h.bf16 %v2697
      %v2998 = vunpack.c.l.bf16 %v2698
      %v2999 = vunpack.c.h.bf16 %v2698
      %v3000 = vunpack.c.l.bf16 %v2699
      %v3001 = vunpack.c.h.bf16 %v2699
      %v3002 = vunpack.c.l.bf16 %v2700
      %v3003 = vunpack.c.h.bf16 %v2700
      %v3004 = vunpack.c.l.bf16 %v2701
      %v3005 = vunpack.c.h.bf16 %v2701
      %v3006 = vunpack.c.l.bf16 %v2702
      %v3007 = vunpack.c.h.bf16 %v2702
      %v3008 = vunpack.c.l.bf16 %v2703
      %v3009 = vunpack.c.h.bf16 %v2703
      %v3010 = vunpack.c.l.bf16 %v2704
      %v3011 = vunpack.c.h.bf16 %v2704
      %v3012 = vunpack.c.l.bf16 %v2705
      %v3013 = vunpack.c.h.bf16 %v2705
      %v3014 = vunpack.c.l.bf16 %v2706
      %v3015 = vunpack.c.h.bf16 %v2706
      %v3016 = vunpack.c.l.bf16 %v2707
      %v3017 = vunpack.c.h.bf16 %v2707
      %v3018 = vunpack.c.l.bf16 %v2708
      %v3019 = vunpack.c.h.bf16 %v2708
      %v3020 = vunpack.c.l.bf16 %v2709
      %v3021 = vunpack.c.h.bf16 %v2709
      %v3022 = vunpack.c.l.bf16 %v2710
      %v3023 = vunpack.c.h.bf16 %v2710
      %v3024 = vunpack.c.l.bf16 %v2711
      %v3025 = vunpack.c.h.bf16 %v2711
      %v3026 = vunpack.c.l.bf16 %v2712
      %v3027 = vunpack.c.h.bf16 %v2712
      %v3028 = vunpack.c.l.bf16 %v2713
      %v3029 = vunpack.c.h.bf16 %v2713
      %v3030 = vunpack.c.l.bf16 %v2714
      %v3031 = vunpack.c.h.bf16 %v2714
      %v3032 = vunpack.c.l.bf16 %v2715
      %v3033 = vunpack.c.h.bf16 %v2715
      %v3034 = vunpack.c.l.bf16 %v2716
      %v3035 = vunpack.c.h.bf16 %v2716
      %v3036 = vunpack.c.l.bf16 %v2717
      %v3037 = vunpack.c.h.bf16 %v2717
      %v3038 = vtanh.pop %v2718
      %v3039 = vtanh.pop %v2719
      %v3040 = vtanh.pop %v2720
      %v3041 = vtanh.pop %v2721
      %v3042 = vtanh.pop %v2722
      %v3043 = vtanh.pop %v2723
      %v3044 = vtanh.pop %v2724
      %v3045 = vtanh.pop %v2725
      %v3046 = vtanh.pop %v2726
      %v3047 = vtanh.pop %v2727
      %v3048 = vtanh.pop %v2728
      %v3049 = vtanh.pop %v2729
      %v3050 = vtanh.pop %v2730
      %v3051 = vtanh.pop %v2731
      %v3052 = vtanh.pop %v2732
      %v3053 = vtanh.pop %v2733
      %v3054 = vtanh.pop %v2734
      %v3055 = vtanh.pop %v2735
      %v3056 = vtanh.pop %v2736
      %v3057 = vtanh.pop %v2737
      %v3058 = vtanh.pop %v2738
      %v3059 = vtanh.pop %v2739
      %v3060 = vtanh.pop %v2740
      %v3061 = vtanh.pop %v2741
      %v3062 = vtanh.pop %v2742
      %v3063 = vtanh.pop %v2743
      %v3064 = vtanh.pop %v2744
      %v3065 = vtanh.pop %v2745
      %v3066 = vtanh.pop %v2746
      %v3067 = vtanh.pop %v2747
      %v3068 = vtanh.pop %v2748
      %v3069 = vtanh.pop %v2749
      %v3070 = vtanh.pop %v2750
      %v3071 = vtanh.pop %v2751
      %v3072 = vtanh.pop %v2752
      %v3073 = vtanh.pop %v2753
      %v3074 = vtanh.pop %v2754
      %v3075 = vtanh.pop %v2755
      %v3076 = vtanh.pop %v2756
      %v3077 = vtanh.pop %v2757
      %v3078 = vtanh.pop %v2758
      %v3079 = vtanh.pop %v2759
      %v3080 = vtanh.pop %v2760
      %v3081 = vtanh.pop %v2761
      %v3082 = vtanh.pop %v2762
      %v3083 = vtanh.pop %v2763
      %v3084 = vtanh.pop %v2764
      %v3085 = vtanh.pop %v2765
      %v3086 = vtanh.pop %v2766
      %v3087 = vtanh.pop %v2767
      %v3088 = vtanh.pop %v2768
      %v3089 = vtanh.pop %v2769
      %v3090 = vtanh.pop %v2770
      %v3091 = vtanh.pop %v2771
      %v3092 = vtanh.pop %v2772
      %v3093 = vtanh.pop %v2773
      %v3094 = vtanh.pop %v2774
      %v3095 = vtanh.pop %v2775
      %v3096 = vtanh.pop %v2776
      %v3097 = vtanh.pop %v2777
      %v3098 = vtanh.pop %v2778
      %v3099 = vtanh.pop %v2779
      %v3100 = vtanh.pop %v2780
      %v3101 = vtanh.pop %v2781
      %v3102 = vtanh.pop %v2782
      %v3103 = vtanh.pop %v2783
      %v3104 = vtanh.pop %v2784
      %v3105 = vtanh.pop %v2785
      %v3106 = vtanh.pop %v2786
      %v3107 = vtanh.pop %v2787
      %v3108 = vtanh.pop %v2788
      %v3109 = vtanh.pop %v2789
      %v3110 = vtanh.pop %v2790
      %v3111 = vtanh.pop %v2791
      %v3112 = vtanh.pop %v2792
      %v3113 = vtanh.pop %v2793
      %v3114 = vtanh.pop %v2794
      %v3115 = vtanh.pop %v2795
      %v3116 = vtanh.pop %v2796
      %v3117 = vtanh.pop %v2797
      %v3118 = vtanh.pop %v2798
      %v3119 = vtanh.pop %v2799
      %v3120 = vtanh.pop %v2800
      %v3121 = vtanh.pop %v2801
      %v3122 = vtanh.pop %v2802
      %v3123 = vtanh.pop %v2803
      %v3124 = vtanh.pop %v2804
      %v3125 = vtanh.pop %v2805
      %v3126 = vtanh.pop %v2806
      %v3127 = vtanh.pop %v2807
      %v3128 = vtanh.pop %v2808
      %v3129 = vtanh.pop %v2809
      %v3130 = vtanh.pop %v2810
      %v3131 = vtanh.pop %v2811
      %v3132 = vtanh.pop %v2812
      %v3133 = vtanh.pop %v2813
      %v3134 = vtanh.pop %v2814
      %v3135 = vtanh.pop %v2815
      %v3136 = vtanh.pop %v2816
      %v3137 = vtanh.pop %v2817
      %v3138 = vtanh.pop %v2818
      %v3139 = vtanh.pop %v2819
      %v3140 = vtanh.pop %v2820
      %v3141 = vtanh.pop %v2821
      %v3142 = vtanh.pop %v2822
      %v3143 = vtanh.pop %v2823
      %v3144 = vtanh.pop %v2824
      %v3145 = vtanh.pop %v2825
      %v3146 = vtanh.pop %v2826
      %v3147 = vtanh.pop %v2827
      %v3148 = vtanh.pop %v2828
      %v3149 = vtanh.pop %v2829
      %v3150 = vtanh.pop %v2830
      %v3151 = vtanh.pop %v2831
      %v3152 = vtanh.pop %v2832
      %v3153 = vtanh.pop %v2833
      %v3154 = vtanh.pop %v2834
      %v3155 = vtanh.pop %v2835
      %v3156 = vtanh.pop %v2836
      %v3157 = vtanh.pop %v2837
      %v3158 = vtanh.pop %v2838
      %v3159 = vtanh.pop %v2839
      %v3160 = vtanh.pop %v2840
      %v3161 = vtanh.pop %v2841
      %v3162 = vtanh.pop %v2842
      %v3163 = vtanh.pop %v2843
      %v3164 = vtanh.pop %v2844
      %v3165 = vtanh.pop %v2845
      %v3166 = vtanh.pop %v2846
      %v3167 = vtanh.pop %v2847
      %v3168 = vtanh.pop %v2848
      %v3169 = vtanh.pop %v2849
      %v3170 = vtanh.pop %v2850
      %v3171 = vtanh.pop %v2851
      %v3172 = vtanh.pop %v2852
      %v3173 = vtanh.pop %v2853
      %v3174 = vtanh.pop %v2854
      %v3175 = vtanh.pop %v2855
      %v3176 = vtanh.pop %v2856
      %v3177 = vtanh.pop %v2857
      %v3178 = vtanh.pop %v2858
      %v3179 = vtanh.pop %v2859
      %v3180 = vtanh.pop %v2860
      %v3181 = vtanh.pop %v2861
      %v3182 = vtanh.pop %v2862
      %v3183 = vtanh.pop %v2863
      %v3184 = vtanh.pop %v2864
      %v3185 = vtanh.pop %v2865
      %v3186 = vtanh.pop %v2866
      %v3187 = vtanh.pop %v2867
      %v3188 = vtanh.pop %v2868
      %v3189 = vtanh.pop %v2869
      %v3190 = vtanh.pop %v2870
      %v3191 = vtanh.pop %v2871
      %v3192 = vtanh.pop %v2872
      %v3193 = vtanh.pop %v2873
      %v3194 = vtanh.pop %v2874
      %v3195 = vtanh.pop %v2875
      %v3196 = vtanh.pop %v2876
      %v3197 = vtanh.pop %v2877
      %v3198 = vtanh.pop %v2878
      %v3199 = vtanh.pop %v2879
      %v3200 = vtanh.pop %v2880
      %v3201 = vtanh.pop %v2881
      %v3202 = vtanh.pop %v2882
      %v3203 = vtanh.pop %v2883
      %v3204 = vtanh.pop %v2884
      %v3205 = vtanh.pop %v2885
      %v3206 = vtanh.pop %v2886
      %v3207 = vtanh.pop %v2887
      %v3208 = vtanh.pop %v2888
      %v3209 = vtanh.pop %v2889
      %v3210 = vtanh.pop %v2890
      %v3211 = vtanh.pop %v2891
      %v3212 = vtanh.pop %v2892
      %v3213 = vtanh.pop %v2893
      %v3214 = vtanh.pop %v2894
      %v3215 = vtanh.pop %v2895
      %v3216 = vtanh.pop %v2896
      %v3217 = vtanh.pop %v2897
      %v3218 = vtanh.pop %v2898
      %v3219 = vtanh.pop %v2899
      %v3220 = vtanh.pop %v2900
      %v3221 = vtanh.pop %v2901
      %v3222 = vtanh.pop %v2902
      %v3223 = vtanh.pop %v2903
      %v3224 = vtanh.pop %v2904
      %v3225 = vtanh.pop %v2905
      %v3226 = vtanh.pop %v2906
      %v3227 = vtanh.pop %v2907
      %v3228 = vtanh.pop %v2908
      %v3229 = vtanh.pop %v2909
      %v3230 = vtanh.pop %v2910
      %v3231 = vtanh.pop %v2911
      %v3232 = vtanh.pop %v2912
      %v3233 = vtanh.pop %v2913
      %v3234 = vtanh.pop %v2914
      %v3235 = vtanh.pop %v2915
      %v3236 = vtanh.pop %v2916
      %v3237 = vtanh.pop %v2917
      %v3238 = vtanh.pop %v2918
      %v3239 = vtanh.pop %v2919
      %v3240 = vtanh.pop %v2920
      %v3241 = vtanh.pop %v2921
      %v3242 = vtanh.pop %v2922
      %v3243 = vtanh.pop %v2923
      %v3244 = vtanh.pop %v2924
      %v3245 = vtanh.pop %v2925
      %v3246 = vtanh.pop %v2926
      %v3247 = vtanh.pop %v2927
      %v3248 = vtanh.pop %v2928
      %v3249 = vtanh.pop %v2929
      %v3250 = vtanh.pop %v2930
      %v3251 = vtanh.pop %v2931
      %v3252 = vtanh.pop %v2932
      %v3253 = vtanh.pop %v2933
      %v3254 = vtanh.pop %v2934
      %v3255 = vtanh.pop %v2935
      %v3256 = vtanh.pop %v2936
      %v3257 = vtanh.pop %v2937
      %v3258 = vtanh.pop %v2938
      %v3259 = vtanh.pop %v2939
      %v3260 = vtanh.pop %v2940
      %v3261 = vtanh.pop %v2941
      %v3262 = vtanh.pop %v2942
      %v3263 = vtanh.pop %v2943
      %v3264 = vtanh.pop %v2944
      %v3265 = vtanh.pop %v2945
      %v3266 = vtanh.pop %v2946
      %v3267 = vtanh.pop %v2947
      %v3268 = vtanh.pop %v2948
      %v3269 = vtanh.pop %v2949
      %v3270 = vtanh.pop %v2950
      %v3271 = vtanh.pop %v2951
      %v3272 = vtanh.pop %v2952
      %v3273 = vtanh.pop %v2953
      %v3274 = vtanh.pop %v2954
      %v3275 = vtanh.pop %v2955
      %v3276 = vtanh.pop %v2956
      %v3277 = vtanh.pop %v2957
      %v3278 = vtanh.pop %v2958
      %v3279 = vtanh.pop %v2959
      %v3280 = vtanh.pop %v2960
      %v3281 = vtanh.pop %v2961
      %v3282 = vtanh.pop %v2962
      %v3283 = vtanh.pop %v2963
      %v3284 = vtanh.pop %v2964
      %v3285 = vtanh.pop %v2965
      %v3286 = vtanh.pop %v2966
      %v3287 = vtanh.pop %v2967
      %v3288 = vtanh.pop %v2968
      %v3289 = vtanh.pop %v2969
      %v3290 = vtanh.pop %v2970
      %v3291 = vtanh.pop %v2971
      %v3292 = vtanh.pop %v2972
      %v3293 = vtanh.pop %v2973
      %v3294 = vtanh.pop %v2974
      %v3295 = vtanh.pop %v2975
      %v3296 = vtanh.pop %v2976
      %v3297 = vtanh.pop %v2977
      %v3298 = vtanh.pop %v2978
      %v3299 = vtanh.pop %v2979
      %v3300 = vtanh.pop %v2980
      %v3301 = vtanh.pop %v2981
      %v3302 = vtanh.pop %v2982
      %v3303 = vtanh.pop %v2983
      %v3304 = vtanh.pop %v2984
      %v3305 = vtanh.pop %v2985
      %v3306 = vtanh.pop %v2986
      %v3307 = vtanh.pop %v2987
      %v3308 = vtanh.pop %v2988
      %v3309 = vtanh.pop %v2989
      %v3310 = vtanh.pop %v2990
      %v3311 = vtanh.pop %v2991
      %v3312 = vtanh.pop %v2992
      %v3313 = vtanh.pop %v2993
      %v3314 = vtanh.pop %v2994
      %v3315 = vtanh.pop %v2995
      %v3316 = vtanh.pop %v2996
      %v3317 = vtanh.pop %v2997
      %v3318 = vtanh.pop %v2998
      %v3319 = vtanh.pop %v2999
      %v3320 = vtanh.pop %v3000
      %v3321 = vtanh.pop %v3001
      %v3322 = vtanh.pop %v3002
      %v3323 = vtanh.pop %v3003
      %v3324 = vtanh.pop %v3004
      %v3325 = vtanh.pop %v3005
      %v3326 = vtanh.pop %v3006
      %v3327 = vtanh.pop %v3007
      %v3328 = vtanh.pop %v3008
      %v3329 = vtanh.pop %v3009
      %v3330 = vtanh.pop %v3010
      %v3331 = vtanh.pop %v3011
      %v3332 = vtanh.pop %v3012
      %v3333 = vtanh.pop %v3013
      %v3334 = vtanh.pop %v3014
      %v3335 = vtanh.pop %v3015
      %v3336 = vtanh.pop %v3016
      %v3337 = vtanh.pop %v3017
      %v3338 = vtanh.pop %v3018
      %v3339 = vtanh.pop %v3019
      %v3340 = vtanh.pop %v3020
      %v3341 = vtanh.pop %v3021
      %v3342 = vtanh.pop %v3022
      %v3343 = vtanh.pop %v3023
      %v3344 = vtanh.pop %v3024
      %v3345 = vtanh.pop %v3025
      %v3346 = vtanh.pop %v3026
      %v3347 = vtanh.pop %v3027
      %v3348 = vtanh.pop %v3028
      %v3349 = vtanh.pop %v3029
      %v3350 = vtanh.pop %v3030
      %v3351 = vtanh.pop %v3031
      %v3352 = vtanh.pop %v3032
      %v3353 = vtanh.pop %v3033
      %v3354 = vtanh.pop %v3034
      %v3355 = vtanh.pop %v3035
      %v3356 = vtanh.pop %v3036
      %v3357 = vtanh.pop %v3037
      %v3358 = vpack.c.bf16 %v3039, %v3038
      %v3359 = vpack.c.bf16 %v3041, %v3040
      %v3360 = vpack.c.bf16 %v3043, %v3042
      %v3361 = vpack.c.bf16 %v3045, %v3044
      %v3362 = vpack.c.bf16 %v3047, %v3046
      %v3363 = vpack.c.bf16 %v3049, %v3048
      %v3364 = vpack.c.bf16 %v3051, %v3050
      %v3365 = vpack.c.bf16 %v3053, %v3052
      %v3366 = vpack.c.bf16 %v3055, %v3054
      %v3367 = vpack.c.bf16 %v3057, %v3056
      %v3368 = vpack.c.bf16 %v3059, %v3058
      %v3369 = vpack.c.bf16 %v3061, %v3060
      %v3370 = vpack.c.bf16 %v3063, %v3062
      %v3371 = vpack.c.bf16 %v3065, %v3064
      %v3372 = vpack.c.bf16 %v3067, %v3066
      %v3373 = vpack.c.bf16 %v3069, %v3068
      %v3374 = vpack.c.bf16 %v3071, %v3070
      %v3375 = vpack.c.bf16 %v3073, %v3072
      %v3376 = vpack.c.bf16 %v3075, %v3074
      %v3377 = vpack.c.bf16 %v3077, %v3076
      %v3378 = vpack.c.bf16 %v3079, %v3078
      %v3379 = vpack.c.bf16 %v3081, %v3080
      %v3380 = vpack.c.bf16 %v3083, %v3082
      %v3381 = vpack.c.bf16 %v3085, %v3084
      %v3382 = vpack.c.bf16 %v3087, %v3086
      %v3383 = vpack.c.bf16 %v3089, %v3088
      %v3384 = vpack.c.bf16 %v3091, %v3090
      %v3385 = vpack.c.bf16 %v3093, %v3092
      %v3386 = vpack.c.bf16 %v3095, %v3094
      %v3387 = vpack.c.bf16 %v3097, %v3096
      %v3388 = vpack.c.bf16 %v3099, %v3098
      %v3389 = vpack.c.bf16 %v3101, %v3100
      %v3390 = vpack.c.bf16 %v3103, %v3102
      %v3391 = vpack.c.bf16 %v3105, %v3104
      %v3392 = vpack.c.bf16 %v3107, %v3106
      %v3393 = vpack.c.bf16 %v3109, %v3108
      %v3394 = vpack.c.bf16 %v3111, %v3110
      %v3395 = vpack.c.bf16 %v3113, %v3112
      %v3396 = vpack.c.bf16 %v3115, %v3114
      %v3397 = vpack.c.bf16 %v3117, %v3116
      %v3398 = vpack.c.bf16 %v3119, %v3118
      %v3399 = vpack.c.bf16 %v3121, %v3120
      %v3400 = vpack.c.bf16 %v3123, %v3122
      %v3401 = vpack.c.bf16 %v3125, %v3124
      %v3402 = vpack.c.bf16 %v3127, %v3126
      %v3403 = vpack.c.bf16 %v3129, %v3128
      %v3404 = vpack.c.bf16 %v3131, %v3130
      %v3405 = vpack.c.bf16 %v3133, %v3132
      %v3406 = vpack.c.bf16 %v3135, %v3134
      %v3407 = vpack.c.bf16 %v3137, %v3136
      %v3408 = vpack.c.bf16 %v3139, %v3138
      %v3409 = vpack.c.bf16 %v3141, %v3140
      %v3410 = vpack.c.bf16 %v3143, %v3142
      %v3411 = vpack.c.bf16 %v3145, %v3144
      %v3412 = vpack.c.bf16 %v3147, %v3146
      %v3413 = vpack.c.bf16 %v3149, %v3148
      %v3414 = vpack.c.bf16 %v3151, %v3150
      %v3415 = vpack.c.bf16 %v3153, %v3152
      %v3416 = vpack.c.bf16 %v3155, %v3154
      %v3417 = vpack.c.bf16 %v3157, %v3156
      %v3418 = vpack.c.bf16 %v3159, %v3158
      %v3419 = vpack.c.bf16 %v3161, %v3160
      %v3420 = vpack.c.bf16 %v3163, %v3162
      %v3421 = vpack.c.bf16 %v3165, %v3164
      %v3422 = vpack.c.bf16 %v3167, %v3166
      %v3423 = vpack.c.bf16 %v3169, %v3168
      %v3424 = vpack.c.bf16 %v3171, %v3170
      %v3425 = vpack.c.bf16 %v3173, %v3172
      %v3426 = vpack.c.bf16 %v3175, %v3174
      %v3427 = vpack.c.bf16 %v3177, %v3176
      %v3428 = vpack.c.bf16 %v3179, %v3178
      %v3429 = vpack.c.bf16 %v3181, %v3180
      %v3430 = vpack.c.bf16 %v3183, %v3182
      %v3431 = vpack.c.bf16 %v3185, %v3184
      %v3432 = vpack.c.bf16 %v3187, %v3186
      %v3433 = vpack.c.bf16 %v3189, %v3188
      %v3434 = vpack.c.bf16 %v3191, %v3190
      %v3435 = vpack.c.bf16 %v3193, %v3192
      %v3436 = vpack.c.bf16 %v3195, %v3194
      %v3437 = vpack.c.bf16 %v3197, %v3196
      %v3438 = vpack.c.bf16 %v3199, %v3198
      %v3439 = vpack.c.bf16 %v3201, %v3200
      %v3440 = vpack.c.bf16 %v3203, %v3202
      %v3441 = vpack.c.bf16 %v3205, %v3204
      %v3442 = vpack.c.bf16 %v3207, %v3206
      %v3443 = vpack.c.bf16 %v3209, %v3208
      %v3444 = vpack.c.bf16 %v3211, %v3210
      %v3445 = vpack.c.bf16 %v3213, %v3212
      %v3446 = vpack.c.bf16 %v3215, %v3214
      %v3447 = vpack.c.bf16 %v3217, %v3216
      %v3448 = vpack.c.bf16 %v3219, %v3218
      %v3449 = vpack.c.bf16 %v3221, %v3220
      %v3450 = vpack.c.bf16 %v3223, %v3222
      %v3451 = vpack.c.bf16 %v3225, %v3224
      %v3452 = vpack.c.bf16 %v3227, %v3226
      %v3453 = vpack.c.bf16 %v3229, %v3228
      %v3454 = vpack.c.bf16 %v3231, %v3230
      %v3455 = vpack.c.bf16 %v3233, %v3232
      %v3456 = vpack.c.bf16 %v3235, %v3234
      %v3457 = vpack.c.bf16 %v3237, %v3236
      %v3458 = vpack.c.bf16 %v3239, %v3238
      %v3459 = vpack.c.bf16 %v3241, %v3240
      %v3460 = vpack.c.bf16 %v3243, %v3242
      %v3461 = vpack.c.bf16 %v3245, %v3244
      %v3462 = vpack.c.bf16 %v3247, %v3246
      %v3463 = vpack.c.bf16 %v3249, %v3248
      %v3464 = vpack.c.bf16 %v3251, %v3250
      %v3465 = vpack.c.bf16 %v3253, %v3252
      %v3466 = vpack.c.bf16 %v3255, %v3254
      %v3467 = vpack.c.bf16 %v3257, %v3256
      %v3468 = vpack.c.bf16 %v3259, %v3258
      %v3469 = vpack.c.bf16 %v3261, %v3260
      %v3470 = vpack.c.bf16 %v3263, %v3262
      %v3471 = vpack.c.bf16 %v3265, %v3264
      %v3472 = vpack.c.bf16 %v3267, %v3266
      %v3473 = vpack.c.bf16 %v3269, %v3268
      %v3474 = vpack.c.bf16 %v3271, %v3270
      %v3475 = vpack.c.bf16 %v3273, %v3272
      %v3476 = vpack.c.bf16 %v3275, %v3274
      %v3477 = vpack.c.bf16 %v3277, %v3276
      %v3478 = vpack.c.bf16 %v3279, %v3278
      %v3479 = vpack.c.bf16 %v3281, %v3280
      %v3480 = vpack.c.bf16 %v3283, %v3282
      %v3481 = vpack.c.bf16 %v3285, %v3284
      %v3482 = vpack.c.bf16 %v3287, %v3286
      %v3483 = vpack.c.bf16 %v3289, %v3288
      %v3484 = vpack.c.bf16 %v3291, %v3290
      %v3485 = vpack.c.bf16 %v3293, %v3292
      %v3486 = vpack.c.bf16 %v3295, %v3294
      %v3487 = vpack.c.bf16 %v3297, %v3296
      %v3488 = vpack.c.bf16 %v3299, %v3298
      %v3489 = vpack.c.bf16 %v3301, %v3300
      %v3490 = vpack.c.bf16 %v3303, %v3302
      %v3491 = vpack.c.bf16 %v3305, %v3304
      %v3492 = vpack.c.bf16 %v3307, %v3306
      %v3493 = vpack.c.bf16 %v3309, %v3308
      %v3494 = vpack.c.bf16 %v3311, %v3310
      %v3495 = vpack.c.bf16 %v3313, %v3312
      %v3496 = vpack.c.bf16 %v3315, %v3314
      %v3497 = vpack.c.bf16 %v3317, %v3316
      %v3498 = vpack.c.bf16 %v3319, %v3318
      %v3499 = vpack.c.bf16 %v3321, %v3320
      %v3500 = vpack.c.bf16 %v3323, %v3322
      %v3501 = vpack.c.bf16 %v3325, %v3324
      %v3502 = vpack.c.bf16 %v3327, %v3326
      %v3503 = vpack.c.bf16 %v3329, %v3328
      %v3504 = vpack.c.bf16 %v3331, %v3330
      %v3505 = vpack.c.bf16 %v3333, %v3332
      %v3506 = vpack.c.bf16 %v3335, %v3334
      %v3507 = vpack.c.bf16 %v3337, %v3336
      %v3508 = vpack.c.bf16 %v3339, %v3338
      %v3509 = vpack.c.bf16 %v3341, %v3340
      %v3510 = vpack.c.bf16 %v3343, %v3342
      %v3511 = vpack.c.bf16 %v3345, %v3344
      %v3512 = vpack.c.bf16 %v3347, %v3346
      %v3513 = vpack.c.bf16 %v3349, %v3348
      %v3514 = vpack.c.bf16 %v3351, %v3350
      %v3515 = vpack.c.bf16 %v3353, %v3352
      %v3516 = vpack.c.bf16 %v3355, %v3354
      %v3517 = vpack.c.bf16 %v3357, %v3356
      %v3518 = vunpack.c.l.bf16 %v3358
      %v3519 = vunpack.c.h.bf16 %v3358
      %v3520 = vunpack.c.l.bf16 %v3359
      %v3521 = vunpack.c.h.bf16 %v3359
      %v3522 = vunpack.c.l.bf16 %v3360
      %v3523 = vunpack.c.h.bf16 %v3360
      %v3524 = vunpack.c.l.bf16 %v3361
      %v3525 = vunpack.c.h.bf16 %v3361
      %v3526 = vunpack.c.l.bf16 %v3362
      %v3527 = vunpack.c.h.bf16 %v3362
      %v3528 = vunpack.c.l.bf16 %v3363
      %v3529 = vunpack.c.h.bf16 %v3363
      %v3530 = vunpack.c.l.bf16 %v3364
      %v3531 = vunpack.c.h.bf16 %v3364
      %v3532 = vunpack.c.l.bf16 %v3365
      %v3533 = vunpack.c.h.bf16 %v3365
      %v3534 = vunpack.c.l.bf16 %v3366
      %v3535 = vunpack.c.h.bf16 %v3366
      %v3536 = vunpack.c.l.bf16 %v3367
      %v3537 = vunpack.c.h.bf16 %v3367
      %v3538 = vunpack.c.l.bf16 %v3368
      %v3539 = vunpack.c.h.bf16 %v3368
      %v3540 = vunpack.c.l.bf16 %v3369
      %v3541 = vunpack.c.h.bf16 %v3369
      %v3542 = vunpack.c.l.bf16 %v3370
      %v3543 = vunpack.c.h.bf16 %v3370
      %v3544 = vunpack.c.l.bf16 %v3371
      %v3545 = vunpack.c.h.bf16 %v3371
      %v3546 = vunpack.c.l.bf16 %v3372
      %v3547 = vunpack.c.h.bf16 %v3372
      %v3548 = vunpack.c.l.bf16 %v3373
      %v3549 = vunpack.c.h.bf16 %v3373
      %v3550 = vunpack.c.l.bf16 %v3374
      %v3551 = vunpack.c.h.bf16 %v3374
      %v3552 = vunpack.c.l.bf16 %v3375
      %v3553 = vunpack.c.h.bf16 %v3375
      %v3554 = vunpack.c.l.bf16 %v3376
      %v3555 = vunpack.c.h.bf16 %v3376
      %v3556 = vunpack.c.l.bf16 %v3377
      %v3557 = vunpack.c.h.bf16 %v3377
      %v3558 = vunpack.c.l.bf16 %v3378
      %v3559 = vunpack.c.h.bf16 %v3378
      %v3560 = vunpack.c.l.bf16 %v3379
      %v3561 = vunpack.c.h.bf16 %v3379
      %v3562 = vunpack.c.l.bf16 %v3380
      %v3563 = vunpack.c.h.bf16 %v3380
      %v3564 = vunpack.c.l.bf16 %v3381
      %v3565 = vunpack.c.h.bf16 %v3381
      %v3566 = vunpack.c.l.bf16 %v3382
      %v3567 = vunpack.c.h.bf16 %v3382
      %v3568 = vunpack.c.l.bf16 %v3383
      %v3569 = vunpack.c.h.bf16 %v3383
      %v3570 = vunpack.c.l.bf16 %v3384
      %v3571 = vunpack.c.h.bf16 %v3384
      %v3572 = vunpack.c.l.bf16 %v3385
      %v3573 = vunpack.c.h.bf16 %v3385
      %v3574 = vunpack.c.l.bf16 %v3386
      %v3575 = vunpack.c.h.bf16 %v3386
      %v3576 = vunpack.c.l.bf16 %v3387
      %v3577 = vunpack.c.h.bf16 %v3387
      %v3578 = vunpack.c.l.bf16 %v3388
      %v3579 = vunpack.c.h.bf16 %v3388
      %v3580 = vunpack.c.l.bf16 %v3389
      %v3581 = vunpack.c.h.bf16 %v3389
      %v3582 = vunpack.c.l.bf16 %v3390
      %v3583 = vunpack.c.h.bf16 %v3390
      %v3584 = vunpack.c.l.bf16 %v3391
      %v3585 = vunpack.c.h.bf16 %v3391
      %v3586 = vunpack.c.l.bf16 %v3392
      %v3587 = vunpack.c.h.bf16 %v3392
      %v3588 = vunpack.c.l.bf16 %v3393
      %v3589 = vunpack.c.h.bf16 %v3393
      %v3590 = vunpack.c.l.bf16 %v3394
      %v3591 = vunpack.c.h.bf16 %v3394
      %v3592 = vunpack.c.l.bf16 %v3395
      %v3593 = vunpack.c.h.bf16 %v3395
      %v3594 = vunpack.c.l.bf16 %v3396
      %v3595 = vunpack.c.h.bf16 %v3396
      %v3596 = vunpack.c.l.bf16 %v3397
      %v3597 = vunpack.c.h.bf16 %v3397
      %v3598 = vunpack.c.l.bf16 %v3398
      %v3599 = vunpack.c.h.bf16 %v3398
      %v3600 = vunpack.c.l.bf16 %v3399
      %v3601 = vunpack.c.h.bf16 %v3399
      %v3602 = vunpack.c.l.bf16 %v3400
      %v3603 = vunpack.c.h.bf16 %v3400
      %v3604 = vunpack.c.l.bf16 %v3401
      %v3605 = vunpack.c.h.bf16 %v3401
      %v3606 = vunpack.c.l.bf16 %v3402
      %v3607 = vunpack.c.h.bf16 %v3402
      %v3608 = vunpack.c.l.bf16 %v3403
      %v3609 = vunpack.c.h.bf16 %v3403
      %v3610 = vunpack.c.l.bf16 %v3404
      %v3611 = vunpack.c.h.bf16 %v3404
      %v3612 = vunpack.c.l.bf16 %v3405
      %v3613 = vunpack.c.h.bf16 %v3405
      %v3614 = vunpack.c.l.bf16 %v3406
      %v3615 = vunpack.c.h.bf16 %v3406
      %v3616 = vunpack.c.l.bf16 %v3407
      %v3617 = vunpack.c.h.bf16 %v3407
      %v3618 = vunpack.c.l.bf16 %v3408
      %v3619 = vunpack.c.h.bf16 %v3408
      %v3620 = vunpack.c.l.bf16 %v3409
      %v3621 = vunpack.c.h.bf16 %v3409
      %v3622 = vunpack.c.l.bf16 %v3410
      %v3623 = vunpack.c.h.bf16 %v3410
      %v3624 = vunpack.c.l.bf16 %v3411
      %v3625 = vunpack.c.h.bf16 %v3411
      %v3626 = vunpack.c.l.bf16 %v3412
      %v3627 = vunpack.c.h.bf16 %v3412
      %v3628 = vunpack.c.l.bf16 %v3413
      %v3629 = vunpack.c.h.bf16 %v3413
      %v3630 = vunpack.c.l.bf16 %v3414
      %v3631 = vunpack.c.h.bf16 %v3414
      %v3632 = vunpack.c.l.bf16 %v3415
      %v3633 = vunpack.c.h.bf16 %v3415
      %v3634 = vunpack.c.l.bf16 %v3416
      %v3635 = vunpack.c.h.bf16 %v3416
      %v3636 = vunpack.c.l.bf16 %v3417
      %v3637 = vunpack.c.h.bf16 %v3417
      %v3638 = vunpack.c.l.bf16 %v3418
      %v3639 = vunpack.c.h.bf16 %v3418
      %v3640 = vunpack.c.l.bf16 %v3419
      %v3641 = vunpack.c.h.bf16 %v3419
      %v3642 = vunpack.c.l.bf16 %v3420
      %v3643 = vunpack.c.h.bf16 %v3420
      %v3644 = vunpack.c.l.bf16 %v3421
      %v3645 = vunpack.c.h.bf16 %v3421
      %v3646 = vunpack.c.l.bf16 %v3422
      %v3647 = vunpack.c.h.bf16 %v3422
      %v3648 = vunpack.c.l.bf16 %v3423
      %v3649 = vunpack.c.h.bf16 %v3423
      %v3650 = vunpack.c.l.bf16 %v3424
      %v3651 = vunpack.c.h.bf16 %v3424
      %v3652 = vunpack.c.l.bf16 %v3425
      %v3653 = vunpack.c.h.bf16 %v3425
      %v3654 = vunpack.c.l.bf16 %v3426
      %v3655 = vunpack.c.h.bf16 %v3426
      %v3656 = vunpack.c.l.bf16 %v3427
      %v3657 = vunpack.c.h.bf16 %v3427
      %v3658 = vunpack.c.l.bf16 %v3428
      %v3659 = vunpack.c.h.bf16 %v3428
      %v3660 = vunpack.c.l.bf16 %v3429
      %v3661 = vunpack.c.h.bf16 %v3429
      %v3662 = vunpack.c.l.bf16 %v3430
      %v3663 = vunpack.c.h.bf16 %v3430
      %v3664 = vunpack.c.l.bf16 %v3431
      %v3665 = vunpack.c.h.bf16 %v3431
      %v3666 = vunpack.c.l.bf16 %v3432
      %v3667 = vunpack.c.h.bf16 %v3432
      %v3668 = vunpack.c.l.bf16 %v3433
      %v3669 = vunpack.c.h.bf16 %v3433
      %v3670 = vunpack.c.l.bf16 %v3434
      %v3671 = vunpack.c.h.bf16 %v3434
      %v3672 = vunpack.c.l.bf16 %v3435
      %v3673 = vunpack.c.h.bf16 %v3435
      %v3674 = vunpack.c.l.bf16 %v3436
      %v3675 = vunpack.c.h.bf16 %v3436
      %v3676 = vunpack.c.l.bf16 %v3437
      %v3677 = vunpack.c.h.bf16 %v3437
      %v3678 = vunpack.c.l.bf16 %v3438
      %v3679 = vunpack.c.h.bf16 %v3438
      %v3680 = vunpack.c.l.bf16 %v3439
      %v3681 = vunpack.c.h.bf16 %v3439
      %v3682 = vunpack.c.l.bf16 %v3440
      %v3683 = vunpack.c.h.bf16 %v3440
      %v3684 = vunpack.c.l.bf16 %v3441
      %v3685 = vunpack.c.h.bf16 %v3441
      %v3686 = vunpack.c.l.bf16 %v3442
      %v3687 = vunpack.c.h.bf16 %v3442
      %v3688 = vunpack.c.l.bf16 %v3443
      %v3689 = vunpack.c.h.bf16 %v3443
      %v3690 = vunpack.c.l.bf16 %v3444
      %v3691 = vunpack.c.h.bf16 %v3444
      %v3692 = vunpack.c.l.bf16 %v3445
      %v3693 = vunpack.c.h.bf16 %v3445
      %v3694 = vunpack.c.l.bf16 %v3446
      %v3695 = vunpack.c.h.bf16 %v3446
      %v3696 = vunpack.c.l.bf16 %v3447
      %v3697 = vunpack.c.h.bf16 %v3447
      %v3698 = vunpack.c.l.bf16 %v3448
      %v3699 = vunpack.c.h.bf16 %v3448
      %v3700 = vunpack.c.l.bf16 %v3449
      %v3701 = vunpack.c.h.bf16 %v3449
      %v3702 = vunpack.c.l.bf16 %v3450
      %v3703 = vunpack.c.h.bf16 %v3450
      %v3704 = vunpack.c.l.bf16 %v3451
      %v3705 = vunpack.c.h.bf16 %v3451
      %v3706 = vunpack.c.l.bf16 %v3452
      %v3707 = vunpack.c.h.bf16 %v3452
      %v3708 = vunpack.c.l.bf16 %v3453
      %v3709 = vunpack.c.h.bf16 %v3453
      %v3710 = vunpack.c.l.bf16 %v3454
      %v3711 = vunpack.c.h.bf16 %v3454
      %v3712 = vunpack.c.l.bf16 %v3455
      %v3713 = vunpack.c.h.bf16 %v3455
      %v3714 = vunpack.c.l.bf16 %v3456
      %v3715 = vunpack.c.h.bf16 %v3456
      %v3716 = vunpack.c.l.bf16 %v3457
      %v3717 = vunpack.c.h.bf16 %v3457
      %v3718 = vunpack.c.l.bf16 %v3458
      %v3719 = vunpack.c.h.bf16 %v3458
      %v3720 = vunpack.c.l.bf16 %v3459
      %v3721 = vunpack.c.h.bf16 %v3459
      %v3722 = vunpack.c.l.bf16 %v3460
      %v3723 = vunpack.c.h.bf16 %v3460
      %v3724 = vunpack.c.l.bf16 %v3461
      %v3725 = vunpack.c.h.bf16 %v3461
      %v3726 = vunpack.c.l.bf16 %v3462
      %v3727 = vunpack.c.h.bf16 %v3462
      %v3728 = vunpack.c.l.bf16 %v3463
      %v3729 = vunpack.c.h.bf16 %v3463
      %v3730 = vunpack.c.l.bf16 %v3464
      %v3731 = vunpack.c.h.bf16 %v3464
      %v3732 = vunpack.c.l.bf16 %v3465
      %v3733 = vunpack.c.h.bf16 %v3465
      %v3734 = vunpack.c.l.bf16 %v3466
      %v3735 = vunpack.c.h.bf16 %v3466
      %v3736 = vunpack.c.l.bf16 %v3467
      %v3737 = vunpack.c.h.bf16 %v3467
      %v3738 = vunpack.c.l.bf16 %v3468
      %v3739 = vunpack.c.h.bf16 %v3468
      %v3740 = vunpack.c.l.bf16 %v3469
      %v3741 = vunpack.c.h.bf16 %v3469
      %v3742 = vunpack.c.l.bf16 %v3470
      %v3743 = vunpack.c.h.bf16 %v3470
      %v3744 = vunpack.c.l.bf16 %v3471
      %v3745 = vunpack.c.h.bf16 %v3471
      %v3746 = vunpack.c.l.bf16 %v3472
      %v3747 = vunpack.c.h.bf16 %v3472
      %v3748 = vunpack.c.l.bf16 %v3473
      %v3749 = vunpack.c.h.bf16 %v3473
      %v3750 = vunpack.c.l.bf16 %v3474
      %v3751 = vunpack.c.h.bf16 %v3474
      %v3752 = vunpack.c.l.bf16 %v3475
      %v3753 = vunpack.c.h.bf16 %v3475
      %v3754 = vunpack.c.l.bf16 %v3476
      %v3755 = vunpack.c.h.bf16 %v3476
      %v3756 = vunpack.c.l.bf16 %v3477
      %v3757 = vunpack.c.h.bf16 %v3477
      %v3758 = vunpack.c.l.bf16 %v3478
      %v3759 = vunpack.c.h.bf16 %v3478
      %v3760 = vunpack.c.l.bf16 %v3479
      %v3761 = vunpack.c.h.bf16 %v3479
      %v3762 = vunpack.c.l.bf16 %v3480
      %v3763 = vunpack.c.h.bf16 %v3480
      %v3764 = vunpack.c.l.bf16 %v3481
      %v3765 = vunpack.c.h.bf16 %v3481
      %v3766 = vunpack.c.l.bf16 %v3482
      %v3767 = vunpack.c.h.bf16 %v3482
      %v3768 = vunpack.c.l.bf16 %v3483
      %v3769 = vunpack.c.h.bf16 %v3483
      %v3770 = vunpack.c.l.bf16 %v3484
      %v3771 = vunpack.c.h.bf16 %v3484
      %v3772 = vunpack.c.l.bf16 %v3485
      %v3773 = vunpack.c.h.bf16 %v3485
      %v3774 = vunpack.c.l.bf16 %v3486
      %v3775 = vunpack.c.h.bf16 %v3486
      %v3776 = vunpack.c.l.bf16 %v3487
      %v3777 = vunpack.c.h.bf16 %v3487
      %v3778 = vunpack.c.l.bf16 %v3488
      %v3779 = vunpack.c.h.bf16 %v3488
      %v3780 = vunpack.c.l.bf16 %v3489
      %v3781 = vunpack.c.h.bf16 %v3489
      %v3782 = vunpack.c.l.bf16 %v3490
      %v3783 = vunpack.c.h.bf16 %v3490
      %v3784 = vunpack.c.l.bf16 %v3491
      %v3785 = vunpack.c.h.bf16 %v3491
      %v3786 = vunpack.c.l.bf16 %v3492
      %v3787 = vunpack.c.h.bf16 %v3492
      %v3788 = vunpack.c.l.bf16 %v3493
      %v3789 = vunpack.c.h.bf16 %v3493
      %v3790 = vunpack.c.l.bf16 %v3494
      %v3791 = vunpack.c.h.bf16 %v3494
      %v3792 = vunpack.c.l.bf16 %v3495
      %v3793 = vunpack.c.h.bf16 %v3495
      %v3794 = vunpack.c.l.bf16 %v3496
      %v3795 = vunpack.c.h.bf16 %v3496
      %v3796 = vunpack.c.l.bf16 %v3497
      %v3797 = vunpack.c.h.bf16 %v3497
      %v3798 = vunpack.c.l.bf16 %v3498
      %v3799 = vunpack.c.h.bf16 %v3498
      %v3800 = vunpack.c.l.bf16 %v3499
      %v3801 = vunpack.c.h.bf16 %v3499
      %v3802 = vunpack.c.l.bf16 %v3500
      %v3803 = vunpack.c.h.bf16 %v3500
      %v3804 = vunpack.c.l.bf16 %v3501
      %v3805 = vunpack.c.h.bf16 %v3501
      %v3806 = vunpack.c.l.bf16 %v3502
      %v3807 = vunpack.c.h.bf16 %v3502
      %v3808 = vunpack.c.l.bf16 %v3503
      %v3809 = vunpack.c.h.bf16 %v3503
      %v3810 = vunpack.c.l.bf16 %v3504
      %v3811 = vunpack.c.h.bf16 %v3504
      %v3812 = vunpack.c.l.bf16 %v3505
      %v3813 = vunpack.c.h.bf16 %v3505
      %v3814 = vunpack.c.l.bf16 %v3506
      %v3815 = vunpack.c.h.bf16 %v3506
      %v3816 = vunpack.c.l.bf16 %v3507
      %v3817 = vunpack.c.h.bf16 %v3507
      %v3818 = vunpack.c.l.bf16 %v3508
      %v3819 = vunpack.c.h.bf16 %v3508
      %v3820 = vunpack.c.l.bf16 %v3509
      %v3821 = vunpack.c.h.bf16 %v3509
      %v3822 = vunpack.c.l.bf16 %v3510
      %v3823 = vunpack.c.h.bf16 %v3510
      %v3824 = vunpack.c.l.bf16 %v3511
      %v3825 = vunpack.c.h.bf16 %v3511
      %v3826 = vunpack.c.l.bf16 %v3512
      %v3827 = vunpack.c.h.bf16 %v3512
      %v3828 = vunpack.c.l.bf16 %v3513
      %v3829 = vunpack.c.h.bf16 %v3513
      %v3830 = vunpack.c.l.bf16 %v3514
      %v3831 = vunpack.c.h.bf16 %v3514
      %v3832 = vunpack.c.l.bf16 %v3515
      %v3833 = vunpack.c.h.bf16 %v3515
      %v3834 = vunpack.c.l.bf16 %v3516
      %v3835 = vunpack.c.h.bf16 %v3516
      %v3836 = vunpack.c.l.bf16 %v3517
      %v3837 = vunpack.c.h.bf16 %v3517
      %v3838 = vadd.f32 %v3518, 1.0
      %v3839 = vadd.f32 %v3519, 1.0
      %v3840 = vadd.f32 %v3520, 1.0
      %v3841 = vadd.f32 %v3521, 1.0
      %v3842 = vadd.f32 %v3522, 1.0
      %v3843 = vadd.f32 %v3523, 1.0
      %v3844 = vadd.f32 %v3524, 1.0
      %v3845 = vadd.f32 %v3525, 1.0
      %v3846 = vadd.f32 %v3526, 1.0
      %v3847 = vadd.f32 %v3527, 1.0
      %v3848 = vadd.f32 %v3528, 1.0
      %v3849 = vadd.f32 %v3529, 1.0
      %v3850 = vadd.f32 %v3530, 1.0
      %v3851 = vadd.f32 %v3531, 1.0
      %v3852 = vadd.f32 %v3532, 1.0
      %v3853 = vadd.f32 %v3533, 1.0
      %v3854 = vadd.f32 %v3534, 1.0
      %v3855 = vadd.f32 %v3535, 1.0
      %v3856 = vadd.f32 %v3536, 1.0
      %v3857 = vadd.f32 %v3537, 1.0
      %v3858 = vadd.f32 %v3538, 1.0
      %v3859 = vadd.f32 %v3539, 1.0
      %v3860 = vadd.f32 %v3540, 1.0
      %v3861 = vadd.f32 %v3541, 1.0
      %v3862 = vadd.f32 %v3542, 1.0
      %v3863 = vadd.f32 %v3543, 1.0
      %v3864 = vadd.f32 %v3544, 1.0
      %v3865 = vadd.f32 %v3545, 1.0
      %v3866 = vadd.f32 %v3546, 1.0
      %v3867 = vadd.f32 %v3547, 1.0
      %v3868 = vadd.f32 %v3548, 1.0
      %v3869 = vadd.f32 %v3549, 1.0
      %v3870 = vadd.f32 %v3550, 1.0
      %v3871 = vadd.f32 %v3551, 1.0
      %v3872 = vadd.f32 %v3552, 1.0
      %v3873 = vadd.f32 %v3553, 1.0
      %v3874 = vadd.f32 %v3554, 1.0
      %v3875 = vadd.f32 %v3555, 1.0
      %v3876 = vadd.f32 %v3556, 1.0
      %v3877 = vadd.f32 %v3557, 1.0
      %v3878 = vadd.f32 %v3558, 1.0
      %v3879 = vadd.f32 %v3559, 1.0
      %v3880 = vadd.f32 %v3560, 1.0
      %v3881 = vadd.f32 %v3561, 1.0
      %v3882 = vadd.f32 %v3562, 1.0
      %v3883 = vadd.f32 %v3563, 1.0
      %v3884 = vadd.f32 %v3564, 1.0
      %v3885 = vadd.f32 %v3565, 1.0
      %v3886 = vadd.f32 %v3566, 1.0
      %v3887 = vadd.f32 %v3567, 1.0
      %v3888 = vadd.f32 %v3568, 1.0
      %v3889 = vadd.f32 %v3569, 1.0
      %v3890 = vadd.f32 %v3570, 1.0
      %v3891 = vadd.f32 %v3571, 1.0
      %v3892 = vadd.f32 %v3572, 1.0
      %v3893 = vadd.f32 %v3573, 1.0
      %v3894 = vadd.f32 %v3574, 1.0
      %v3895 = vadd.f32 %v3575, 1.0
      %v3896 = vadd.f32 %v3576, 1.0
      %v3897 = vadd.f32 %v3577, 1.0
      %v3898 = vadd.f32 %v3578, 1.0
      %v3899 = vadd.f32 %v3579, 1.0
      %v3900 = vadd.f32 %v3580, 1.0
      %v3901 = vadd.f32 %v3581, 1.0
      %v3902 = vadd.f32 %v3582, 1.0
      %v3903 = vadd.f32 %v3583, 1.0
      %v3904 = vadd.f32 %v3584, 1.0
      %v3905 = vadd.f32 %v3585, 1.0
      %v3906 = vadd.f32 %v3586, 1.0
      %v3907 = vadd.f32 %v3587, 1.0
      %v3908 = vadd.f32 %v3588, 1.0
      %v3909 = vadd.f32 %v3589, 1.0
      %v3910 = vadd.f32 %v3590, 1.0
      %v3911 = vadd.f32 %v3591, 1.0
      %v3912 = vadd.f32 %v3592, 1.0
      %v3913 = vadd.f32 %v3593, 1.0
      %v3914 = vadd.f32 %v3594, 1.0
      %v3915 = vadd.f32 %v3595, 1.0
      %v3916 = vadd.f32 %v3596, 1.0
      %v3917 = vadd.f32 %v3597, 1.0
      %v3918 = vadd.f32 %v3598, 1.0
      %v3919 = vadd.f32 %v3599, 1.0
      %v3920 = vadd.f32 %v3600, 1.0
      %v3921 = vadd.f32 %v3601, 1.0
      %v3922 = vadd.f32 %v3602, 1.0
      %v3923 = vadd.f32 %v3603, 1.0
      %v3924 = vadd.f32 %v3604, 1.0
      %v3925 = vadd.f32 %v3605, 1.0
      %v3926 = vadd.f32 %v3606, 1.0
      %v3927 = vadd.f32 %v3607, 1.0
      %v3928 = vadd.f32 %v3608, 1.0
      %v3929 = vadd.f32 %v3609, 1.0
      %v3930 = vadd.f32 %v3610, 1.0
      %v3931 = vadd.f32 %v3611, 1.0
      %v3932 = vadd.f32 %v3612, 1.0
      %v3933 = vadd.f32 %v3613, 1.0
      %v3934 = vadd.f32 %v3614, 1.0
      %v3935 = vadd.f32 %v3615, 1.0
      %v3936 = vadd.f32 %v3616, 1.0
      %v3937 = vadd.f32 %v3617, 1.0
      %v3938 = vadd.f32 %v3618, 1.0
      %v3939 = vadd.f32 %v3619, 1.0
      %v3940 = vadd.f32 %v3620, 1.0
      %v3941 = vadd.f32 %v3621, 1.0
      %v3942 = vadd.f32 %v3622, 1.0
      %v3943 = vadd.f32 %v3623, 1.0
      %v3944 = vadd.f32 %v3624, 1.0
      %v3945 = vadd.f32 %v3625, 1.0
      %v3946 = vadd.f32 %v3626, 1.0
      %v3947 = vadd.f32 %v3627, 1.0
      %v3948 = vadd.f32 %v3628, 1.0
      %v3949 = vadd.f32 %v3629, 1.0
      %v3950 = vadd.f32 %v3630, 1.0
      %v3951 = vadd.f32 %v3631, 1.0
      %v3952 = vadd.f32 %v3632, 1.0
      %v3953 = vadd.f32 %v3633, 1.0
      %v3954 = vadd.f32 %v3634, 1.0
      %v3955 = vadd.f32 %v3635, 1.0
      %v3956 = vadd.f32 %v3636, 1.0
      %v3957 = vadd.f32 %v3637, 1.0
      %v3958 = vadd.f32 %v3638, 1.0
      %v3959 = vadd.f32 %v3639, 1.0
      %v3960 = vadd.f32 %v3640, 1.0
      %v3961 = vadd.f32 %v3641, 1.0
      %v3962 = vadd.f32 %v3642, 1.0
      %v3963 = vadd.f32 %v3643, 1.0
      %v3964 = vadd.f32 %v3644, 1.0
      %v3965 = vadd.f32 %v3645, 1.0
      %v3966 = vadd.f32 %v3646, 1.0
      %v3967 = vadd.f32 %v3647, 1.0
      %v3968 = vadd.f32 %v3648, 1.0
      %v3969 = vadd.f32 %v3649, 1.0
      %v3970 = vadd.f32 %v3650, 1.0
      %v3971 = vadd.f32 %v3651, 1.0
      %v3972 = vadd.f32 %v3652, 1.0
      %v3973 = vadd.f32 %v3653, 1.0
      %v3974 = vadd.f32 %v3654, 1.0
      %v3975 = vadd.f32 %v3655, 1.0
      %v3976 = vadd.f32 %v3656, 1.0
      %v3977 = vadd.f32 %v3657, 1.0
      %v3978 = vadd.f32 %v3658, 1.0
      %v3979 = vadd.f32 %v3659, 1.0
      %v3980 = vadd.f32 %v3660, 1.0
      %v3981 = vadd.f32 %v3661, 1.0
      %v3982 = vadd.f32 %v3662, 1.0
      %v3983 = vadd.f32 %v3663, 1.0
      %v3984 = vadd.f32 %v3664, 1.0
      %v3985 = vadd.f32 %v3665, 1.0
      %v3986 = vadd.f32 %v3666, 1.0
      %v3987 = vadd.f32 %v3667, 1.0
      %v3988 = vadd.f32 %v3668, 1.0
      %v3989 = vadd.f32 %v3669, 1.0
      %v3990 = vadd.f32 %v3670, 1.0
      %v3991 = vadd.f32 %v3671, 1.0
      %v3992 = vadd.f32 %v3672, 1.0
      %v3993 = vadd.f32 %v3673, 1.0
      %v3994 = vadd.f32 %v3674, 1.0
      %v3995 = vadd.f32 %v3675, 1.0
      %v3996 = vadd.f32 %v3676, 1.0
      %v3997 = vadd.f32 %v3677, 1.0
      %v3998 = vadd.f32 %v3678, 1.0
      %v3999 = vadd.f32 %v3679, 1.0
      %v4000 = vadd.f32 %v3680, 1.0
      %v4001 = vadd.f32 %v3681, 1.0
      %v4002 = vadd.f32 %v3682, 1.0
      %v4003 = vadd.f32 %v3683, 1.0
      %v4004 = vadd.f32 %v3684, 1.0
      %v4005 = vadd.f32 %v3685, 1.0
      %v4006 = vadd.f32 %v3686, 1.0
      %v4007 = vadd.f32 %v3687, 1.0
      %v4008 = vadd.f32 %v3688, 1.0
      %v4009 = vadd.f32 %v3689, 1.0
      %v4010 = vadd.f32 %v3690, 1.0
      %v4011 = vadd.f32 %v3691, 1.0
      %v4012 = vadd.f32 %v3692, 1.0
      %v4013 = vadd.f32 %v3693, 1.0
      %v4014 = vadd.f32 %v3694, 1.0
      %v4015 = vadd.f32 %v3695, 1.0
      %v4016 = vadd.f32 %v3696, 1.0
      %v4017 = vadd.f32 %v3697, 1.0
      %v4018 = vadd.f32 %v3698, 1.0
      %v4019 = vadd.f32 %v3699, 1.0
      %v4020 = vadd.f32 %v3700, 1.0
      %v4021 = vadd.f32 %v3701, 1.0
      %v4022 = vadd.f32 %v3702, 1.0
      %v4023 = vadd.f32 %v3703, 1.0
      %v4024 = vadd.f32 %v3704, 1.0
      %v4025 = vadd.f32 %v3705, 1.0
      %v4026 = vadd.f32 %v3706, 1.0
      %v4027 = vadd.f32 %v3707, 1.0
      %v4028 = vadd.f32 %v3708, 1.0
      %v4029 = vadd.f32 %v3709, 1.0
      %v4030 = vadd.f32 %v3710, 1.0
      %v4031 = vadd.f32 %v3711, 1.0
      %v4032 = vadd.f32 %v3712, 1.0
      %v4033 = vadd.f32 %v3713, 1.0
      %v4034 = vadd.f32 %v3714, 1.0
      %v4035 = vadd.f32 %v3715, 1.0
      %v4036 = vadd.f32 %v3716, 1.0
      %v4037 = vadd.f32 %v3717, 1.0
      %v4038 = vadd.f32 %v3718, 1.0
      %v4039 = vadd.f32 %v3719, 1.0
      %v4040 = vadd.f32 %v3720, 1.0
      %v4041 = vadd.f32 %v3721, 1.0
      %v4042 = vadd.f32 %v3722, 1.0
      %v4043 = vadd.f32 %v3723, 1.0
      %v4044 = vadd.f32 %v3724, 1.0
      %v4045 = vadd.f32 %v3725, 1.0
      %v4046 = vadd.f32 %v3726, 1.0
      %v4047 = vadd.f32 %v3727, 1.0
      %v4048 = vadd.f32 %v3728, 1.0
      %v4049 = vadd.f32 %v3729, 1.0
      %v4050 = vadd.f32 %v3730, 1.0
      %v4051 = vadd.f32 %v3731, 1.0
      %v4052 = vadd.f32 %v3732, 1.0
      %v4053 = vadd.f32 %v3733, 1.0
      %v4054 = vadd.f32 %v3734, 1.0
      %v4055 = vadd.f32 %v3735, 1.0
      %v4056 = vadd.f32 %v3736, 1.0
      %v4057 = vadd.f32 %v3737, 1.0
      %v4058 = vadd.f32 %v3738, 1.0
      %v4059 = vadd.f32 %v3739, 1.0
      %v4060 = vadd.f32 %v3740, 1.0
      %v4061 = vadd.f32 %v3741, 1.0
      %v4062 = vadd.f32 %v3742, 1.0
      %v4063 = vadd.f32 %v3743, 1.0
      %v4064 = vadd.f32 %v3744, 1.0
      %v4065 = vadd.f32 %v3745, 1.0
      %v4066 = vadd.f32 %v3746, 1.0
      %v4067 = vadd.f32 %v3747, 1.0
      %v4068 = vadd.f32 %v3748, 1.0
      %v4069 = vadd.f32 %v3749, 1.0
      %v4070 = vadd.f32 %v3750, 1.0
      %v4071 = vadd.f32 %v3751, 1.0
      %v4072 = vadd.f32 %v3752, 1.0
      %v4073 = vadd.f32 %v3753, 1.0
      %v4074 = vadd.f32 %v3754, 1.0
      %v4075 = vadd.f32 %v3755, 1.0
      %v4076 = vadd.f32 %v3756, 1.0
      %v4077 = vadd.f32 %v3757, 1.0
      %v4078 = vadd.f32 %v3758, 1.0
      %v4079 = vadd.f32 %v3759, 1.0
      %v4080 = vadd.f32 %v3760, 1.0
      %v4081 = vadd.f32 %v3761, 1.0
      %v4082 = vadd.f32 %v3762, 1.0
      %v4083 = vadd.f32 %v3763, 1.0
      %v4084 = vadd.f32 %v3764, 1.0
      %v4085 = vadd.f32 %v3765, 1.0
      %v4086 = vadd.f32 %v3766, 1.0
      %v4087 = vadd.f32 %v3767, 1.0
      %v4088 = vadd.f32 %v3768, 1.0
      %v4089 = vadd.f32 %v3769, 1.0
      %v4090 = vadd.f32 %v3770, 1.0
      %v4091 = vadd.f32 %v3771, 1.0
      %v4092 = vadd.f32 %v3772, 1.0
      %v4093 = vadd.f32 %v3773, 1.0
      %v4094 = vadd.f32 %v3774, 1.0
      %v4095 = vadd.f32 %v3775, 1.0
      %v4096 = vadd.f32 %v3776, 1.0
      %v4097 = vadd.f32 %v3777, 1.0
      %v4098 = vadd.f32 %v3778, 1.0
      %v4099 = vadd.f32 %v3779, 1.0
      %v4100 = vadd.f32 %v3780, 1.0
      %v4101 = vadd.f32 %v3781, 1.0
      %v4102 = vadd.f32 %v3782, 1.0
      %v4103 = vadd.f32 %v3783, 1.0
      %v4104 = vadd.f32 %v3784, 1.0
      %v4105 = vadd.f32 %v3785, 1.0
      %v4106 = vadd.f32 %v3786, 1.0
      %v4107 = vadd.f32 %v3787, 1.0
      %v4108 = vadd.f32 %v3788, 1.0
      %v4109 = vadd.f32 %v3789, 1.0
      %v4110 = vadd.f32 %v3790, 1.0
      %v4111 = vadd.f32 %v3791, 1.0
      %v4112 = vadd.f32 %v3792, 1.0
      %v4113 = vadd.f32 %v3793, 1.0
      %v4114 = vadd.f32 %v3794, 1.0
      %v4115 = vadd.f32 %v3795, 1.0
      %v4116 = vadd.f32 %v3796, 1.0
      %v4117 = vadd.f32 %v3797, 1.0
      %v4118 = vadd.f32 %v3798, 1.0
      %v4119 = vadd.f32 %v3799, 1.0
      %v4120 = vadd.f32 %v3800, 1.0
      %v4121 = vadd.f32 %v3801, 1.0
      %v4122 = vadd.f32 %v3802, 1.0
      %v4123 = vadd.f32 %v3803, 1.0
      %v4124 = vadd.f32 %v3804, 1.0
      %v4125 = vadd.f32 %v3805, 1.0
      %v4126 = vadd.f32 %v3806, 1.0
      %v4127 = vadd.f32 %v3807, 1.0
      %v4128 = vadd.f32 %v3808, 1.0
      %v4129 = vadd.f32 %v3809, 1.0
      %v4130 = vadd.f32 %v3810, 1.0
      %v4131 = vadd.f32 %v3811, 1.0
      %v4132 = vadd.f32 %v3812, 1.0
      %v4133 = vadd.f32 %v3813, 1.0
      %v4134 = vadd.f32 %v3814, 1.0
      %v4135 = vadd.f32 %v3815, 1.0
      %v4136 = vadd.f32 %v3816, 1.0
      %v4137 = vadd.f32 %v3817, 1.0
      %v4138 = vadd.f32 %v3818, 1.0
      %v4139 = vadd.f32 %v3819, 1.0
      %v4140 = vadd.f32 %v3820, 1.0
      %v4141 = vadd.f32 %v3821, 1.0
      %v4142 = vadd.f32 %v3822, 1.0
      %v4143 = vadd.f32 %v3823, 1.0
      %v4144 = vadd.f32 %v3824, 1.0
      %v4145 = vadd.f32 %v3825, 1.0
      %v4146 = vadd.f32 %v3826, 1.0
      %v4147 = vadd.f32 %v3827, 1.0
      %v4148 = vadd.f32 %v3828, 1.0
      %v4149 = vadd.f32 %v3829, 1.0
      %v4150 = vadd.f32 %v3830, 1.0
      %v4151 = vadd.f32 %v3831, 1.0
      %v4152 = vadd.f32 %v3832, 1.0
      %v4153 = vadd.f32 %v3833, 1.0
      %v4154 = vadd.f32 %v3834, 1.0
      %v4155 = vadd.f32 %v3835, 1.0
      %v4156 = vadd.f32 %v3836, 1.0
      %v4157 = vadd.f32 %v3837, 1.0
      %v4158 = vpack.c.bf16 %v3839, %v3838
      %v4159 = vpack.c.bf16 %v3841, %v3840
      %v4160 = vpack.c.bf16 %v3843, %v3842
      %v4161 = vpack.c.bf16 %v3845, %v3844
      %v4162 = vpack.c.bf16 %v3847, %v3846
      %v4163 = vpack.c.bf16 %v3849, %v3848
      %v4164 = vpack.c.bf16 %v3851, %v3850
      %v4165 = vpack.c.bf16 %v3853, %v3852
      %v4166 = vpack.c.bf16 %v3855, %v3854
      %v4167 = vpack.c.bf16 %v3857, %v3856
      %v4168 = vpack.c.bf16 %v3859, %v3858
      %v4169 = vpack.c.bf16 %v3861, %v3860
      %v4170 = vpack.c.bf16 %v3863, %v3862
      %v4171 = vpack.c.bf16 %v3865, %v3864
      %v4172 = vpack.c.bf16 %v3867, %v3866
      %v4173 = vpack.c.bf16 %v3869, %v3868
      %v4174 = vpack.c.bf16 %v3871, %v3870
      %v4175 = vpack.c.bf16 %v3873, %v3872
      %v4176 = vpack.c.bf16 %v3875, %v3874
      %v4177 = vpack.c.bf16 %v3877, %v3876
      %v4178 = vpack.c.bf16 %v3879, %v3878
      %v4179 = vpack.c.bf16 %v3881, %v3880
      %v4180 = vpack.c.bf16 %v3883, %v3882
      %v4181 = vpack.c.bf16 %v3885, %v3884
      %v4182 = vpack.c.bf16 %v3887, %v3886
      %v4183 = vpack.c.bf16 %v3889, %v3888
      %v4184 = vpack.c.bf16 %v3891, %v3890
      %v4185 = vpack.c.bf16 %v3893, %v3892
      %v4186 = vpack.c.bf16 %v3895, %v3894
      %v4187 = vpack.c.bf16 %v3897, %v3896
      %v4188 = vpack.c.bf16 %v3899, %v3898
      %v4189 = vpack.c.bf16 %v3901, %v3900
      %v4190 = vpack.c.bf16 %v3903, %v3902
      %v4191 = vpack.c.bf16 %v3905, %v3904
      %v4192 = vpack.c.bf16 %v3907, %v3906
      %v4193 = vpack.c.bf16 %v3909, %v3908
      %v4194 = vpack.c.bf16 %v3911, %v3910
      %v4195 = vpack.c.bf16 %v3913, %v3912
      %v4196 = vpack.c.bf16 %v3915, %v3914
      %v4197 = vpack.c.bf16 %v3917, %v3916
      %v4198 = vpack.c.bf16 %v3919, %v3918
      %v4199 = vpack.c.bf16 %v3921, %v3920
      %v4200 = vpack.c.bf16 %v3923, %v3922
      %v4201 = vpack.c.bf16 %v3925, %v3924
      %v4202 = vpack.c.bf16 %v3927, %v3926
      %v4203 = vpack.c.bf16 %v3929, %v3928
      %v4204 = vpack.c.bf16 %v3931, %v3930
      %v4205 = vpack.c.bf16 %v3933, %v3932
      %v4206 = vpack.c.bf16 %v3935, %v3934
      %v4207 = vpack.c.bf16 %v3937, %v3936
      %v4208 = vpack.c.bf16 %v3939, %v3938
      %v4209 = vpack.c.bf16 %v3941, %v3940
      %v4210 = vpack.c.bf16 %v3943, %v3942
      %v4211 = vpack.c.bf16 %v3945, %v3944
      %v4212 = vpack.c.bf16 %v3947, %v3946
      %v4213 = vpack.c.bf16 %v3949, %v3948
      %v4214 = vpack.c.bf16 %v3951, %v3950
      %v4215 = vpack.c.bf16 %v3953, %v3952
      %v4216 = vpack.c.bf16 %v3955, %v3954
      %v4217 = vpack.c.bf16 %v3957, %v3956
      %v4218 = vpack.c.bf16 %v3959, %v3958
      %v4219 = vpack.c.bf16 %v3961, %v3960
      %v4220 = vpack.c.bf16 %v3963, %v3962
      %v4221 = vpack.c.bf16 %v3965, %v3964
      %v4222 = vpack.c.bf16 %v3967, %v3966
      %v4223 = vpack.c.bf16 %v3969, %v3968
      %v4224 = vpack.c.bf16 %v3971, %v3970
      %v4225 = vpack.c.bf16 %v3973, %v3972
      %v4226 = vpack.c.bf16 %v3975, %v3974
      %v4227 = vpack.c.bf16 %v3977, %v3976
      %v4228 = vpack.c.bf16 %v3979, %v3978
      %v4229 = vpack.c.bf16 %v3981, %v3980
      %v4230 = vpack.c.bf16 %v3983, %v3982
      %v4231 = vpack.c.bf16 %v3985, %v3984
      %v4232 = vpack.c.bf16 %v3987, %v3986
      %v4233 = vpack.c.bf16 %v3989, %v3988
      %v4234 = vpack.c.bf16 %v3991, %v3990
      %v4235 = vpack.c.bf16 %v3993, %v3992
      %v4236 = vpack.c.bf16 %v3995, %v3994
      %v4237 = vpack.c.bf16 %v3997, %v3996
      %v4238 = vpack.c.bf16 %v3999, %v3998
      %v4239 = vpack.c.bf16 %v4001, %v4000
      %v4240 = vpack.c.bf16 %v4003, %v4002
      %v4241 = vpack.c.bf16 %v4005, %v4004
      %v4242 = vpack.c.bf16 %v4007, %v4006
      %v4243 = vpack.c.bf16 %v4009, %v4008
      %v4244 = vpack.c.bf16 %v4011, %v4010
      %v4245 = vpack.c.bf16 %v4013, %v4012
      %v4246 = vpack.c.bf16 %v4015, %v4014
      %v4247 = vpack.c.bf16 %v4017, %v4016
      %v4248 = vpack.c.bf16 %v4019, %v4018
      %v4249 = vpack.c.bf16 %v4021, %v4020
      %v4250 = vpack.c.bf16 %v4023, %v4022
      %v4251 = vpack.c.bf16 %v4025, %v4024
      %v4252 = vpack.c.bf16 %v4027, %v4026
      %v4253 = vpack.c.bf16 %v4029, %v4028
      %v4254 = vpack.c.bf16 %v4031, %v4030
      %v4255 = vpack.c.bf16 %v4033, %v4032
      %v4256 = vpack.c.bf16 %v4035, %v4034
      %v4257 = vpack.c.bf16 %v4037, %v4036
      %v4258 = vpack.c.bf16 %v4039, %v4038
      %v4259 = vpack.c.bf16 %v4041, %v4040
      %v4260 = vpack.c.bf16 %v4043, %v4042
      %v4261 = vpack.c.bf16 %v4045, %v4044
      %v4262 = vpack.c.bf16 %v4047, %v4046
      %v4263 = vpack.c.bf16 %v4049, %v4048
      %v4264 = vpack.c.bf16 %v4051, %v4050
      %v4265 = vpack.c.bf16 %v4053, %v4052
      %v4266 = vpack.c.bf16 %v4055, %v4054
      %v4267 = vpack.c.bf16 %v4057, %v4056
      %v4268 = vpack.c.bf16 %v4059, %v4058
      %v4269 = vpack.c.bf16 %v4061, %v4060
      %v4270 = vpack.c.bf16 %v4063, %v4062
      %v4271 = vpack.c.bf16 %v4065, %v4064
      %v4272 = vpack.c.bf16 %v4067, %v4066
      %v4273 = vpack.c.bf16 %v4069, %v4068
      %v4274 = vpack.c.bf16 %v4071, %v4070
      %v4275 = vpack.c.bf16 %v4073, %v4072
      %v4276 = vpack.c.bf16 %v4075, %v4074
      %v4277 = vpack.c.bf16 %v4077, %v4076
      %v4278 = vpack.c.bf16 %v4079, %v4078
      %v4279 = vpack.c.bf16 %v4081, %v4080
      %v4280 = vpack.c.bf16 %v4083, %v4082
      %v4281 = vpack.c.bf16 %v4085, %v4084
      %v4282 = vpack.c.bf16 %v4087, %v4086
      %v4283 = vpack.c.bf16 %v4089, %v4088
      %v4284 = vpack.c.bf16 %v4091, %v4090
      %v4285 = vpack.c.bf16 %v4093, %v4092
      %v4286 = vpack.c.bf16 %v4095, %v4094
      %v4287 = vpack.c.bf16 %v4097, %v4096
      %v4288 = vpack.c.bf16 %v4099, %v4098
      %v4289 = vpack.c.bf16 %v4101, %v4100
      %v4290 = vpack.c.bf16 %v4103, %v4102
      %v4291 = vpack.c.bf16 %v4105, %v4104
      %v4292 = vpack.c.bf16 %v4107, %v4106
      %v4293 = vpack.c.bf16 %v4109, %v4108
      %v4294 = vpack.c.bf16 %v4111, %v4110
      %v4295 = vpack.c.bf16 %v4113, %v4112
      %v4296 = vpack.c.bf16 %v4115, %v4114
      %v4297 = vpack.c.bf16 %v4117, %v4116
      %v4298 = vpack.c.bf16 %v4119, %v4118
      %v4299 = vpack.c.bf16 %v4121, %v4120
      %v4300 = vpack.c.bf16 %v4123, %v4122
      %v4301 = vpack.c.bf16 %v4125, %v4124
      %v4302 = vpack.c.bf16 %v4127, %v4126
      %v4303 = vpack.c.bf16 %v4129, %v4128
      %v4304 = vpack.c.bf16 %v4131, %v4130
      %v4305 = vpack.c.bf16 %v4133, %v4132
      %v4306 = vpack.c.bf16 %v4135, %v4134
      %v4307 = vpack.c.bf16 %v4137, %v4136
      %v4308 = vpack.c.bf16 %v4139, %v4138
      %v4309 = vpack.c.bf16 %v4141, %v4140
      %v4310 = vpack.c.bf16 %v4143, %v4142
      %v4311 = vpack.c.bf16 %v4145, %v4144
      %v4312 = vpack.c.bf16 %v4147, %v4146
      %v4313 = vpack.c.bf16 %v4149, %v4148
      %v4314 = vpack.c.bf16 %v4151, %v4150
      %v4315 = vpack.c.bf16 %v4153, %v4152
      %v4316 = vpack.c.bf16 %v4155, %v4154
      %v4317 = vpack.c.bf16 %v4157, %v4156
      %v4318 = vunpack.c.l.bf16 %v4158
      %v4319 = vunpack.c.h.bf16 %v4158
      %v4320 = vunpack.c.l.bf16 %v4159
      %v4321 = vunpack.c.h.bf16 %v4159
      %v4322 = vunpack.c.l.bf16 %v4160
      %v4323 = vunpack.c.h.bf16 %v4160
      %v4324 = vunpack.c.l.bf16 %v4161
      %v4325 = vunpack.c.h.bf16 %v4161
      %v4326 = vunpack.c.l.bf16 %v4162
      %v4327 = vunpack.c.h.bf16 %v4162
      %v4328 = vunpack.c.l.bf16 %v4163
      %v4329 = vunpack.c.h.bf16 %v4163
      %v4330 = vunpack.c.l.bf16 %v4164
      %v4331 = vunpack.c.h.bf16 %v4164
      %v4332 = vunpack.c.l.bf16 %v4165
      %v4333 = vunpack.c.h.bf16 %v4165
      %v4334 = vunpack.c.l.bf16 %v4166
      %v4335 = vunpack.c.h.bf16 %v4166
      %v4336 = vunpack.c.l.bf16 %v4167
      %v4337 = vunpack.c.h.bf16 %v4167
      %v4338 = vunpack.c.l.bf16 %v4168
      %v4339 = vunpack.c.h.bf16 %v4168
      %v4340 = vunpack.c.l.bf16 %v4169
      %v4341 = vunpack.c.h.bf16 %v4169
      %v4342 = vunpack.c.l.bf16 %v4170
      %v4343 = vunpack.c.h.bf16 %v4170
      %v4344 = vunpack.c.l.bf16 %v4171
      %v4345 = vunpack.c.h.bf16 %v4171
      %v4346 = vunpack.c.l.bf16 %v4172
      %v4347 = vunpack.c.h.bf16 %v4172
      %v4348 = vunpack.c.l.bf16 %v4173
      %v4349 = vunpack.c.h.bf16 %v4173
      %v4350 = vunpack.c.l.bf16 %v4174
      %v4351 = vunpack.c.h.bf16 %v4174
      %v4352 = vunpack.c.l.bf16 %v4175
      %v4353 = vunpack.c.h.bf16 %v4175
      %v4354 = vunpack.c.l.bf16 %v4176
      %v4355 = vunpack.c.h.bf16 %v4176
      %v4356 = vunpack.c.l.bf16 %v4177
      %v4357 = vunpack.c.h.bf16 %v4177
      %v4358 = vunpack.c.l.bf16 %v4178
      %v4359 = vunpack.c.h.bf16 %v4178
      %v4360 = vunpack.c.l.bf16 %v4179
      %v4361 = vunpack.c.h.bf16 %v4179
      %v4362 = vunpack.c.l.bf16 %v4180
      %v4363 = vunpack.c.h.bf16 %v4180
      %v4364 = vunpack.c.l.bf16 %v4181
      %v4365 = vunpack.c.h.bf16 %v4181
      %v4366 = vunpack.c.l.bf16 %v4182
      %v4367 = vunpack.c.h.bf16 %v4182
      %v4368 = vunpack.c.l.bf16 %v4183
      %v4369 = vunpack.c.h.bf16 %v4183
      %v4370 = vunpack.c.l.bf16 %v4184
      %v4371 = vunpack.c.h.bf16 %v4184
      %v4372 = vunpack.c.l.bf16 %v4185
      %v4373 = vunpack.c.h.bf16 %v4185
      %v4374 = vunpack.c.l.bf16 %v4186
      %v4375 = vunpack.c.h.bf16 %v4186
      %v4376 = vunpack.c.l.bf16 %v4187
      %v4377 = vunpack.c.h.bf16 %v4187
      %v4378 = vunpack.c.l.bf16 %v4188
      %v4379 = vunpack.c.h.bf16 %v4188
      %v4380 = vunpack.c.l.bf16 %v4189
      %v4381 = vunpack.c.h.bf16 %v4189
      %v4382 = vunpack.c.l.bf16 %v4190
      %v4383 = vunpack.c.h.bf16 %v4190
      %v4384 = vunpack.c.l.bf16 %v4191
      %v4385 = vunpack.c.h.bf16 %v4191
      %v4386 = vunpack.c.l.bf16 %v4192
      %v4387 = vunpack.c.h.bf16 %v4192
      %v4388 = vunpack.c.l.bf16 %v4193
      %v4389 = vunpack.c.h.bf16 %v4193
      %v4390 = vunpack.c.l.bf16 %v4194
      %v4391 = vunpack.c.h.bf16 %v4194
      %v4392 = vunpack.c.l.bf16 %v4195
      %v4393 = vunpack.c.h.bf16 %v4195
      %v4394 = vunpack.c.l.bf16 %v4196
      %v4395 = vunpack.c.h.bf16 %v4196
      %v4396 = vunpack.c.l.bf16 %v4197
      %v4397 = vunpack.c.h.bf16 %v4197
      %v4398 = vunpack.c.l.bf16 %v4198
      %v4399 = vunpack.c.h.bf16 %v4198
      %v4400 = vunpack.c.l.bf16 %v4199
      %v4401 = vunpack.c.h.bf16 %v4199
      %v4402 = vunpack.c.l.bf16 %v4200
      %v4403 = vunpack.c.h.bf16 %v4200
      %v4404 = vunpack.c.l.bf16 %v4201
      %v4405 = vunpack.c.h.bf16 %v4201
      %v4406 = vunpack.c.l.bf16 %v4202
      %v4407 = vunpack.c.h.bf16 %v4202
      %v4408 = vunpack.c.l.bf16 %v4203
      %v4409 = vunpack.c.h.bf16 %v4203
      %v4410 = vunpack.c.l.bf16 %v4204
      %v4411 = vunpack.c.h.bf16 %v4204
      %v4412 = vunpack.c.l.bf16 %v4205
      %v4413 = vunpack.c.h.bf16 %v4205
      %v4414 = vunpack.c.l.bf16 %v4206
      %v4415 = vunpack.c.h.bf16 %v4206
      %v4416 = vunpack.c.l.bf16 %v4207
      %v4417 = vunpack.c.h.bf16 %v4207
      %v4418 = vunpack.c.l.bf16 %v4208
      %v4419 = vunpack.c.h.bf16 %v4208
      %v4420 = vunpack.c.l.bf16 %v4209
      %v4421 = vunpack.c.h.bf16 %v4209
      %v4422 = vunpack.c.l.bf16 %v4210
      %v4423 = vunpack.c.h.bf16 %v4210
      %v4424 = vunpack.c.l.bf16 %v4211
      %v4425 = vunpack.c.h.bf16 %v4211
      %v4426 = vunpack.c.l.bf16 %v4212
      %v4427 = vunpack.c.h.bf16 %v4212
      %v4428 = vunpack.c.l.bf16 %v4213
      %v4429 = vunpack.c.h.bf16 %v4213
      %v4430 = vunpack.c.l.bf16 %v4214
      %v4431 = vunpack.c.h.bf16 %v4214
      %v4432 = vunpack.c.l.bf16 %v4215
      %v4433 = vunpack.c.h.bf16 %v4215
      %v4434 = vunpack.c.l.bf16 %v4216
      %v4435 = vunpack.c.h.bf16 %v4216
      %v4436 = vunpack.c.l.bf16 %v4217
      %v4437 = vunpack.c.h.bf16 %v4217
      %v4438 = vunpack.c.l.bf16 %v4218
      %v4439 = vunpack.c.h.bf16 %v4218
      %v4440 = vunpack.c.l.bf16 %v4219
      %v4441 = vunpack.c.h.bf16 %v4219
      %v4442 = vunpack.c.l.bf16 %v4220
      %v4443 = vunpack.c.h.bf16 %v4220
      %v4444 = vunpack.c.l.bf16 %v4221
      %v4445 = vunpack.c.h.bf16 %v4221
      %v4446 = vunpack.c.l.bf16 %v4222
      %v4447 = vunpack.c.h.bf16 %v4222
      %v4448 = vunpack.c.l.bf16 %v4223
      %v4449 = vunpack.c.h.bf16 %v4223
      %v4450 = vunpack.c.l.bf16 %v4224
      %v4451 = vunpack.c.h.bf16 %v4224
      %v4452 = vunpack.c.l.bf16 %v4225
      %v4453 = vunpack.c.h.bf16 %v4225
      %v4454 = vunpack.c.l.bf16 %v4226
      %v4455 = vunpack.c.h.bf16 %v4226
      %v4456 = vunpack.c.l.bf16 %v4227
      %v4457 = vunpack.c.h.bf16 %v4227
      %v4458 = vunpack.c.l.bf16 %v4228
      %v4459 = vunpack.c.h.bf16 %v4228
      %v4460 = vunpack.c.l.bf16 %v4229
      %v4461 = vunpack.c.h.bf16 %v4229
      %v4462 = vunpack.c.l.bf16 %v4230
      %v4463 = vunpack.c.h.bf16 %v4230
      %v4464 = vunpack.c.l.bf16 %v4231
      %v4465 = vunpack.c.h.bf16 %v4231
      %v4466 = vunpack.c.l.bf16 %v4232
      %v4467 = vunpack.c.h.bf16 %v4232
      %v4468 = vunpack.c.l.bf16 %v4233
      %v4469 = vunpack.c.h.bf16 %v4233
      %v4470 = vunpack.c.l.bf16 %v4234
      %v4471 = vunpack.c.h.bf16 %v4234
      %v4472 = vunpack.c.l.bf16 %v4235
      %v4473 = vunpack.c.h.bf16 %v4235
      %v4474 = vunpack.c.l.bf16 %v4236
      %v4475 = vunpack.c.h.bf16 %v4236
      %v4476 = vunpack.c.l.bf16 %v4237
      %v4477 = vunpack.c.h.bf16 %v4237
      %v4478 = vunpack.c.l.bf16 %v4238
      %v4479 = vunpack.c.h.bf16 %v4238
      %v4480 = vunpack.c.l.bf16 %v4239
      %v4481 = vunpack.c.h.bf16 %v4239
      %v4482 = vunpack.c.l.bf16 %v4240
      %v4483 = vunpack.c.h.bf16 %v4240
      %v4484 = vunpack.c.l.bf16 %v4241
      %v4485 = vunpack.c.h.bf16 %v4241
      %v4486 = vunpack.c.l.bf16 %v4242
      %v4487 = vunpack.c.h.bf16 %v4242
      %v4488 = vunpack.c.l.bf16 %v4243
      %v4489 = vunpack.c.h.bf16 %v4243
      %v4490 = vunpack.c.l.bf16 %v4244
      %v4491 = vunpack.c.h.bf16 %v4244
      %v4492 = vunpack.c.l.bf16 %v4245
      %v4493 = vunpack.c.h.bf16 %v4245
      %v4494 = vunpack.c.l.bf16 %v4246
      %v4495 = vunpack.c.h.bf16 %v4246
      %v4496 = vunpack.c.l.bf16 %v4247
      %v4497 = vunpack.c.h.bf16 %v4247
      %v4498 = vunpack.c.l.bf16 %v4248
      %v4499 = vunpack.c.h.bf16 %v4248
      %v4500 = vunpack.c.l.bf16 %v4249
      %v4501 = vunpack.c.h.bf16 %v4249
      %v4502 = vunpack.c.l.bf16 %v4250
      %v4503 = vunpack.c.h.bf16 %v4250
      %v4504 = vunpack.c.l.bf16 %v4251
      %v4505 = vunpack.c.h.bf16 %v4251
      %v4506 = vunpack.c.l.bf16 %v4252
      %v4507 = vunpack.c.h.bf16 %v4252
      %v4508 = vunpack.c.l.bf16 %v4253
      %v4509 = vunpack.c.h.bf16 %v4253
      %v4510 = vunpack.c.l.bf16 %v4254
      %v4511 = vunpack.c.h.bf16 %v4254
      %v4512 = vunpack.c.l.bf16 %v4255
      %v4513 = vunpack.c.h.bf16 %v4255
      %v4514 = vunpack.c.l.bf16 %v4256
      %v4515 = vunpack.c.h.bf16 %v4256
      %v4516 = vunpack.c.l.bf16 %v4257
      %v4517 = vunpack.c.h.bf16 %v4257
      %v4518 = vunpack.c.l.bf16 %v4258
      %v4519 = vunpack.c.h.bf16 %v4258
      %v4520 = vunpack.c.l.bf16 %v4259
      %v4521 = vunpack.c.h.bf16 %v4259
      %v4522 = vunpack.c.l.bf16 %v4260
      %v4523 = vunpack.c.h.bf16 %v4260
      %v4524 = vunpack.c.l.bf16 %v4261
      %v4525 = vunpack.c.h.bf16 %v4261
      %v4526 = vunpack.c.l.bf16 %v4262
      %v4527 = vunpack.c.h.bf16 %v4262
      %v4528 = vunpack.c.l.bf16 %v4263
      %v4529 = vunpack.c.h.bf16 %v4263
      %v4530 = vunpack.c.l.bf16 %v4264
      %v4531 = vunpack.c.h.bf16 %v4264
      %v4532 = vunpack.c.l.bf16 %v4265
      %v4533 = vunpack.c.h.bf16 %v4265
      %v4534 = vunpack.c.l.bf16 %v4266
      %v4535 = vunpack.c.h.bf16 %v4266
      %v4536 = vunpack.c.l.bf16 %v4267
      %v4537 = vunpack.c.h.bf16 %v4267
      %v4538 = vunpack.c.l.bf16 %v4268
      %v4539 = vunpack.c.h.bf16 %v4268
      %v4540 = vunpack.c.l.bf16 %v4269
      %v4541 = vunpack.c.h.bf16 %v4269
      %v4542 = vunpack.c.l.bf16 %v4270
      %v4543 = vunpack.c.h.bf16 %v4270
      %v4544 = vunpack.c.l.bf16 %v4271
      %v4545 = vunpack.c.h.bf16 %v4271
      %v4546 = vunpack.c.l.bf16 %v4272
      %v4547 = vunpack.c.h.bf16 %v4272
      %v4548 = vunpack.c.l.bf16 %v4273
      %v4549 = vunpack.c.h.bf16 %v4273
      %v4550 = vunpack.c.l.bf16 %v4274
      %v4551 = vunpack.c.h.bf16 %v4274
      %v4552 = vunpack.c.l.bf16 %v4275
      %v4553 = vunpack.c.h.bf16 %v4275
      %v4554 = vunpack.c.l.bf16 %v4276
      %v4555 = vunpack.c.h.bf16 %v4276
      %v4556 = vunpack.c.l.bf16 %v4277
      %v4557 = vunpack.c.h.bf16 %v4277
      %v4558 = vunpack.c.l.bf16 %v4278
      %v4559 = vunpack.c.h.bf16 %v4278
      %v4560 = vunpack.c.l.bf16 %v4279
      %v4561 = vunpack.c.h.bf16 %v4279
      %v4562 = vunpack.c.l.bf16 %v4280
      %v4563 = vunpack.c.h.bf16 %v4280
      %v4564 = vunpack.c.l.bf16 %v4281
      %v4565 = vunpack.c.h.bf16 %v4281
      %v4566 = vunpack.c.l.bf16 %v4282
      %v4567 = vunpack.c.h.bf16 %v4282
      %v4568 = vunpack.c.l.bf16 %v4283
      %v4569 = vunpack.c.h.bf16 %v4283
      %v4570 = vunpack.c.l.bf16 %v4284
      %v4571 = vunpack.c.h.bf16 %v4284
      %v4572 = vunpack.c.l.bf16 %v4285
      %v4573 = vunpack.c.h.bf16 %v4285
      %v4574 = vunpack.c.l.bf16 %v4286
      %v4575 = vunpack.c.h.bf16 %v4286
      %v4576 = vunpack.c.l.bf16 %v4287
      %v4577 = vunpack.c.h.bf16 %v4287
      %v4578 = vunpack.c.l.bf16 %v4288
      %v4579 = vunpack.c.h.bf16 %v4288
      %v4580 = vunpack.c.l.bf16 %v4289
      %v4581 = vunpack.c.h.bf16 %v4289
      %v4582 = vunpack.c.l.bf16 %v4290
      %v4583 = vunpack.c.h.bf16 %v4290
      %v4584 = vunpack.c.l.bf16 %v4291
      %v4585 = vunpack.c.h.bf16 %v4291
      %v4586 = vunpack.c.l.bf16 %v4292
      %v4587 = vunpack.c.h.bf16 %v4292
      %v4588 = vunpack.c.l.bf16 %v4293
      %v4589 = vunpack.c.h.bf16 %v4293
      %v4590 = vunpack.c.l.bf16 %v4294
      %v4591 = vunpack.c.h.bf16 %v4294
      %v4592 = vunpack.c.l.bf16 %v4295
      %v4593 = vunpack.c.h.bf16 %v4295
      %v4594 = vunpack.c.l.bf16 %v4296
      %v4595 = vunpack.c.h.bf16 %v4296
      %v4596 = vunpack.c.l.bf16 %v4297
      %v4597 = vunpack.c.h.bf16 %v4297
      %v4598 = vunpack.c.l.bf16 %v4298
      %v4599 = vunpack.c.h.bf16 %v4298
      %v4600 = vunpack.c.l.bf16 %v4299
      %v4601 = vunpack.c.h.bf16 %v4299
      %v4602 = vunpack.c.l.bf16 %v4300
      %v4603 = vunpack.c.h.bf16 %v4300
      %v4604 = vunpack.c.l.bf16 %v4301
      %v4605 = vunpack.c.h.bf16 %v4301
      %v4606 = vunpack.c.l.bf16 %v4302
      %v4607 = vunpack.c.h.bf16 %v4302
      %v4608 = vunpack.c.l.bf16 %v4303
      %v4609 = vunpack.c.h.bf16 %v4303
      %v4610 = vunpack.c.l.bf16 %v4304
      %v4611 = vunpack.c.h.bf16 %v4304
      %v4612 = vunpack.c.l.bf16 %v4305
      %v4613 = vunpack.c.h.bf16 %v4305
      %v4614 = vunpack.c.l.bf16 %v4306
      %v4615 = vunpack.c.h.bf16 %v4306
      %v4616 = vunpack.c.l.bf16 %v4307
      %v4617 = vunpack.c.h.bf16 %v4307
      %v4618 = vunpack.c.l.bf16 %v4308
      %v4619 = vunpack.c.h.bf16 %v4308
      %v4620 = vunpack.c.l.bf16 %v4309
      %v4621 = vunpack.c.h.bf16 %v4309
      %v4622 = vunpack.c.l.bf16 %v4310
      %v4623 = vunpack.c.h.bf16 %v4310
      %v4624 = vunpack.c.l.bf16 %v4311
      %v4625 = vunpack.c.h.bf16 %v4311
      %v4626 = vunpack.c.l.bf16 %v4312
      %v4627 = vunpack.c.h.bf16 %v4312
      %v4628 = vunpack.c.l.bf16 %v4313
      %v4629 = vunpack.c.h.bf16 %v4313
      %v4630 = vunpack.c.l.bf16 %v4314
      %v4631 = vunpack.c.h.bf16 %v4314
      %v4632 = vunpack.c.l.bf16 %v4315
      %v4633 = vunpack.c.h.bf16 %v4315
      %v4634 = vunpack.c.l.bf16 %v4316
      %v4635 = vunpack.c.h.bf16 %v4316
      %v4636 = vunpack.c.l.bf16 %v4317
      %v4637 = vunpack.c.h.bf16 %v4317
      %v4638 = vmul.f32 %v2718, %v4318
      %v4639 = vmul.f32 %v2719, %v4319
      %v4640 = vmul.f32 %v2720, %v4320
      %v4641 = vmul.f32 %v2721, %v4321
      %v4642 = vmul.f32 %v2722, %v4322
      %v4643 = vmul.f32 %v2723, %v4323
      %v4644 = vmul.f32 %v2724, %v4324
      %v4645 = vmul.f32 %v2725, %v4325
      %v4646 = vmul.f32 %v2726, %v4326
      %v4647 = vmul.f32 %v2727, %v4327
      %v4648 = vmul.f32 %v2728, %v4328
      %v4649 = vmul.f32 %v2729, %v4329
      %v4650 = vmul.f32 %v2730, %v4330
      %v4651 = vmul.f32 %v2731, %v4331
      %v4652 = vmul.f32 %v2732, %v4332
      %v4653 = vmul.f32 %v2733, %v4333
      %v4654 = vmul.f32 %v2734, %v4334
      %v4655 = vmul.f32 %v2735, %v4335
      %v4656 = vmul.f32 %v2736, %v4336
      %v4657 = vmul.f32 %v2737, %v4337
      %v4658 = vmul.f32 %v2738, %v4338
      %v4659 = vmul.f32 %v2739, %v4339
      %v4660 = vmul.f32 %v2740, %v4340
      %v4661 = vmul.f32 %v2741, %v4341
      %v4662 = vmul.f32 %v2742, %v4342
      %v4663 = vmul.f32 %v2743, %v4343
      %v4664 = vmul.f32 %v2744, %v4344
      %v4665 = vmul.f32 %v2745, %v4345
      %v4666 = vmul.f32 %v2746, %v4346
      %v4667 = vmul.f32 %v2747, %v4347
      %v4668 = vmul.f32 %v2748, %v4348
      %v4669 = vmul.f32 %v2749, %v4349
      %v4670 = vmul.f32 %v2750, %v4350
      %v4671 = vmul.f32 %v2751, %v4351
      %v4672 = vmul.f32 %v2752, %v4352
      %v4673 = vmul.f32 %v2753, %v4353
      %v4674 = vmul.f32 %v2754, %v4354
      %v4675 = vmul.f32 %v2755, %v4355
      %v4676 = vmul.f32 %v2756, %v4356
      %v4677 = vmul.f32 %v2757, %v4357
      %v4678 = vmul.f32 %v2758, %v4358
      %v4679 = vmul.f32 %v2759, %v4359
      %v4680 = vmul.f32 %v2760, %v4360
      %v4681 = vmul.f32 %v2761, %v4361
      %v4682 = vmul.f32 %v2762, %v4362
      %v4683 = vmul.f32 %v2763, %v4363
      %v4684 = vmul.f32 %v2764, %v4364
      %v4685 = vmul.f32 %v2765, %v4365
      %v4686 = vmul.f32 %v2766, %v4366
      %v4687 = vmul.f32 %v2767, %v4367
      %v4688 = vmul.f32 %v2768, %v4368
      %v4689 = vmul.f32 %v2769, %v4369
      %v4690 = vmul.f32 %v2770, %v4370
      %v4691 = vmul.f32 %v2771, %v4371
      %v4692 = vmul.f32 %v2772, %v4372
      %v4693 = vmul.f32 %v2773, %v4373
      %v4694 = vmul.f32 %v2774, %v4374
      %v4695 = vmul.f32 %v2775, %v4375
      %v4696 = vmul.f32 %v2776, %v4376
      %v4697 = vmul.f32 %v2777, %v4377
      %v4698 = vmul.f32 %v2778, %v4378
      %v4699 = vmul.f32 %v2779, %v4379
      %v4700 = vmul.f32 %v2780, %v4380
      %v4701 = vmul.f32 %v2781, %v4381
      %v4702 = vmul.f32 %v2782, %v4382
      %v4703 = vmul.f32 %v2783, %v4383
      %v4704 = vmul.f32 %v2784, %v4384
      %v4705 = vmul.f32 %v2785, %v4385
      %v4706 = vmul.f32 %v2786, %v4386
      %v4707 = vmul.f32 %v2787, %v4387
      %v4708 = vmul.f32 %v2788, %v4388
      %v4709 = vmul.f32 %v2789, %v4389
      %v4710 = vmul.f32 %v2790, %v4390
      %v4711 = vmul.f32 %v2791, %v4391
      %v4712 = vmul.f32 %v2792, %v4392
      %v4713 = vmul.f32 %v2793, %v4393
      %v4714 = vmul.f32 %v2794, %v4394
      %v4715 = vmul.f32 %v2795, %v4395
      %v4716 = vmul.f32 %v2796, %v4396
      %v4717 = vmul.f32 %v2797, %v4397
      %v4718 = vmul.f32 %v2798, %v4398
      %v4719 = vmul.f32 %v2799, %v4399
      %v4720 = vmul.f32 %v2800, %v4400
      %v4721 = vmul.f32 %v2801, %v4401
      %v4722 = vmul.f32 %v2802, %v4402
      %v4723 = vmul.f32 %v2803, %v4403
      %v4724 = vmul.f32 %v2804, %v4404
      %v4725 = vmul.f32 %v2805, %v4405
      %v4726 = vmul.f32 %v2806, %v4406
      %v4727 = vmul.f32 %v2807, %v4407
      %v4728 = vmul.f32 %v2808, %v4408
      %v4729 = vmul.f32 %v2809, %v4409
      %v4730 = vmul.f32 %v2810, %v4410
      %v4731 = vmul.f32 %v2811, %v4411
      %v4732 = vmul.f32 %v2812, %v4412
      %v4733 = vmul.f32 %v2813, %v4413
      %v4734 = vmul.f32 %v2814, %v4414
      %v4735 = vmul.f32 %v2815, %v4415
      %v4736 = vmul.f32 %v2816, %v4416
      %v4737 = vmul.f32 %v2817, %v4417
      %v4738 = vmul.f32 %v2818, %v4418
      %v4739 = vmul.f32 %v2819, %v4419
      %v4740 = vmul.f32 %v2820, %v4420
      %v4741 = vmul.f32 %v2821, %v4421
      %v4742 = vmul.f32 %v2822, %v4422
      %v4743 = vmul.f32 %v2823, %v4423
      %v4744 = vmul.f32 %v2824, %v4424
      %v4745 = vmul.f32 %v2825, %v4425
      %v4746 = vmul.f32 %v2826, %v4426
      %v4747 = vmul.f32 %v2827, %v4427
      %v4748 = vmul.f32 %v2828, %v4428
      %v4749 = vmul.f32 %v2829, %v4429
      %v4750 = vmul.f32 %v2830, %v4430
      %v4751 = vmul.f32 %v2831, %v4431
      %v4752 = vmul.f32 %v2832, %v4432
      %v4753 = vmul.f32 %v2833, %v4433
      %v4754 = vmul.f32 %v2834, %v4434
      %v4755 = vmul.f32 %v2835, %v4435
      %v4756 = vmul.f32 %v2836, %v4436
      %v4757 = vmul.f32 %v2837, %v4437
      %v4758 = vmul.f32 %v2838, %v4438
      %v4759 = vmul.f32 %v2839, %v4439
      %v4760 = vmul.f32 %v2840, %v4440
      %v4761 = vmul.f32 %v2841, %v4441
      %v4762 = vmul.f32 %v2842, %v4442
      %v4763 = vmul.f32 %v2843, %v4443
      %v4764 = vmul.f32 %v2844, %v4444
      %v4765 = vmul.f32 %v2845, %v4445
      %v4766 = vmul.f32 %v2846, %v4446
      %v4767 = vmul.f32 %v2847, %v4447
      %v4768 = vmul.f32 %v2848, %v4448
      %v4769 = vmul.f32 %v2849, %v4449
      %v4770 = vmul.f32 %v2850, %v4450
      %v4771 = vmul.f32 %v2851, %v4451
      %v4772 = vmul.f32 %v2852, %v4452
      %v4773 = vmul.f32 %v2853, %v4453
      %v4774 = vmul.f32 %v2854, %v4454
      %v4775 = vmul.f32 %v2855, %v4455
      %v4776 = vmul.f32 %v2856, %v4456
      %v4777 = vmul.f32 %v2857, %v4457
      %v4778 = vmul.f32 %v2858, %v4458
      %v4779 = vmul.f32 %v2859, %v4459
      %v4780 = vmul.f32 %v2860, %v4460
      %v4781 = vmul.f32 %v2861, %v4461
      %v4782 = vmul.f32 %v2862, %v4462
      %v4783 = vmul.f32 %v2863, %v4463
      %v4784 = vmul.f32 %v2864, %v4464
      %v4785 = vmul.f32 %v2865, %v4465
      %v4786 = vmul.f32 %v2866, %v4466
      %v4787 = vmul.f32 %v2867, %v4467
      %v4788 = vmul.f32 %v2868, %v4468
      %v4789 = vmul.f32 %v2869, %v4469
      %v4790 = vmul.f32 %v2870, %v4470
      %v4791 = vmul.f32 %v2871, %v4471
      %v4792 = vmul.f32 %v2872, %v4472
      %v4793 = vmul.f32 %v2873, %v4473
      %v4794 = vmul.f32 %v2874, %v4474
      %v4795 = vmul.f32 %v2875, %v4475
      %v4796 = vmul.f32 %v2876, %v4476
      %v4797 = vmul.f32 %v2877, %v4477
      %v4798 = vmul.f32 %v2878, %v4478
      %v4799 = vmul.f32 %v2879, %v4479
      %v4800 = vmul.f32 %v2880, %v4480
      %v4801 = vmul.f32 %v2881, %v4481
      %v4802 = vmul.f32 %v2882, %v4482
      %v4803 = vmul.f32 %v2883, %v4483
      %v4804 = vmul.f32 %v2884, %v4484
      %v4805 = vmul.f32 %v2885, %v4485
      %v4806 = vmul.f32 %v2886, %v4486
      %v4807 = vmul.f32 %v2887, %v4487
      %v4808 = vmul.f32 %v2888, %v4488
      %v4809 = vmul.f32 %v2889, %v4489
      %v4810 = vmul.f32 %v2890, %v4490
      %v4811 = vmul.f32 %v2891, %v4491
      %v4812 = vmul.f32 %v2892, %v4492
      %v4813 = vmul.f32 %v2893, %v4493
      %v4814 = vmul.f32 %v2894, %v4494
      %v4815 = vmul.f32 %v2895, %v4495
      %v4816 = vmul.f32 %v2896, %v4496
      %v4817 = vmul.f32 %v2897, %v4497
      %v4818 = vmul.f32 %v2898, %v4498
      %v4819 = vmul.f32 %v2899, %v4499
      %v4820 = vmul.f32 %v2900, %v4500
      %v4821 = vmul.f32 %v2901, %v4501
      %v4822 = vmul.f32 %v2902, %v4502
      %v4823 = vmul.f32 %v2903, %v4503
      %v4824 = vmul.f32 %v2904, %v4504
      %v4825 = vmul.f32 %v2905, %v4505
      %v4826 = vmul.f32 %v2906, %v4506
      %v4827 = vmul.f32 %v2907, %v4507
      %v4828 = vmul.f32 %v2908, %v4508
      %v4829 = vmul.f32 %v2909, %v4509
      %v4830 = vmul.f32 %v2910, %v4510
      %v4831 = vmul.f32 %v2911, %v4511
      %v4832 = vmul.f32 %v2912, %v4512
      %v4833 = vmul.f32 %v2913, %v4513
      %v4834 = vmul.f32 %v2914, %v4514
      %v4835 = vmul.f32 %v2915, %v4515
      %v4836 = vmul.f32 %v2916, %v4516
      %v4837 = vmul.f32 %v2917, %v4517
      %v4838 = vmul.f32 %v2918, %v4518
      %v4839 = vmul.f32 %v2919, %v4519
      %v4840 = vmul.f32 %v2920, %v4520
      %v4841 = vmul.f32 %v2921, %v4521
      %v4842 = vmul.f32 %v2922, %v4522
      %v4843 = vmul.f32 %v2923, %v4523
      %v4844 = vmul.f32 %v2924, %v4524
      %v4845 = vmul.f32 %v2925, %v4525
      %v4846 = vmul.f32 %v2926, %v4526
      %v4847 = vmul.f32 %v2927, %v4527
      %v4848 = vmul.f32 %v2928, %v4528
      %v4849 = vmul.f32 %v2929, %v4529
      %v4850 = vmul.f32 %v2930, %v4530
      %v4851 = vmul.f32 %v2931, %v4531
      %v4852 = vmul.f32 %v2932, %v4532
      %v4853 = vmul.f32 %v2933, %v4533
      %v4854 = vmul.f32 %v2934, %v4534
      %v4855 = vmul.f32 %v2935, %v4535
      %v4856 = vmul.f32 %v2936, %v4536
      %v4857 = vmul.f32 %v2937, %v4537
      %v4858 = vmul.f32 %v2938, %v4538
      %v4859 = vmul.f32 %v2939, %v4539
      %v4860 = vmul.f32 %v2940, %v4540
      %v4861 = vmul.f32 %v2941, %v4541
      %v4862 = vmul.f32 %v2942, %v4542
      %v4863 = vmul.f32 %v2943, %v4543
      %v4864 = vmul.f32 %v2944, %v4544
      %v4865 = vmul.f32 %v2945, %v4545
      %v4866 = vmul.f32 %v2946, %v4546
      %v4867 = vmul.f32 %v2947, %v4547
      %v4868 = vmul.f32 %v2948, %v4548
      %v4869 = vmul.f32 %v2949, %v4549
      %v4870 = vmul.f32 %v2950, %v4550
      %v4871 = vmul.f32 %v2951, %v4551
      %v4872 = vmul.f32 %v2952, %v4552
      %v4873 = vmul.f32 %v2953, %v4553
      %v4874 = vmul.f32 %v2954, %v4554
      %v4875 = vmul.f32 %v2955, %v4555
      %v4876 = vmul.f32 %v2956, %v4556
      %v4877 = vmul.f32 %v2957, %v4557
      %v4878 = vmul.f32 %v2958, %v4558
      %v4879 = vmul.f32 %v2959, %v4559
      %v4880 = vmul.f32 %v2960, %v4560
      %v4881 = vmul.f32 %v2961, %v4561
      %v4882 = vmul.f32 %v2962, %v4562
      %v4883 = vmul.f32 %v2963, %v4563
      %v4884 = vmul.f32 %v2964, %v4564
      %v4885 = vmul.f32 %v2965, %v4565
      %v4886 = vmul.f32 %v2966, %v4566
      %v4887 = vmul.f32 %v2967, %v4567
      %v4888 = vmul.f32 %v2968, %v4568
      %v4889 = vmul.f32 %v2969, %v4569
      %v4890 = vmul.f32 %v2970, %v4570
      %v4891 = vmul.f32 %v2971, %v4571
      %v4892 = vmul.f32 %v2972, %v4572
      %v4893 = vmul.f32 %v2973, %v4573
      %v4894 = vmul.f32 %v2974, %v4574
      %v4895 = vmul.f32 %v2975, %v4575
      %v4896 = vmul.f32 %v2976, %v4576
      %v4897 = vmul.f32 %v2977, %v4577
      %v4898 = vmul.f32 %v2978, %v4578
      %v4899 = vmul.f32 %v2979, %v4579
      %v4900 = vmul.f32 %v2980, %v4580
      %v4901 = vmul.f32 %v2981, %v4581
      %v4902 = vmul.f32 %v2982, %v4582
      %v4903 = vmul.f32 %v2983, %v4583
      %v4904 = vmul.f32 %v2984, %v4584
      %v4905 = vmul.f32 %v2985, %v4585
      %v4906 = vmul.f32 %v2986, %v4586
      %v4907 = vmul.f32 %v2987, %v4587
      %v4908 = vmul.f32 %v2988, %v4588
      %v4909 = vmul.f32 %v2989, %v4589
      %v4910 = vmul.f32 %v2990, %v4590
      %v4911 = vmul.f32 %v2991, %v4591
      %v4912 = vmul.f32 %v2992, %v4592
      %v4913 = vmul.f32 %v2993, %v4593
      %v4914 = vmul.f32 %v2994, %v4594
      %v4915 = vmul.f32 %v2995, %v4595
      %v4916 = vmul.f32 %v2996, %v4596
      %v4917 = vmul.f32 %v2997, %v4597
      %v4918 = vmul.f32 %v2998, %v4598
      %v4919 = vmul.f32 %v2999, %v4599
      %v4920 = vmul.f32 %v3000, %v4600
      %v4921 = vmul.f32 %v3001, %v4601
      %v4922 = vmul.f32 %v3002, %v4602
      %v4923 = vmul.f32 %v3003, %v4603
      %v4924 = vmul.f32 %v3004, %v4604
      %v4925 = vmul.f32 %v3005, %v4605
      %v4926 = vmul.f32 %v3006, %v4606
      %v4927 = vmul.f32 %v3007, %v4607
      %v4928 = vmul.f32 %v3008, %v4608
      %v4929 = vmul.f32 %v3009, %v4609
      %v4930 = vmul.f32 %v3010, %v4610
      %v4931 = vmul.f32 %v3011, %v4611
      %v4932 = vmul.f32 %v3012, %v4612
      %v4933 = vmul.f32 %v3013, %v4613
      %v4934 = vmul.f32 %v3014, %v4614
      %v4935 = vmul.f32 %v3015, %v4615
      %v4936 = vmul.f32 %v3016, %v4616
      %v4937 = vmul.f32 %v3017, %v4617
      %v4938 = vmul.f32 %v3018, %v4618
      %v4939 = vmul.f32 %v3019, %v4619
      %v4940 = vmul.f32 %v3020, %v4620
      %v4941 = vmul.f32 %v3021, %v4621
      %v4942 = vmul.f32 %v3022, %v4622
      %v4943 = vmul.f32 %v3023, %v4623
      %v4944 = vmul.f32 %v3024, %v4624
      %v4945 = vmul.f32 %v3025, %v4625
      %v4946 = vmul.f32 %v3026, %v4626
      %v4947 = vmul.f32 %v3027, %v4627
      %v4948 = vmul.f32 %v3028, %v4628
      %v4949 = vmul.f32 %v3029, %v4629
      %v4950 = vmul.f32 %v3030, %v4630
      %v4951 = vmul.f32 %v3031, %v4631
      %v4952 = vmul.f32 %v3032, %v4632
      %v4953 = vmul.f32 %v3033, %v4633
      %v4954 = vmul.f32 %v3034, %v4634
      %v4955 = vmul.f32 %v3035, %v4635
      %v4956 = vmul.f32 %v3036, %v4636
      %v4957 = vmul.f32 %v3037, %v4637
      %v4958 = vpack.c.bf16 %v4648, %v4638
      %v4959 = vpack.c.bf16 %v4649, %v4639
      %v4960 = vpack.c.bf16 %v4650, %v4640
      %v4961 = vpack.c.bf16 %v4651, %v4641
      %v4962 = vpack.c.bf16 %v4652, %v4642
      %v4963 = vpack.c.bf16 %v4653, %v4643
      %v4964 = vpack.c.bf16 %v4654, %v4644
      %v4965 = vpack.c.bf16 %v4655, %v4645
      %v4966 = vpack.c.bf16 %v4656, %v4646
      %v4967 = vpack.c.bf16 %v4657, %v4647
      %v4968 = vpack.c.bf16 %v4668, %v4658
      %v4969 = vpack.c.bf16 %v4669, %v4659
      %v4970 = vpack.c.bf16 %v4670, %v4660
      %v4971 = vpack.c.bf16 %v4671, %v4661
      %v4972 = vpack.c.bf16 %v4672, %v4662
      %v4973 = vpack.c.bf16 %v4673, %v4663
      %v4974 = vpack.c.bf16 %v4674, %v4664
      %v4975 = vpack.c.bf16 %v4675, %v4665
      %v4976 = vpack.c.bf16 %v4676, %v4666
      %v4977 = vpack.c.bf16 %v4677, %v4667
      %v4978 = vpack.c.bf16 %v4688, %v4678
      %v4979 = vpack.c.bf16 %v4689, %v4679
      %v4980 = vpack.c.bf16 %v4690, %v4680
      %v4981 = vpack.c.bf16 %v4691, %v4681
      %v4982 = vpack.c.bf16 %v4692, %v4682
      %v4983 = vpack.c.bf16 %v4693, %v4683
      %v4984 = vpack.c.bf16 %v4694, %v4684
      %v4985 = vpack.c.bf16 %v4695, %v4685
      %v4986 = vpack.c.bf16 %v4696, %v4686
      %v4987 = vpack.c.bf16 %v4697, %v4687
      %v4988 = vpack.c.bf16 %v4708, %v4698
      %v4989 = vpack.c.bf16 %v4709, %v4699
      %v4990 = vpack.c.bf16 %v4710, %v4700
      %v4991 = vpack.c.bf16 %v4711, %v4701
      %v4992 = vpack.c.bf16 %v4712, %v4702
      %v4993 = vpack.c.bf16 %v4713, %v4703
      %v4994 = vpack.c.bf16 %v4714, %v4704
      %v4995 = vpack.c.bf16 %v4715, %v4705
      %v4996 = vpack.c.bf16 %v4716, %v4706
      %v4997 = vpack.c.bf16 %v4717, %v4707
      %v4998 = vpack.c.bf16 %v4728, %v4718
      %v4999 = vpack.c.bf16 %v4729, %v4719
      %v5000 = vpack.c.bf16 %v4730, %v4720
      %v5001 = vpack.c.bf16 %v4731, %v4721
      %v5002 = vpack.c.bf16 %v4732, %v4722
      %v5003 = vpack.c.bf16 %v4733, %v4723
      %v5004 = vpack.c.bf16 %v4734, %v4724
      %v5005 = vpack.c.bf16 %v4735, %v4725
      %v5006 = vpack.c.bf16 %v4736, %v4726
      %v5007 = vpack.c.bf16 %v4737, %v4727
      %v5008 = vpack.c.bf16 %v4748, %v4738
      %v5009 = vpack.c.bf16 %v4749, %v4739
      %v5010 = vpack.c.bf16 %v4750, %v4740
      %v5011 = vpack.c.bf16 %v4751, %v4741
      %v5012 = vpack.c.bf16 %v4752, %v4742
      %v5013 = vpack.c.bf16 %v4753, %v4743
      %v5014 = vpack.c.bf16 %v4754, %v4744
      %v5015 = vpack.c.bf16 %v4755, %v4745
      %v5016 = vpack.c.bf16 %v4756, %v4746
      %v5017 = vpack.c.bf16 %v4757, %v4747
      %v5018 = vpack.c.bf16 %v4768, %v4758
      %v5019 = vpack.c.bf16 %v4769, %v4759
      %v5020 = vpack.c.bf16 %v4770, %v4760
      %v5021 = vpack.c.bf16 %v4771, %v4761
      %v5022 = vpack.c.bf16 %v4772, %v4762
      %v5023 = vpack.c.bf16 %v4773, %v4763
      %v5024 = vpack.c.bf16 %v4774, %v4764
      %v5025 = vpack.c.bf16 %v4775, %v4765
      %v5026 = vpack.c.bf16 %v4776, %v4766
      %v5027 = vpack.c.bf16 %v4777, %v4767
      %v5028 = vpack.c.bf16 %v4788, %v4778
      %v5029 = vpack.c.bf16 %v4789, %v4779
      %v5030 = vpack.c.bf16 %v4790, %v4780
      %v5031 = vpack.c.bf16 %v4791, %v4781
      %v5032 = vpack.c.bf16 %v4792, %v4782
      %v5033 = vpack.c.bf16 %v4793, %v4783
      %v5034 = vpack.c.bf16 %v4794, %v4784
      %v5035 = vpack.c.bf16 %v4795, %v4785
      %v5036 = vpack.c.bf16 %v4796, %v4786
      %v5037 = vpack.c.bf16 %v4797, %v4787
      %v5038 = vpack.c.bf16 %v4808, %v4798
      %v5039 = vpack.c.bf16 %v4809, %v4799
      %v5040 = vpack.c.bf16 %v4810, %v4800
      %v5041 = vpack.c.bf16 %v4811, %v4801
      %v5042 = vpack.c.bf16 %v4812, %v4802
      %v5043 = vpack.c.bf16 %v4813, %v4803
      %v5044 = vpack.c.bf16 %v4814, %v4804
      %v5045 = vpack.c.bf16 %v4815, %v4805
      %v5046 = vpack.c.bf16 %v4816, %v4806
      %v5047 = vpack.c.bf16 %v4817, %v4807
      %v5048 = vpack.c.bf16 %v4828, %v4818
      %v5049 = vpack.c.bf16 %v4829, %v4819
      %v5050 = vpack.c.bf16 %v4830, %v4820
      %v5051 = vpack.c.bf16 %v4831, %v4821
      %v5052 = vpack.c.bf16 %v4832, %v4822
      %v5053 = vpack.c.bf16 %v4833, %v4823
      %v5054 = vpack.c.bf16 %v4834, %v4824
      %v5055 = vpack.c.bf16 %v4835, %v4825
      %v5056 = vpack.c.bf16 %v4836, %v4826
      %v5057 = vpack.c.bf16 %v4837, %v4827
      %v5058 = vpack.c.bf16 %v4848, %v4838
      %v5059 = vpack.c.bf16 %v4849, %v4839
      %v5060 = vpack.c.bf16 %v4850, %v4840
      %v5061 = vpack.c.bf16 %v4851, %v4841
      %v5062 = vpack.c.bf16 %v4852, %v4842
      %v5063 = vpack.c.bf16 %v4853, %v4843
      %v5064 = vpack.c.bf16 %v4854, %v4844
      %v5065 = vpack.c.bf16 %v4855, %v4845
      %v5066 = vpack.c.bf16 %v4856, %v4846
      %v5067 = vpack.c.bf16 %v4857, %v4847
      %v5068 = vpack.c.bf16 %v4868, %v4858
      %v5069 = vpack.c.bf16 %v4869, %v4859
      %v5070 = vpack.c.bf16 %v4870, %v4860
      %v5071 = vpack.c.bf16 %v4871, %v4861
      %v5072 = vpack.c.bf16 %v4872, %v4862
      %v5073 = vpack.c.bf16 %v4873, %v4863
      %v5074 = vpack.c.bf16 %v4874, %v4864
      %v5075 = vpack.c.bf16 %v4875, %v4865
      %v5076 = vpack.c.bf16 %v4876, %v4866
      %v5077 = vpack.c.bf16 %v4877, %v4867
      %v5078 = vpack.c.bf16 %v4888, %v4878
      %v5079 = vpack.c.bf16 %v4889, %v4879
      %v5080 = vpack.c.bf16 %v4890, %v4880
      %v5081 = vpack.c.bf16 %v4891, %v4881
      %v5082 = vpack.c.bf16 %v4892, %v4882
      %v5083 = vpack.c.bf16 %v4893, %v4883
      %v5084 = vpack.c.bf16 %v4894, %v4884
      %v5085 = vpack.c.bf16 %v4895, %v4885
      %v5086 = vpack.c.bf16 %v4896, %v4886
      %v5087 = vpack.c.bf16 %v4897, %v4887
      %v5088 = vpack.c.bf16 %v4908, %v4898
      %v5089 = vpack.c.bf16 %v4909, %v4899
      %v5090 = vpack.c.bf16 %v4910, %v4900
      %v5091 = vpack.c.bf16 %v4911, %v4901
      %v5092 = vpack.c.bf16 %v4912, %v4902
      %v5093 = vpack.c.bf16 %v4913, %v4903
      %v5094 = vpack.c.bf16 %v4914, %v4904
      %v5095 = vpack.c.bf16 %v4915, %v4905
      %v5096 = vpack.c.bf16 %v4916, %v4906
      %v5097 = vpack.c.bf16 %v4917, %v4907
      %v5098 = vpack.c.bf16 %v4928, %v4918
      %v5099 = vpack.c.bf16 %v4929, %v4919
      %v5100 = vpack.c.bf16 %v4930, %v4920
      %v5101 = vpack.c.bf16 %v4931, %v4921
      %v5102 = vpack.c.bf16 %v4932, %v4922
      %v5103 = vpack.c.bf16 %v4933, %v4923
      %v5104 = vpack.c.bf16 %v4934, %v4924
      %v5105 = vpack.c.bf16 %v4935, %v4925
      %v5106 = vpack.c.bf16 %v4936, %v4926
      %v5107 = vpack.c.bf16 %v4937, %v4927
      %v5108 = vpack.c.bf16 %v4948, %v4938
      %v5109 = vpack.c.bf16 %v4949, %v4939
      %v5110 = vpack.c.bf16 %v4950, %v4940
      %v5111 = vpack.c.bf16 %v4951, %v4941
      %v5112 = vpack.c.bf16 %v4952, %v4942
      %v5113 = vpack.c.bf16 %v4953, %v4943
      %v5114 = vpack.c.bf16 %v4954, %v4944
      %v5115 = vpack.c.bf16 %v4955, %v4945
      %v5116 = vpack.c.bf16 %v4956, %v4946
      %v5117 = vpack.c.bf16 %v4957, %v4947
      %v5118 = vunpack.c.l.bf16 %v4958
      %v5119 = vunpack.c.l.bf16 %v4959
      %v5120 = vunpack.c.l.bf16 %v4960
      %v5121 = vunpack.c.l.bf16 %v4961
      %v5122 = vunpack.c.l.bf16 %v4962
      %v5123 = vunpack.c.l.bf16 %v4963
      %v5124 = vunpack.c.l.bf16 %v4964
      %v5125 = vunpack.c.l.bf16 %v4965
      %v5126 = vunpack.c.l.bf16 %v4966
      %v5127 = vunpack.c.l.bf16 %v4967
      %v5128 = vunpack.c.h.bf16 %v4958
      %v5129 = vunpack.c.h.bf16 %v4959
      %v5130 = vunpack.c.h.bf16 %v4960
      %v5131 = vunpack.c.h.bf16 %v4961
      %v5132 = vunpack.c.h.bf16 %v4962
      %v5133 = vunpack.c.h.bf16 %v4963
      %v5134 = vunpack.c.h.bf16 %v4964
      %v5135 = vunpack.c.h.bf16 %v4965
      %v5136 = vunpack.c.h.bf16 %v4966
      %v5137 = vunpack.c.h.bf16 %v4967
      %v5138 = vunpack.c.l.bf16 %v4968
      %v5139 = vunpack.c.l.bf16 %v4969
      %v5140 = vunpack.c.l.bf16 %v4970
      %v5141 = vunpack.c.l.bf16 %v4971
      %v5142 = vunpack.c.l.bf16 %v4972
      %v5143 = vunpack.c.l.bf16 %v4973
      %v5144 = vunpack.c.l.bf16 %v4974
      %v5145 = vunpack.c.l.bf16 %v4975
      %v5146 = vunpack.c.l.bf16 %v4976
      %v5147 = vunpack.c.l.bf16 %v4977
      %v5148 = vunpack.c.h.bf16 %v4968
      %v5149 = vunpack.c.h.bf16 %v4969
      %v5150 = vunpack.c.h.bf16 %v4970
      %v5151 = vunpack.c.h.bf16 %v4971
      %v5152 = vunpack.c.h.bf16 %v4972
      %v5153 = vunpack.c.h.bf16 %v4973
      %v5154 = vunpack.c.h.bf16 %v4974
      %v5155 = vunpack.c.h.bf16 %v4975
      %v5156 = vunpack.c.h.bf16 %v4976
      %v5157 = vunpack.c.h.bf16 %v4977
      %v5158 = vunpack.c.l.bf16 %v4978
      %v5159 = vunpack.c.l.bf16 %v4979
      %v5160 = vunpack.c.l.bf16 %v4980
      %v5161 = vunpack.c.l.bf16 %v4981
      %v5162 = vunpack.c.l.bf16 %v4982
      %v5163 = vunpack.c.l.bf16 %v4983
      %v5164 = vunpack.c.l.bf16 %v4984
      %v5165 = vunpack.c.l.bf16 %v4985
      %v5166 = vunpack.c.l.bf16 %v4986
      %v5167 = vunpack.c.l.bf16 %v4987
      %v5168 = vunpack.c.h.bf16 %v4978
      %v5169 = vunpack.c.h.bf16 %v4979
      %v5170 = vunpack.c.h.bf16 %v4980
      %v5171 = vunpack.c.h.bf16 %v4981
      %v5172 = vunpack.c.h.bf16 %v4982
      %v5173 = vunpack.c.h.bf16 %v4983
      %v5174 = vunpack.c.h.bf16 %v4984
      %v5175 = vunpack.c.h.bf16 %v4985
      %v5176 = vunpack.c.h.bf16 %v4986
      %v5177 = vunpack.c.h.bf16 %v4987
      %v5178 = vunpack.c.l.bf16 %v4988
      %v5179 = vunpack.c.l.bf16 %v4989
      %v5180 = vunpack.c.l.bf16 %v4990
      %v5181 = vunpack.c.l.bf16 %v4991
      %v5182 = vunpack.c.l.bf16 %v4992
      %v5183 = vunpack.c.l.bf16 %v4993
      %v5184 = vunpack.c.l.bf16 %v4994
      %v5185 = vunpack.c.l.bf16 %v4995
      %v5186 = vunpack.c.l.bf16 %v4996
      %v5187 = vunpack.c.l.bf16 %v4997
      %v5188 = vunpack.c.h.bf16 %v4988
      %v5189 = vunpack.c.h.bf16 %v4989
      %v5190 = vunpack.c.h.bf16 %v4990
      %v5191 = vunpack.c.h.bf16 %v4991
      %v5192 = vunpack.c.h.bf16 %v4992
      %v5193 = vunpack.c.h.bf16 %v4993
      %v5194 = vunpack.c.h.bf16 %v4994
      %v5195 = vunpack.c.h.bf16 %v4995
      %v5196 = vunpack.c.h.bf16 %v4996
      %v5197 = vunpack.c.h.bf16 %v4997
      %v5198 = vunpack.c.l.bf16 %v4998
      %v5199 = vunpack.c.l.bf16 %v4999
      %v5200 = vunpack.c.l.bf16 %v5000
      %v5201 = vunpack.c.l.bf16 %v5001
      %v5202 = vunpack.c.l.bf16 %v5002
      %v5203 = vunpack.c.l.bf16 %v5003
      %v5204 = vunpack.c.l.bf16 %v5004
      %v5205 = vunpack.c.l.bf16 %v5005
      %v5206 = vunpack.c.l.bf16 %v5006
      %v5207 = vunpack.c.l.bf16 %v5007
      %v5208 = vunpack.c.h.bf16 %v4998
      %v5209 = vunpack.c.h.bf16 %v4999
      %v5210 = vunpack.c.h.bf16 %v5000
      %v5211 = vunpack.c.h.bf16 %v5001
      %v5212 = vunpack.c.h.bf16 %v5002
      %v5213 = vunpack.c.h.bf16 %v5003
      %v5214 = vunpack.c.h.bf16 %v5004
      %v5215 = vunpack.c.h.bf16 %v5005
      %v5216 = vunpack.c.h.bf16 %v5006
      %v5217 = vunpack.c.h.bf16 %v5007
      %v5218 = vunpack.c.l.bf16 %v5008
      %v5219 = vunpack.c.l.bf16 %v5009
      %v5220 = vunpack.c.l.bf16 %v5010
      %v5221 = vunpack.c.l.bf16 %v5011
      %v5222 = vunpack.c.l.bf16 %v5012
      %v5223 = vunpack.c.l.bf16 %v5013
      %v5224 = vunpack.c.l.bf16 %v5014
      %v5225 = vunpack.c.l.bf16 %v5015
      %v5226 = vunpack.c.l.bf16 %v5016
      %v5227 = vunpack.c.l.bf16 %v5017
      %v5228 = vunpack.c.h.bf16 %v5008
      %v5229 = vunpack.c.h.bf16 %v5009
      %v5230 = vunpack.c.h.bf16 %v5010
      %v5231 = vunpack.c.h.bf16 %v5011
      %v5232 = vunpack.c.h.bf16 %v5012
      %v5233 = vunpack.c.h.bf16 %v5013
      %v5234 = vunpack.c.h.bf16 %v5014
      %v5235 = vunpack.c.h.bf16 %v5015
      %v5236 = vunpack.c.h.bf16 %v5016
      %v5237 = vunpack.c.h.bf16 %v5017
      %v5238 = vunpack.c.l.bf16 %v5018
      %v5239 = vunpack.c.l.bf16 %v5019
      %v5240 = vunpack.c.l.bf16 %v5020
      %v5241 = vunpack.c.l.bf16 %v5021
      %v5242 = vunpack.c.l.bf16 %v5022
      %v5243 = vunpack.c.l.bf16 %v5023
      %v5244 = vunpack.c.l.bf16 %v5024
      %v5245 = vunpack.c.l.bf16 %v5025
      %v5246 = vunpack.c.l.bf16 %v5026
      %v5247 = vunpack.c.l.bf16 %v5027
      %v5248 = vunpack.c.h.bf16 %v5018
      %v5249 = vunpack.c.h.bf16 %v5019
      %v5250 = vunpack.c.h.bf16 %v5020
      %v5251 = vunpack.c.h.bf16 %v5021
      %v5252 = vunpack.c.h.bf16 %v5022
      %v5253 = vunpack.c.h.bf16 %v5023
      %v5254 = vunpack.c.h.bf16 %v5024
      %v5255 = vunpack.c.h.bf16 %v5025
      %v5256 = vunpack.c.h.bf16 %v5026
      %v5257 = vunpack.c.h.bf16 %v5027
      %v5258 = vunpack.c.l.bf16 %v5028
      %v5259 = vunpack.c.l.bf16 %v5029
      %v5260 = vunpack.c.l.bf16 %v5030
      %v5261 = vunpack.c.l.bf16 %v5031
      %v5262 = vunpack.c.l.bf16 %v5032
      %v5263 = vunpack.c.l.bf16 %v5033
      %v5264 = vunpack.c.l.bf16 %v5034
      %v5265 = vunpack.c.l.bf16 %v5035
      %v5266 = vunpack.c.l.bf16 %v5036
      %v5267 = vunpack.c.l.bf16 %v5037
      %v5268 = vunpack.c.h.bf16 %v5028
      %v5269 = vunpack.c.h.bf16 %v5029
      %v5270 = vunpack.c.h.bf16 %v5030
      %v5271 = vunpack.c.h.bf16 %v5031
      %v5272 = vunpack.c.h.bf16 %v5032
      %v5273 = vunpack.c.h.bf16 %v5033
      %v5274 = vunpack.c.h.bf16 %v5034
      %v5275 = vunpack.c.h.bf16 %v5035
      %v5276 = vunpack.c.h.bf16 %v5036
      %v5277 = vunpack.c.h.bf16 %v5037
      %v5278 = vunpack.c.l.bf16 %v5038
      %v5279 = vunpack.c.l.bf16 %v5039
      %v5280 = vunpack.c.l.bf16 %v5040
      %v5281 = vunpack.c.l.bf16 %v5041
      %v5282 = vunpack.c.l.bf16 %v5042
      %v5283 = vunpack.c.l.bf16 %v5043
      %v5284 = vunpack.c.l.bf16 %v5044
      %v5285 = vunpack.c.l.bf16 %v5045
      %v5286 = vunpack.c.l.bf16 %v5046
      %v5287 = vunpack.c.l.bf16 %v5047
      %v5288 = vunpack.c.h.bf16 %v5038
      %v5289 = vunpack.c.h.bf16 %v5039
      %v5290 = vunpack.c.h.bf16 %v5040
      %v5291 = vunpack.c.h.bf16 %v5041
      %v5292 = vunpack.c.h.bf16 %v5042
      %v5293 = vunpack.c.h.bf16 %v5043
      %v5294 = vunpack.c.h.bf16 %v5044
      %v5295 = vunpack.c.h.bf16 %v5045
      %v5296 = vunpack.c.h.bf16 %v5046
      %v5297 = vunpack.c.h.bf16 %v5047
      %v5298 = vunpack.c.l.bf16 %v5048
      %v5299 = vunpack.c.l.bf16 %v5049
      %v5300 = vunpack.c.l.bf16 %v5050
      %v5301 = vunpack.c.l.bf16 %v5051
      %v5302 = vunpack.c.l.bf16 %v5052
      %v5303 = vunpack.c.l.bf16 %v5053
      %v5304 = vunpack.c.l.bf16 %v5054
      %v5305 = vunpack.c.l.bf16 %v5055
      %v5306 = vunpack.c.l.bf16 %v5056
      %v5307 = vunpack.c.l.bf16 %v5057
      %v5308 = vunpack.c.h.bf16 %v5048
      %v5309 = vunpack.c.h.bf16 %v5049
      %v5310 = vunpack.c.h.bf16 %v5050
      %v5311 = vunpack.c.h.bf16 %v5051
      %v5312 = vunpack.c.h.bf16 %v5052
      %v5313 = vunpack.c.h.bf16 %v5053
      %v5314 = vunpack.c.h.bf16 %v5054
      %v5315 = vunpack.c.h.bf16 %v5055
      %v5316 = vunpack.c.h.bf16 %v5056
      %v5317 = vunpack.c.h.bf16 %v5057
      %v5318 = vunpack.c.l.bf16 %v5058
      %v5319 = vunpack.c.l.bf16 %v5059
      %v5320 = vunpack.c.l.bf16 %v5060
      %v5321 = vunpack.c.l.bf16 %v5061
      %v5322 = vunpack.c.l.bf16 %v5062
      %v5323 = vunpack.c.l.bf16 %v5063
      %v5324 = vunpack.c.l.bf16 %v5064
      %v5325 = vunpack.c.l.bf16 %v5065
      %v5326 = vunpack.c.l.bf16 %v5066
      %v5327 = vunpack.c.l.bf16 %v5067
      %v5328 = vunpack.c.h.bf16 %v5058
      %v5329 = vunpack.c.h.bf16 %v5059
      %v5330 = vunpack.c.h.bf16 %v5060
      %v5331 = vunpack.c.h.bf16 %v5061
      %v5332 = vunpack.c.h.bf16 %v5062
      %v5333 = vunpack.c.h.bf16 %v5063
      %v5334 = vunpack.c.h.bf16 %v5064
      %v5335 = vunpack.c.h.bf16 %v5065
      %v5336 = vunpack.c.h.bf16 %v5066
      %v5337 = vunpack.c.h.bf16 %v5067
      %v5338 = vunpack.c.l.bf16 %v5068
      %v5339 = vunpack.c.l.bf16 %v5069
      %v5340 = vunpack.c.l.bf16 %v5070
      %v5341 = vunpack.c.l.bf16 %v5071
      %v5342 = vunpack.c.l.bf16 %v5072
      %v5343 = vunpack.c.l.bf16 %v5073
      %v5344 = vunpack.c.l.bf16 %v5074
      %v5345 = vunpack.c.l.bf16 %v5075
      %v5346 = vunpack.c.l.bf16 %v5076
      %v5347 = vunpack.c.l.bf16 %v5077
      %v5348 = vunpack.c.h.bf16 %v5068
      %v5349 = vunpack.c.h.bf16 %v5069
      %v5350 = vunpack.c.h.bf16 %v5070
      %v5351 = vunpack.c.h.bf16 %v5071
      %v5352 = vunpack.c.h.bf16 %v5072
      %v5353 = vunpack.c.h.bf16 %v5073
      %v5354 = vunpack.c.h.bf16 %v5074
      %v5355 = vunpack.c.h.bf16 %v5075
      %v5356 = vunpack.c.h.bf16 %v5076
      %v5357 = vunpack.c.h.bf16 %v5077
      %v5358 = vunpack.c.l.bf16 %v5078
      %v5359 = vunpack.c.l.bf16 %v5079
      %v5360 = vunpack.c.l.bf16 %v5080
      %v5361 = vunpack.c.l.bf16 %v5081
      %v5362 = vunpack.c.l.bf16 %v5082
      %v5363 = vunpack.c.l.bf16 %v5083
      %v5364 = vunpack.c.l.bf16 %v5084
      %v5365 = vunpack.c.l.bf16 %v5085
      %v5366 = vunpack.c.l.bf16 %v5086
      %v5367 = vunpack.c.l.bf16 %v5087
      %v5368 = vunpack.c.h.bf16 %v5078
      %v5369 = vunpack.c.h.bf16 %v5079
      %v5370 = vunpack.c.h.bf16 %v5080
      %v5371 = vunpack.c.h.bf16 %v5081
      %v5372 = vunpack.c.h.bf16 %v5082
      %v5373 = vunpack.c.h.bf16 %v5083
      %v5374 = vunpack.c.h.bf16 %v5084
      %v5375 = vunpack.c.h.bf16 %v5085
      %v5376 = vunpack.c.h.bf16 %v5086
      %v5377 = vunpack.c.h.bf16 %v5087
      %v5378 = vunpack.c.l.bf16 %v5088
      %v5379 = vunpack.c.l.bf16 %v5089
      %v5380 = vunpack.c.l.bf16 %v5090
      %v5381 = vunpack.c.l.bf16 %v5091
      %v5382 = vunpack.c.l.bf16 %v5092
      %v5383 = vunpack.c.l.bf16 %v5093
      %v5384 = vunpack.c.l.bf16 %v5094
      %v5385 = vunpack.c.l.bf16 %v5095
      %v5386 = vunpack.c.l.bf16 %v5096
      %v5387 = vunpack.c.l.bf16 %v5097
      %v5388 = vunpack.c.h.bf16 %v5088
      %v5389 = vunpack.c.h.bf16 %v5089
      %v5390 = vunpack.c.h.bf16 %v5090
      %v5391 = vunpack.c.h.bf16 %v5091
      %v5392 = vunpack.c.h.bf16 %v5092
      %v5393 = vunpack.c.h.bf16 %v5093
      %v5394 = vunpack.c.h.bf16 %v5094
      %v5395 = vunpack.c.h.bf16 %v5095
      %v5396 = vunpack.c.h.bf16 %v5096
      %v5397 = vunpack.c.h.bf16 %v5097
      %v5398 = vunpack.c.l.bf16 %v5098
      %v5399 = vunpack.c.l.bf16 %v5099
      %v5400 = vunpack.c.l.bf16 %v5100
      %v5401 = vunpack.c.l.bf16 %v5101
      %v5402 = vunpack.c.l.bf16 %v5102
      %v5403 = vunpack.c.l.bf16 %v5103
      %v5404 = vunpack.c.l.bf16 %v5104
      %v5405 = vunpack.c.l.bf16 %v5105
      %v5406 = vunpack.c.l.bf16 %v5106
      %v5407 = vunpack.c.l.bf16 %v5107
      %v5408 = vunpack.c.h.bf16 %v5098
      %v5409 = vunpack.c.h.bf16 %v5099
      %v5410 = vunpack.c.h.bf16 %v5100
      %v5411 = vunpack.c.h.bf16 %v5101
      %v5412 = vunpack.c.h.bf16 %v5102
      %v5413 = vunpack.c.h.bf16 %v5103
      %v5414 = vunpack.c.h.bf16 %v5104
      %v5415 = vunpack.c.h.bf16 %v5105
      %v5416 = vunpack.c.h.bf16 %v5106
      %v5417 = vunpack.c.h.bf16 %v5107
      %v5418 = vunpack.c.l.bf16 %v5108
      %v5419 = vunpack.c.l.bf16 %v5109
      %v5420 = vunpack.c.l.bf16 %v5110
      %v5421 = vunpack.c.l.bf16 %v5111
      %v5422 = vunpack.c.l.bf16 %v5112
      %v5423 = vunpack.c.l.bf16 %v5113
      %v5424 = vunpack.c.l.bf16 %v5114
      %v5425 = vunpack.c.l.bf16 %v5115
      %v5426 = vunpack.c.l.bf16 %v5116
      %v5427 = vunpack.c.l.bf16 %v5117
      %v5428 = vunpack.c.h.bf16 %v5108
      %v5429 = vunpack.c.h.bf16 %v5109
      %v5430 = vunpack.c.h.bf16 %v5110
      %v5431 = vunpack.c.h.bf16 %v5111
      %v5432 = vunpack.c.h.bf16 %v5112
      %v5433 = vunpack.c.h.bf16 %v5113
      %v5434 = vunpack.c.h.bf16 %v5114
      %v5435 = vunpack.c.h.bf16 %v5115
      %v5436 = vunpack.c.h.bf16 %v5116
      %v5437 = vunpack.c.h.bf16 %v5117
      %v5438 = vld [vmem:[#allocation2] sm:$0xff]
      %v5439 = vld [vmem:[#allocation2 + $0x8] sm:$0x3]
      %v5440 = vadd.f32 %v5118, %v5128
      %v5441 = vadd.f32 %v5440, %v5138
      %v5442 = vadd.f32 %v5441, %v5148
      %v5443 = vadd.f32 %v5442, %v5158
      %v5444 = vadd.f32 %v5443, %v5168
      %v5445 = vadd.f32 %v5444, %v5178
      %v5446 = vadd.f32 %v5445, %v5188
      %v5447 = vadd.f32 %v5446, %v5198
      %v5448 = vadd.f32 %v5447, %v5208
      %v5449 = vadd.f32 %v5448, %v5218
      %v5450 = vadd.f32 %v5449, %v5228
      %v5451 = vadd.f32 %v5450, %v5238
      %v5452 = vadd.f32 %v5451, %v5248
      %v5453 = vadd.f32 %v5452, %v5258
      %v5454 = vadd.f32 %v5453, %v5268
      %v5455 = vadd.f32 %v5454, %v5278
      %v5456 = vadd.f32 %v5455, %v5288
      %v5457 = vadd.f32 %v5456, %v5298
      %v5458 = vadd.f32 %v5457, %v5308
      %v5459 = vadd.f32 %v5458, %v5318
      %v5460 = vadd.f32 %v5459, %v5328
      %v5461 = vadd.f32 %v5460, %v5338
      %v5462 = vadd.f32 %v5461, %v5348
      %v5463 = vadd.f32 %v5462, %v5358
      %v5464 = vadd.f32 %v5463, %v5368
      %v5465 = vadd.f32 %v5464, %v5378
      %v5466 = vadd.f32 %v5465, %v5388
      %v5467 = vadd.f32 %v5466, %v5398
      %v5468 = vadd.f32 %v5467, %v5408
      %v5469 = vadd.f32 %v5468, %v5418
      %v5470 = vadd.f32 %v5469, %v5428
      %v5471 = vrot.slane %v5470, 4
      %v5472 = vadd.f32 %v5470, %v5471
      %v5473 = vrot.slane %v5472, 2
      %v5474 = vadd.f32 %v5472, %v5473
      %v5475 = vrot.slane %v5474, 1
      %v5476 = vadd.f32 %v5474, %v5475
      %v5477 = vadd.f32 %v5119, %v5129
      %v5478 = vadd.f32 %v5477, %v5139
      %v5479 = vadd.f32 %v5478, %v5149
      %v5480 = vadd.f32 %v5479, %v5159
      %v5481 = vadd.f32 %v5480, %v5169
      %v5482 = vadd.f32 %v5481, %v5179
      %v5483 = vadd.f32 %v5482, %v5189
      %v5484 = vadd.f32 %v5483, %v5199
      %v5485 = vadd.f32 %v5484, %v5209
      %v5486 = vadd.f32 %v5485, %v5219
      %v5487 = vadd.f32 %v5486, %v5229
      %v5488 = vadd.f32 %v5487, %v5239
      %v5489 = vadd.f32 %v5488, %v5249
      %v5490 = vadd.f32 %v5489, %v5259
      %v5491 = vadd.f32 %v5490, %v5269
      %v5492 = vadd.f32 %v5491, %v5279
      %v5493 = vadd.f32 %v5492, %v5289
      %v5494 = vadd.f32 %v5493, %v5299
      %v5495 = vadd.f32 %v5494, %v5309
      %v5496 = vadd.f32 %v5495, %v5319
      %v5497 = vadd.f32 %v5496, %v5329
      %v5498 = vadd.f32 %v5497, %v5339
      %v5499 = vadd.f32 %v5498, %v5349
      %v5500 = vadd.f32 %v5499, %v5359
      %v5501 = vadd.f32 %v5500, %v5369
      %v5502 = vadd.f32 %v5501, %v5379
      %v5503 = vadd.f32 %v5502, %v5389
      %v5504 = vadd.f32 %v5503, %v5399
      %v5505 = vadd.f32 %v5504, %v5409
      %v5506 = vadd.f32 %v5505, %v5419
      %v5507 = vadd.f32 %v5506, %v5429
      %v5508 = vrot.slane %v5507, 4
      %v5509 = vadd.f32 %v5507, %v5508
      %v5510 = vrot.slane %v5509, 2
      %v5511 = vadd.f32 %v5509, %v5510
      %v5512 = vrot.slane %v5511, 1
      %v5513 = vadd.f32 %v5511, %v5512
      %v5514 = vadd.f32 %v5120, %v5130
      %v5515 = vadd.f32 %v5514, %v5140
      %v5516 = vadd.f32 %v5515, %v5150
      %v5517 = vadd.f32 %v5516, %v5160
      %v5518 = vadd.f32 %v5517, %v5170
      %v5519 = vadd.f32 %v5518, %v5180
      %v5520 = vadd.f32 %v5519, %v5190
      %v5521 = vadd.f32 %v5520, %v5200
      %v5522 = vadd.f32 %v5521, %v5210
      %v5523 = vadd.f32 %v5522, %v5220
      %v5524 = vadd.f32 %v5523, %v5230
      %v5525 = vadd.f32 %v5524, %v5240
      %v5526 = vadd.f32 %v5525, %v5250
      %v5527 = vadd.f32 %v5526, %v5260
      %v5528 = vadd.f32 %v5527, %v5270
      %v5529 = vadd.f32 %v5528, %v5280
      %v5530 = vadd.f32 %v5529, %v5290
      %v5531 = vadd.f32 %v5530, %v5300
      %v5532 = vadd.f32 %v5531, %v5310
      %v5533 = vadd.f32 %v5532, %v5320
      %v5534 = vadd.f32 %v5533, %v5330
      %v5535 = vadd.f32 %v5534, %v5340
      %v5536 = vadd.f32 %v5535, %v5350
      %v5537 = vadd.f32 %v5536, %v5360
      %v5538 = vadd.f32 %v5537, %v5370
      %v5539 = vadd.f32 %v5538, %v5380
      %v5540 = vadd.f32 %v5539, %v5390
      %v5541 = vadd.f32 %v5540, %v5400
      %v5542 = vadd.f32 %v5541, %v5410
      %v5543 = vadd.f32 %v5542, %v5420
      %v5544 = vadd.f32 %v5543, %v5430
      %v5545 = vrot.slane %v5544, 4
      %v5546 = vadd.f32 %v5544, %v5545
      %v5547 = vrot.slane %v5546, 2
      %v5548 = vadd.f32 %v5546, %v5547
      %v5549 = vrot.slane %v5548, 1
      %v5550 = vadd.f32 %v5548, %v5549
      %v5551 = vadd.f32 %v5121, %v5131
      %v5552 = vadd.f32 %v5551, %v5141
      %v5553 = vadd.f32 %v5552, %v5151
      %v5554 = vadd.f32 %v5553, %v5161
      %v5555 = vadd.f32 %v5554, %v5171
      %v5556 = vadd.f32 %v5555, %v5181
      %v5557 = vadd.f32 %v5556, %v5191
      %v5558 = vadd.f32 %v5557, %v5201
      %v5559 = vadd.f32 %v5558, %v5211
      %v5560 = vadd.f32 %v5559, %v5221
      %v5561 = vadd.f32 %v5560, %v5231
      %v5562 = vadd.f32 %v5561, %v5241
      %v5563 = vadd.f32 %v5562, %v5251
      %v5564 = vadd.f32 %v5563, %v5261
      %v5565 = vadd.f32 %v5564, %v5271
      %v5566 = vadd.f32 %v5565, %v5281
      %v5567 = vadd.f32 %v5566, %v5291
      %v5568 = vadd.f32 %v5567, %v5301
      %v5569 = vadd.f32 %v5568, %v5311
      %v5570 = vadd.f32 %v5569, %v5321
      %v5571 = vadd.f32 %v5570, %v5331
      %v5572 = vadd.f32 %v5571, %v5341
      %v5573 = vadd.f32 %v5572, %v5351
      %v5574 = vadd.f32 %v5573, %v5361
      %v5575 = vadd.f32 %v5574, %v5371
      %v5576 = vadd.f32 %v5575, %v5381
      %v5577 = vadd.f32 %v5576, %v5391
      %v5578 = vadd.f32 %v5577, %v5401
      %v5579 = vadd.f32 %v5578, %v5411
      %v5580 = vadd.f32 %v5579, %v5421
      %v5581 = vadd.f32 %v5580, %v5431
      %v5582 = vrot.slane %v5581, 4
      %v5583 = vadd.f32 %v5581, %v5582
      %v5584 = vrot.slane %v5583, 2
      %v5585 = vadd.f32 %v5583, %v5584
      %v5586 = vrot.slane %v5585, 1
      %v5587 = vadd.f32 %v5585, %v5586
      %v5588 = vadd.f32 %v5122, %v5132
      %v5589 = vadd.f32 %v5588, %v5142
      %v5590 = vadd.f32 %v5589, %v5152
      %v5591 = vadd.f32 %v5590, %v5162
      %v5592 = vadd.f32 %v5591, %v5172
      %v5593 = vadd.f32 %v5592, %v5182
      %v5594 = vadd.f32 %v5593, %v5192
      %v5595 = vadd.f32 %v5594, %v5202
      %v5596 = vadd.f32 %v5595, %v5212
      %v5597 = vadd.f32 %v5596, %v5222
      %v5598 = vadd.f32 %v5597, %v5232
      %v5599 = vadd.f32 %v5598, %v5242
      %v5600 = vadd.f32 %v5599, %v5252
      %v5601 = vadd.f32 %v5600, %v5262
      %v5602 = vadd.f32 %v5601, %v5272
      %v5603 = vadd.f32 %v5602, %v5282
      %v5604 = vadd.f32 %v5603, %v5292
      %v5605 = vadd.f32 %v5604, %v5302
      %v5606 = vadd.f32 %v5605, %v5312
      %v5607 = vadd.f32 %v5606, %v5322
      %v5608 = vadd.f32 %v5607, %v5332
      %v5609 = vadd.f32 %v5608, %v5342
      %v5610 = vadd.f32 %v5609, %v5352
      %v5611 = vadd.f32 %v5610, %v5362
      %v5612 = vadd.f32 %v5611, %v5372
      %v5613 = vadd.f32 %v5612, %v5382
      %v5614 = vadd.f32 %v5613, %v5392
      %v5615 = vadd.f32 %v5614, %v5402
      %v5616 = vadd.f32 %v5615, %v5412
      %v5617 = vadd.f32 %v5616, %v5422
      %v5618 = vadd.f32 %v5617, %v5432
      %v5619 = vrot.slane %v5618, 4
      %v5620 = vadd.f32 %v5618, %v5619
      %v5621 = vrot.slane %v5620, 2
      %v5622 = vadd.f32 %v5620, %v5621
      %v5623 = vrot.slane %v5622, 1
      %v5624 = vadd.f32 %v5622, %v5623
      %v5625 = vadd.f32 %v5123, %v5133
      %v5626 = vadd.f32 %v5625, %v5143
      %v5627 = vadd.f32 %v5626, %v5153
      %v5628 = vadd.f32 %v5627, %v5163
      %v5629 = vadd.f32 %v5628, %v5173
      %v5630 = vadd.f32 %v5629, %v5183
      %v5631 = vadd.f32 %v5630, %v5193
      %v5632 = vadd.f32 %v5631, %v5203
      %v5633 = vadd.f32 %v5632, %v5213
      %v5634 = vadd.f32 %v5633, %v5223
      %v5635 = vadd.f32 %v5634, %v5233
      %v5636 = vadd.f32 %v5635, %v5243
      %v5637 = vadd.f32 %v5636, %v5253
      %v5638 = vadd.f32 %v5637, %v5263
      %v5639 = vadd.f32 %v5638, %v5273
      %v5640 = vadd.f32 %v5639, %v5283
      %v5641 = vadd.f32 %v5640, %v5293
      %v5642 = vadd.f32 %v5641, %v5303
      %v5643 = vadd.f32 %v5642, %v5313
      %v5644 = vadd.f32 %v5643, %v5323
      %v5645 = vadd.f32 %v5644, %v5333
      %v5646 = vadd.f32 %v5645, %v5343
      %v5647 = vadd.f32 %v5646, %v5353
      %v5648 = vadd.f32 %v5647, %v5363
      %v5649 = vadd.f32 %v5648, %v5373
      %v5650 = vadd.f32 %v5649, %v5383
      %v5651 = vadd.f32 %v5650, %v5393
      %v5652 = vadd.f32 %v5651, %v5403
      %v5653 = vadd.f32 %v5652, %v5413
      %v5654 = vadd.f32 %v5653, %v5423
      %v5655 = vadd.f32 %v5654, %v5433
      %v5656 = vrot.slane %v5655, 4
      %v5657 = vadd.f32 %v5655, %v5656
      %v5658 = vrot.slane %v5657, 2
      %v5659 = vadd.f32 %v5657, %v5658
      %v5660 = vrot.slane %v5659, 1
      %v5661 = vadd.f32 %v5659, %v5660
      %v5662 = vadd.f32 %v5124, %v5134
      %v5663 = vadd.f32 %v5662, %v5144
      %v5664 = vadd.f32 %v5663, %v5154
      %v5665 = vadd.f32 %v5664, %v5164
      %v5666 = vadd.f32 %v5665, %v5174
      %v5667 = vadd.f32 %v5666, %v5184
      %v5668 = vadd.f32 %v5667, %v5194
      %v5669 = vadd.f32 %v5668, %v5204
      %v5670 = vadd.f32 %v5669, %v5214
      %v5671 = vadd.f32 %v5670, %v5224
      %v5672 = vadd.f32 %v5671, %v5234
      %v5673 = vadd.f32 %v5672, %v5244
      %v5674 = vadd.f32 %v5673, %v5254
      %v5675 = vadd.f32 %v5674, %v5264
      %v5676 = vadd.f32 %v5675, %v5274
      %v5677 = vadd.f32 %v5676, %v5284
      %v5678 = vadd.f32 %v5677, %v5294
      %v5679 = vadd.f32 %v5678, %v5304
      %v5680 = vadd.f32 %v5679, %v5314
      %v5681 = vadd.f32 %v5680, %v5324
      %v5682 = vadd.f32 %v5681, %v5334
      %v5683 = vadd.f32 %v5682, %v5344
      %v5684 = vadd.f32 %v5683, %v5354
      %v5685 = vadd.f32 %v5684, %v5364
      %v5686 = vadd.f32 %v5685, %v5374
      %v5687 = vadd.f32 %v5686, %v5384
      %v5688 = vadd.f32 %v5687, %v5394
      %v5689 = vadd.f32 %v5688, %v5404
      %v5690 = vadd.f32 %v5689, %v5414
      %v5691 = vadd.f32 %v5690, %v5424
      %v5692 = vadd.f32 %v5691, %v5434
      %v5693 = vrot.slane %v5692, 4
      %v5694 = vadd.f32 %v5692, %v5693
      %v5695 = vrot.slane %v5694, 2
      %v5696 = vadd.f32 %v5694, %v5695
      %v5697 = vrot.slane %v5696, 1
      %v5698 = vadd.f32 %v5696, %v5697
      %v5699 = vadd.f32 %v5125, %v5135
      %v5700 = vadd.f32 %v5699, %v5145
      %v5701 = vadd.f32 %v5700, %v5155
      %v5702 = vadd.f32 %v5701, %v5165
      %v5703 = vadd.f32 %v5702, %v5175
      %v5704 = vadd.f32 %v5703, %v5185
      %v5705 = vadd.f32 %v5704, %v5195
      %v5706 = vadd.f32 %v5705, %v5205
      %v5707 = vadd.f32 %v5706, %v5215
      %v5708 = vadd.f32 %v5707, %v5225
      %v5709 = vadd.f32 %v5708, %v5235
      %v5710 = vadd.f32 %v5709, %v5245
      %v5711 = vadd.f32 %v5710, %v5255
      %v5712 = vadd.f32 %v5711, %v5265
      %v5713 = vadd.f32 %v5712, %v5275
      %v5714 = vadd.f32 %v5713, %v5285
      %v5715 = vadd.f32 %v5714, %v5295
      %v5716 = vadd.f32 %v5715, %v5305
      %v5717 = vadd.f32 %v5716, %v5315
      %v5718 = vadd.f32 %v5717, %v5325
      %v5719 = vadd.f32 %v5718, %v5335
      %v5720 = vadd.f32 %v5719, %v5345
      %v5721 = vadd.f32 %v5720, %v5355
      %v5722 = vadd.f32 %v5721, %v5365
      %v5723 = vadd.f32 %v5722, %v5375
      %v5724 = vadd.f32 %v5723, %v5385
      %v5725 = vadd.f32 %v5724, %v5395
      %v5726 = vadd.f32 %v5725, %v5405
      %v5727 = vadd.f32 %v5726, %v5415
      %v5728 = vadd.f32 %v5727, %v5425
      %v5729 = vadd.f32 %v5728, %v5435
      %v5730 = vrot.slane %v5729, 4
      %v5731 = vadd.f32 %v5729, %v5730
      %v5732 = vrot.slane %v5731, 2
      %v5733 = vadd.f32 %v5731, %v5732
      %v5734 = vrot.slane %v5733, 1
      %v5735 = vadd.f32 %v5733, %v5734
      %v5736 = vadd.f32 %v5126, %v5136
      %v5737 = vadd.f32 %v5736, %v5146
      %v5738 = vadd.f32 %v5737, %v5156
      %v5739 = vadd.f32 %v5738, %v5166
      %v5740 = vadd.f32 %v5739, %v5176
      %v5741 = vadd.f32 %v5740, %v5186
      %v5742 = vadd.f32 %v5741, %v5196
      %v5743 = vadd.f32 %v5742, %v5206
      %v5744 = vadd.f32 %v5743, %v5216
      %v5745 = vadd.f32 %v5744, %v5226
      %v5746 = vadd.f32 %v5745, %v5236
      %v5747 = vadd.f32 %v5746, %v5246
      %v5748 = vadd.f32 %v5747, %v5256
      %v5749 = vadd.f32 %v5748, %v5266
      %v5750 = vadd.f32 %v5749, %v5276
      %v5751 = vadd.f32 %v5750, %v5286
      %v5752 = vadd.f32 %v5751, %v5296
      %v5753 = vadd.f32 %v5752, %v5306
      %v5754 = vadd.f32 %v5753, %v5316
      %v5755 = vadd.f32 %v5754, %v5326
      %v5756 = vadd.f32 %v5755, %v5336
      %v5757 = vadd.f32 %v5756, %v5346
      %v5758 = vadd.f32 %v5757, %v5356
      %v5759 = vadd.f32 %v5758, %v5366
      %v5760 = vadd.f32 %v5759, %v5376
      %v5761 = vadd.f32 %v5760, %v5386
      %v5762 = vadd.f32 %v5761, %v5396
      %v5763 = vadd.f32 %v5762, %v5406
      %v5764 = vadd.f32 %v5763, %v5416
      %v5765 = vadd.f32 %v5764, %v5426
      %v5766 = vadd.f32 %v5765, %v5436
      %v5767 = vrot.slane %v5766, 4
      %v5768 = vadd.f32 %v5766, %v5767
      %v5769 = vrot.slane %v5768, 2
      %v5770 = vadd.f32 %v5768, %v5769
      %v5771 = vrot.slane %v5770, 1
      %v5772 = vadd.f32 %v5770, %v5771
      %v5773 = vadd.f32 %v5127, %v5137
      %v5774 = vadd.f32 %v5773, %v5147
      %v5775 = vadd.f32 %v5774, %v5157
      %v5776 = vadd.f32 %v5775, %v5167
      %v5777 = vadd.f32 %v5776, %v5177
      %v5778 = vadd.f32 %v5777, %v5187
      %v5779 = vadd.f32 %v5778, %v5197
      %v5780 = vadd.f32 %v5779, %v5207
      %v5781 = vadd.f32 %v5780, %v5217
      %v5782 = vadd.f32 %v5781, %v5227
      %v5783 = vadd.f32 %v5782, %v5237
      %v5784 = vadd.f32 %v5783, %v5247
      %v5785 = vadd.f32 %v5784, %v5257
      %v5786 = vadd.f32 %v5785, %v5267
      %v5787 = vadd.f32 %v5786, %v5277
      %v5788 = vadd.f32 %v5787, %v5287
      %v5789 = vadd.f32 %v5788, %v5297
      %v5790 = vadd.f32 %v5789, %v5307
      %v5791 = vadd.f32 %v5790, %v5317
      %v5792 = vadd.f32 %v5791, %v5327
      %v5793 = vadd.f32 %v5792, %v5337
      %v5794 = vadd.f32 %v5793, %v5347
      %v5795 = vadd.f32 %v5794, %v5357
      %v5796 = vadd.f32 %v5795, %v5367
      %v5797 = vadd.f32 %v5796, %v5377
      %v5798 = vadd.f32 %v5797, %v5387
      %v5799 = vadd.f32 %v5798, %v5397
      %v5800 = vadd.f32 %v5799, %v5407
      %v5801 = vadd.f32 %v5800, %v5417
      %v5802 = vadd.f32 %v5801, %v5427
      %v5803 = vadd.f32 %v5802, %v5437
      %v5804 = vrot.slane %v5803, 4
      %v5805 = vadd.f32 %v5803, %v5804
      %v5806 = vrot.slane %v5805, 2
      %v5807 = vadd.f32 %v5805, %v5806
      %v5808 = vrot.slane %v5807, 1
      %v5809 = vadd.f32 %v5807, %v5808
      %v5820 = vrot.slane %v5513, 7
      %v5821 = vrot.slane %v5550, 6
      %v5822 = vrot.slane %v5587, 5
      %v5823 = vrot.slane %v5624, 4
      %v5824 = vrot.slane %v5661, 3
      %v5825 = vrot.slane %v5698, 2
      %v5826 = vrot.slane %v5735, 1
      %v5827 = vrot.slane %v5809, 7
      %vm5828 = vcmask 1040384
      %v5829 = vsel %vm5828, %v5476, %v5820
      %vm5830 = vcmask 1042434
      %v5831 = vsel %vm5830, %v5821, %v5822
      %vm5832 = vcmask 1041408
      %v5833 = vsel %vm5832, %v5829, %v5831
      %vm5834 = vcmask 1044484
      %v5835 = vsel %vm5834, %v5823, %v5824
      %vm5836 = vcmask 1046534
      %v5837 = vsel %vm5836, %v5825, %v5826
      %vm5838 = vcmask 1045508
      %v5839 = vsel %vm5838, %v5835, %v5837
      %vm5840 = vcmask 1043456
      %v5841 = vsel %vm5840, %v5833, %v5839
      %v5842 = vsel %vm5828, %v5772, %v5827
      %v5845 = vadd.f32 %v5438, %v5841
      %v5846 = vadd.f32 %v5439, %v5842
      %5847 = vst [vmem:[#allocation2] sm:$0xff] %v5845
      %v5848 = vlaneseq
      %vm5849 = vcmp.ge.s32.totalorder %v5848, 0
      %vm5850 = vcmp.lt.s32.totalorder %v5848, 256
      %vm5851 = vmand %vm5849, %vm5850
      %5852 = vst.msk [vmem:[#allocation2 + $0x8] sm:$0x3] %vm5851, %v5846
      // Predicated region
      $region45: #{_forward_impl.1} parent=39 // pred_check
        %p5853 = pneg %p252
      $region46: #{_forward_impl.1} parent=39 // pred_check_branch
        %5855 = sbr.rel (%p5853) target = $region48
      $region47: #{_forward_impl.1} parent=39 // pred_region
        %v5856 = vld [vmem:[#allocation2] sm:$0xff]
        %v5857 = vld [vmem:[#allocation2 + $0x8] sm:$0x3]
        %v5858 = vmul.f32 %v5856, 0.00390625
        %v5859 = vmul.f32 %v5857, 0.00390625
        %5860 = vst [vmem:[%s250] sm:$0xff] %v5858
        %5861 = vst.msk [vmem:[%s250 + $0x8] sm:$0x3] %vm5851, %v5859
      $region48: #{_forward_impl.1} parent=39 // pred_fallthru
        _
      %p5862 = scmp.lt.s32.totalorder %s20, 1
      %s5863 = scalar_select %p5862, %s20, 1
      %s5864 = smul.addr %s5863, 10
      %s5865 = scalar_lea.vmem %s5, %s5864
      // Predicated region
      $region49: #{_forward_impl.1} parent=39 // pred_check
        %p5866 = pneg %p158
      $region50: #{_forward_impl.1} parent=39 // pred_check_branch
        %5868 = sbr.rel (%p5866) target = $region52
      $region51: #{_forward_impl.1} parent=39 // pred_region
        _
      $region52: #{_forward_impl.1} parent=39 // pred_fallthru
        _
    $region40: #{_forward_impl.1} parent=5 // pred_fallthru
      _
    %p5869 = scmp.le.s32.totalorder 2, %s11
    // Predicated region
    $region53: #{_forward_impl.1} parent=5 // pred_check
      %p5870 = pneg %p5869
    $region54: #{_forward_impl.1} parent=5 // pred_check_branch
      %5872 = sbr.rel (%p5870) target = $region56
    $region55: #{_forward_impl.1} parent=5 // pred_region
      %s5873 = ssub.s32 %s11, 2
      // Predicated region
      $region57: #{_forward_impl.1} parent=55 // pred_check
        %p5874 = pneg %p164
      $region58: #{_forward_impl.1} parent=55 // pred_check_branch
        %5876 = sbr.rel (%p5874) target = $region60
      $region59: #{_forward_impl.1} parent=55 // pred_region
        %p5877 = scmp.lt.s32.totalorder %s22, 1
        %s5878 = scalar_select %p5877, %s22, 1
        %s5879 = smul.addr %s5878, 10
        %s5880 = scalar_lea.vmem %s5, %s5879
      $region60: #{_forward_impl.1} parent=55 // pred_fallthru
        _
    $region56: #{_forward_impl.1} parent=5 // pred_fallthru
      _
  $region6: #{_forward_impl.1} parent=0 // loop_footer
    %s15 = sadd.s32 1, %s11
  $region7: #{_forward_impl.1} parent=0 // loop_footer_branch
    %10 = sbr.rel target = $region3
  $region8: #{_forward_impl.1} parent=0 // loop_exit
    _

</llo_original>
